<compile_context>
chip_gen: v7x
topology: tpu7x:2x2x1
jax: 0.10.0
libtpu: 0.0.40
codegen_flags: <defaults>
</compile_context>

<pallas_src>
import functools

import jax
import jax.numpy as jnp
from jax.experimental import pallas as pl
from jax.experimental.pallas import tpu as pltpu


# ---------------------------------------------------------------------------
# helpers
# ---------------------------------------------------------------------------

def _pick_tile(hw, candidates):
    for t in candidates:
        if t <= hw and hw % t == 0:
            return t
    return hw


def _vmem_limit_bytes():
    """Scoped-VMEM limit with headroom (~96 MiB on v5e/v6e, ~48 MiB on v7x)."""
    try:
        cap = int(pltpu.get_tpu_info().vmem_capacity_bytes)
    except Exception:
        cap = 64 * 1024 * 1024          # conservative (v7x physical VMEM)
    return max(32 * 1024 * 1024, (cap * 3) // 4)


# ---------------------------------------------------------------------------
# fused kernel: GroupNorm + QKV (once per batch, into scratch) + attention,
# proj_out and residual per q-row tile.  grid = (N, HW // TQ).
# ---------------------------------------------------------------------------

def _fused_kernel(x_ref, gamma_ref, beta_ref, gmap_ref, gmapt_ref,
                  wq_ref, bq_ref, wk_ref, bk_ref, wv_ref, bv_ref,
                  wp_ref, bp_ref, o_ref, q_scr, kt_scr, v_scr, *, eps, tq):
    t = pl.program_id(1)

    @pl.when(t == 0)
    def _():
        hw, c = x_ref.shape[1], x_ref.shape[2]
        ng = gmap_ref.shape[1]
        xf = x_ref[0].astype(jnp.float32)                       # (HW, C)

        # GroupNorm stats: per-channel sums, channel->group one-hot matmuls.
        inv_cnt = 1.0 / float(hw * (c // ng))
        s1 = jnp.sum(xf, axis=0, keepdims=True)                 # (1, C)
        s2 = jnp.sum(xf * xf, axis=0, keepdims=True)            # (1, C)
        g_mean = jnp.dot(s1, gmap_ref[...],
                         preferred_element_type=jnp.float32) * inv_cnt
        g_msq = jnp.dot(s2, gmap_ref[...],
                        preferred_element_type=jnp.float32) * inv_cnt
        g_rstd = jax.lax.rsqrt(g_msq - g_mean * g_mean + eps)   # (1, NG)
        mean_c = jnp.dot(g_mean, gmapt_ref[...],
                         preferred_element_type=jnp.float32)    # (1, C)
        rstd_c = jnp.dot(g_rstd, gmapt_ref[...],
                         preferred_element_type=jnp.float32)    # (1, C)
        # fold gamma/beta:  hn = x * scale_c + shift_c
        scale_c = rstd_c * gamma_ref[...]
        shift_c = beta_ref[...] - mean_c * scale_c
        hn = (xf * scale_c + shift_c).astype(jnp.bfloat16)      # (HW, C)

        # three separate dots; no (HW, 3C) intermediate.  q scale is folded
        # into wq/bq in the wrapper.  K stored transposed once per batch.
        q = jnp.dot(hn, wq_ref[...],
                    preferred_element_type=jnp.float32) + bq_ref[...]
        q_scr[...] = q.astype(jnp.bfloat16)
        k = jnp.dot(hn, wk_ref[...],
                    preferred_element_type=jnp.float32) + bk_ref[...]
        kt_scr[...] = k.T.astype(jnp.bfloat16)                  # (C, HW)
        v = jnp.dot(hn, wv_ref[...],
                    preferred_element_type=jnp.float32) + bv_ref[...]
        v_scr[...] = v.astype(jnp.bfloat16)

    # ---- attention for this q-row tile ------------------------------------
    row0 = pl.multiple_of(t * tq, tq)
    q = q_scr[pl.ds(row0, tq), :]                               # (TQ, C) bf16
    s = jnp.dot(q, kt_scr[...], preferred_element_type=jnp.float32)  # (TQ, HW)
    m = jnp.max(s, axis=-1, keepdims=True)
    p = jnp.exp(s - m)
    p = p * pl.reciprocal(jnp.sum(p, axis=-1, keepdims=True), approx=True)
    h = jnp.dot(p.astype(jnp.bfloat16), v_scr[...],
                preferred_element_type=jnp.float32)             # (TQ, C)
    out = jnp.dot(h.astype(jnp.bfloat16), wp_ref[...],
                  preferred_element_type=jnp.float32) + bp_ref[...]
    res = x_ref[0, pl.ds(row0, tq), :].astype(jnp.float32)
    o_ref[0] = (res + out).astype(o_ref.dtype)


# ---------------------------------------------------------------------------
# two-pass fallback, stage 1: row-tiled normalize + QKV (stats precomputed in
# plain JAX as tiny (N, C) tensors).  grid = (N, HW // TR).
# ---------------------------------------------------------------------------

def _gn_qkv_kernel(x_ref, sc_ref, sh_ref, wq_ref, bq_ref, wk_ref, bk_ref,
                   wv_ref, bv_ref, q_ref, kt_ref, v_ref):
    hn = (x_ref[0].astype(jnp.float32) * sc_ref[0] + sh_ref[0]
          ).astype(jnp.bfloat16)                                # (TR, C)
    q = jnp.dot(hn, wq_ref[...],
                preferred_element_type=jnp.float32) + bq_ref[...]
    q_ref[0] = q.astype(q_ref.dtype)
    k = jnp.dot(hn, wk_ref[...],
                preferred_element_type=jnp.float32) + bk_ref[...]
    kt_ref[0] = k.T.astype(kt_ref.dtype)                        # (C, TR)
    v = jnp.dot(hn, wv_ref[...],
                preferred_element_type=jnp.float32) + bv_ref[...]
    v_ref[0] = v.astype(v_ref.dtype)


# ---------------------------------------------------------------------------
# two-pass fallback, stage 2: flash-style key-blocked attention + proj_out +
# residual.  grid = (N, HW // TQ, HW // TK); key axis is a reduction.
# ---------------------------------------------------------------------------

def _flash_attn_kernel(q_ref, kt_ref, v_ref, xres_ref, wp_ref, bp_ref, o_ref,
                       m_scr, l_scr, acc_scr):
    ki = pl.program_id(2)

    @pl.when(ki == 0)
    def _():
        m_scr[...] = jnp.full(m_scr.shape, -jnp.inf, m_scr.dtype)
        l_scr[...] = jnp.zeros(l_scr.shape, l_scr.dtype)
        acc_scr[...] = jnp.zeros(acc_scr.shape, acc_scr.dtype)

    # K arrives pre-transposed (C, TK) -> no per-step XLU transpose.
    s = jnp.dot(q_ref[0], kt_ref[0],
                preferred_element_type=jnp.float32)             # (TQ, TK)
    m_prev = m_scr[...]
    m_new = jnp.maximum(m_prev, jnp.max(s, axis=-1, keepdims=True))
    alpha = jnp.exp(m_prev - m_new)
    p = jnp.exp(s - m_new)
    l_scr[...] = alpha * l_scr[...] + jnp.sum(p, axis=-1, keepdims=True)
    acc_scr[...] = alpha * acc_scr[...] + jnp.dot(
        p.astype(jnp.bfloat16), v_ref[0], preferred_element_type=jnp.float32)
    m_scr[...] = m_new

    @pl.when(ki == pl.num_programs(2) - 1)
    def _():
        h = acc_scr[...] * pl.reciprocal(l_scr[...], approx=True)
        out = jnp.dot(h.astype(jnp.bfloat16), wp_ref[...],
                      preferred_element_type=jnp.float32) + bp_ref[...]
        o_ref[0] = (xres_ref[0].astype(jnp.float32) + out).astype(o_ref.dtype)


# ---------------------------------------------------------------------------
# wrapper
# ---------------------------------------------------------------------------

def attn_block_forward(x_nchw, params, *, num_groups=32, eps=1e-5,
                       force_two_pass=False, tq=None, tk=None, tr=None):
    """AttnBlock.forward.  Input / output are NCHW (PyTorch convention)."""
    N, C, H, W = x_nchw.shape
    HW = H * W
    assert C % num_groups == 0, "GroupNorm(32, C) requires C % 32 == 0"

    # TODO(synk): if the surrounding model carries NHWC activations these two
    # full-tensor layout changes (HBM read+write each) can be dropped.
    x = jnp.transpose(x_nchw, (0, 2, 3, 1)).reshape(N, HW, C)   # (N, HW, C)

    f32, bf16 = jnp.float32, jnp.bfloat16
    attn_scale = float(C) ** -0.5
    # 1x1-conv weights (Cout, Cin) -> matmul layout (Cin, Cout); attention
    # scale folded into q weight/bias at prep time (zero runtime cost).
    wq = (params["q_weight"] * attn_scale).T.astype(bf16)
    bq = (params["q_bias"] * attn_scale).reshape(1, C).astype(f32)
    wk = params["k_weight"].T.astype(bf16)
    bk = params["k_bias"].reshape(1, C).astype(f32)
    wv = params["v_weight"].T.astype(bf16)
    bv = params["v_bias"].reshape(1, C).astype(f32)
    wp = params["proj_weight"].T.astype(bf16)
    bp = params["proj_bias"].reshape(1, C).astype(f32)
    gamma = params["norm_weight"].reshape(1, C).astype(f32)
    beta = params["norm_bias"].reshape(1, C).astype(f32)

    vmem_limit = _vmem_limit_bytes()
    tq = tq or _pick_tile(HW, (256, 128, 64, 32, 16, 8))
    nqt = HW // tq

    # rough per-grid-step VMEM need of the fully fused kernel
    fused_bytes = (2 * HW * C * 4            # f32 x block, double-buffered
                   + 3 * HW * C * 2          # q / k^T / v bf16 scratch
                   + HW * C * 6              # hn + one live f32 matmul result
                   + tq * HW * 4             # score tile
                   + 4 * C * C * 2 + 8 * C * 4 + 2 * tq * C * 4)
    use_fused = (not force_two_pass) and fused_bytes <= (vmem_limit * 3) // 4

    if use_fused:
        # -------- single fused call: grid (batch, q-row tile) --------------
        gmap = (jnp.arange(C)[:, None] // (C // num_groups)
                == jnp.arange(num_groups)[None, :]).astype(f32)   # (C, NG)
        gmapt = gmap.T                                            # (NG, C)

        def cs(a):  # constant (whole-array) spec
            return pl.BlockSpec(a.shape, lambda b, t: (0, 0))

        out = pl.pallas_call(
            functools.partial(_fused_kernel, eps=eps, tq=tq),
            grid=(N, nqt),
            in_specs=[pl.BlockSpec((1, HW, C), lambda b, t: (b, 0, 0)),
                      cs(gamma), cs(beta), cs(gmap), cs(gmapt),
                      cs(wq), cs(bq), cs(wk), cs(bk), cs(wv), cs(bv),
                      cs(wp), cs(bp)],
            out_specs=pl.BlockSpec((1, tq, C), lambda b, t: (b, t, 0)),
            out_shape=jax.ShapeDtypeStruct((N, HW, C), x_nchw.dtype),
            scratch_shapes=[pltpu.VMEM((HW, C), bf16),    # q (pre-scaled)
                            pltpu.VMEM((C, HW), bf16),    # k^T
                            pltpu.VMEM((HW, C), bf16)],   # v
            compiler_params=pltpu.CompilerParams(
                dimension_semantics=("parallel", "arbitrary"),
                vmem_limit_bytes=vmem_limit),
        )(x, gamma, beta, gmap, gmapt, wq, bq, wk, bk, wv, bv, wp, bp)
    else:
        # -------- two-pass fallback for large feature maps -----------------
        # GroupNorm statistics in plain JAX (tiny (N, C) tensors).
        xf = x.astype(f32)
        xg = xf.reshape(N, HW, num_groups, C // num_groups)
        g_mean = jnp.mean(xg, axis=(1, 3))                        # (N, NG)
        g_msq = jnp.mean(xg * xg, axis=(1, 3))
        g_rstd = jax.lax.rsqrt(g_msq - g_mean * g_mean + eps)
        mean_c = jnp.repeat(g_mean, C // num_groups, axis=1)      # (N, C)
        rstd_c = jnp.repeat(g_rstd, C // num_groups, axis=1)
        scale_nc = rstd_c * gamma
        scale_c = scale_nc.reshape(N, 1, C).astype(f32)
        shift_c = (beta - mean_c * scale_nc).reshape(N, 1, C).astype(f32)

        # stage 1: row-tiled normalize + QKV; K written transposed.
        tr = tr or _pick_tile(HW, (512, 256, 128))
        nrt = HW // tr

        def c1(a):
            return pl.BlockSpec(a.shape, lambda b, r: (0, 0))

        q_arr, kt_arr, v_arr = pl.pallas_call(
            _gn_qkv_kernel,
            grid=(N, nrt),
            in_specs=[pl.BlockSpec((1, tr, C), lambda b, r: (b, r, 0)),
                      pl.BlockSpec((1, 1, C), lambda b, r: (b, 0, 0)),
                      pl.BlockSpec((1, 1, C), lambda b, r: (b, 0, 0)),
                      c1(wq), c1(bq), c1(wk), c1(bk), c1(wv), c1(bv)],
            out_specs=[pl.BlockSpec((1, tr, C), lambda b, r: (b, r, 0)),
                       pl.BlockSpec((1, C, tr), lambda b, r: (b, 0, r)),
                       pl.BlockSpec((1, tr, C), lambda b, r: (b, r, 0))],
            out_shape=[jax.ShapeDtypeStruct((N, HW, C), bf16),
                       jax.ShapeDtypeStruct((N, C, HW), bf16),
                       jax.ShapeDtypeStruct((N, HW, C), bf16)],
            compiler_params=pltpu.CompilerParams(
                dimension_semantics=("parallel", "parallel"),
                vmem_limit_bytes=vmem_limit),
        )(x, scale_c, shift_c, wq, bq, wk, bk, wv, bv)

        # stage 2: flash-style key-blocked attention + proj + residual.
        tk = tk or _pick_tile(HW, (1024, 512, 256, 128))
        nkt = HW // tk

        def c2(a):
            return pl.BlockSpec(a.shape, lambda b, qi, ki: (0, 0))

        out = pl.pallas_call(
            _flash_attn_kernel,
            grid=(N, nqt, nkt),
            in_specs=[pl.BlockSpec((1, tq, C), lambda b, qi, ki: (b, qi, 0)),
                      pl.BlockSpec((1, C, tk), lambda b, qi, ki: (b, 0, ki)),
                      pl.BlockSpec((1, tk, C), lambda b, qi, ki: (b, ki, 0)),
                      pl.BlockSpec((1, tq, C), lambda b, qi, ki: (b, qi, 0)),
                      c2(wp), c2(bp)],
            out_specs=pl.BlockSpec((1, tq, C), lambda b, qi, ki: (b, qi, 0)),
            out_shape=jax.ShapeDtypeStruct((N, HW, C), x_nchw.dtype),
            scratch_shapes=[pltpu.VMEM((tq, 1), f32),     # running max
                            pltpu.VMEM((tq, 1), f32),     # running denom
                            pltpu.VMEM((tq, C), f32)],    # accumulator
            compiler_params=pltpu.CompilerParams(
                dimension_semantics=("parallel", "parallel", "arbitrary"),
                vmem_limit_bytes=vmem_limit),
        )(q_arr, kt_arr, v_arr, x, wp, bp)

    return jnp.transpose(out.reshape(N, H, W, C), (0, 3, 1, 2))


# ---------------------------------------------------------------------------
# pure-JAX reference (f32, HIGHEST precision), NCHW
# ---------------------------------------------------------------------------

def attn_block_reference(x, params, num_groups=32, eps=1e-5):
    N, C, H, W = x.shape
    HW = H * W
    hp = jax.lax.Precision.HIGHEST

    xg = x.reshape(N, num_groups, C // num_groups, H, W)
    mean = xg.mean(axis=(2, 3, 4), keepdims=True)
    var = ((xg - mean) ** 2).mean(axis=(2, 3, 4), keepdims=True)
    hn = ((xg - mean) / jnp.sqrt(var + eps)).reshape(N, C, H, W)
    hn = (hn * params["norm_weight"].reshape(1, C, 1, 1)
          + params["norm_bias"].reshape(1, C, 1, 1))

    def conv1x1(h, wname, bname):
        return (jnp.einsum("nchw,oc->nohw", h, params[wname], precision=hp)
                + params[bname].reshape(1, C, 1, 1))

    q = conv1x1(hn, "q_weight", "q_bias").reshape(N, C, HW)
    k = conv1x1(hn, "k_weight", "k_bias").reshape(N, C, HW)
    v = conv1x1(hn, "v_weight", "v_bias").reshape(N, C, HW)

    w_ = jnp.einsum("nci,ncj->nij", q, k, precision=hp) * (float(C) ** -0.5)
    w_ = jax.nn.softmax(w_, axis=2)
    h_ = jnp.einsum("ncj,nij->nci", v, w_, precision=hp).reshape(N, C, H, W)
    return x + conv1x1(h_, "proj_weight", "proj_bias")


if __name__ == "__main__":
    key = jax.random.PRNGKey(0)
    ks = jax.random.split(key, 11)

    # GroupNorm(32, C) requires C % 32 == 0; C=128 also fills the 128 lanes.
    N, C, H, W = 2, 128, 16, 16
    x = jax.random.normal(ks[0], (N, C, H, W), dtype=jnp.float32)

    wsc = 0.05
    params = {
        "norm_weight": 1.0 + 0.1 * jax.random.normal(ks[1], (C,), jnp.float32),
        "norm_bias":   0.1 * jax.random.normal(ks[2], (C,), jnp.float32),
        "q_weight":    wsc * jax.random.normal(ks[3], (C, C), jnp.float32),
        "q_bias":      wsc * jax.random.normal(ks[4], (C,), jnp.float32),
        "k_weight":    wsc * jax.random.normal(ks[5], (C, C), jnp.float32),
        "k_bias":      wsc * jax.random.normal(ks[6], (C,), jnp.float32),
        "v_weight":    wsc * jax.random.normal(ks[7], (C, C), jnp.float32),
        "v_bias":      wsc * jax.random.normal(ks[8], (C,), jnp.float32),
        "proj_weight": wsc * jax.random.normal(ks[9], (C, C), jnp.float32),
        "proj_bias":   wsc * jax.random.normal(ks[10], (C,), jnp.float32),
    }

    # ---- fused single-call path (small feature map) -----------------------
    y = jax.block_until_ready(attn_block_forward(x, params))
    assert y.shape == (N, C, H, W), y.shape
    y_ref = jax.block_until_ready(attn_block_reference(x, params))
    assert bool(jnp.all(jnp.isfinite(y)))
    # bf16 MXU operands with f32 accumulation -> relaxed tolerance
    assert jnp.allclose(y, y_ref, atol=3e-2, rtol=3e-2), (
        float(jnp.max(jnp.abs(y - y_ref))))

    # ---- two-pass path (row-tiled GN+QKV, flash key-blocked attention) ----
    N2, H2, W2 = 1, 32, 32
    x2 = jax.random.normal(jax.random.PRNGKey(1), (N2, C, H2, W2),
                           dtype=jnp.float32)
    y2 = jax.block_until_ready(
        attn_block_forward(x2, params, force_two_pass=True,
                           tq=128, tk=256, tr=256))
    assert y2.shape == (N2, C, H2, W2), y2.shape
    y2_ref = jax.block_until_ready(attn_block_reference(x2, params))
    assert bool(jnp.all(jnp.isfinite(y2)))
    assert jnp.allclose(y2, y2_ref, atol=3e-2, rtol=3e-2), (
        float(jnp.max(jnp.abs(y2 - y2_ref))))

    print("KERNEL_OK")
</pallas_src>

<mosaic_0001>
module attributes {stable_mosaic.version = 11 : i64} {
  func.func @_fused_kernel(%arg0: i32, %arg1: i32, %arg2: memref<1x256x128xf32, #tpu.memory_space<vmem>>, %arg3: memref<1x128xf32, #tpu.memory_space<vmem>>, %arg4: memref<1x128xf32, #tpu.memory_space<vmem>>, %arg5: memref<128x32xf32, #tpu.memory_space<vmem>>, %arg6: memref<32x128xf32, #tpu.memory_space<vmem>>, %arg7: memref<128x128xbf16, #tpu.memory_space<vmem>>, %arg8: memref<1x128xf32, #tpu.memory_space<vmem>>, %arg9: memref<128x128xbf16, #tpu.memory_space<vmem>>, %arg10: memref<1x128xf32, #tpu.memory_space<vmem>>, %arg11: memref<128x128xbf16, #tpu.memory_space<vmem>>, %arg12: memref<1x128xf32, #tpu.memory_space<vmem>>, %arg13: memref<128x128xbf16, #tpu.memory_space<vmem>>, %arg14: memref<1x128xf32, #tpu.memory_space<vmem>>, %arg15: memref<1x256x128xf32, #tpu.memory_space<vmem>>, %arg16: memref<256x128xbf16, #tpu.memory_space<vmem>>, %arg17: memref<128x256xbf16, #tpu.memory_space<vmem>>, %arg18: memref<256x128xbf16, #tpu.memory_space<vmem>>) attributes {dimension_semantics = [#tpu.dimension_semantics<parallel>, #tpu.dimension_semantics<arbitrary>], iteration_bounds = array<i64: 2, 1>, scalar_prefetch = 0 : i64, scratch_operands = 3 : i64, tpu.core_type = #tpu.core_type<tc>, window_params = [{transform_indices = @transform_0, window_bounds = array<i64: 1, 256, 128>}, {pipeline_mode = #tpu.pipeline_mode<synchronous>, transform_indices = @transform_1, window_bounds = array<i64: 1, 128>}, {pipeline_mode = #tpu.pipeline_mode<synchronous>, transform_indices = @transform_2, window_bounds = array<i64: 1, 128>}, {pipeline_mode = #tpu.pipeline_mode<synchronous>, transform_indices = @transform_3, window_bounds = array<i64: 128, 32>}, {pipeline_mode = #tpu.pipeline_mode<synchronous>, transform_indices = @transform_4, window_bounds = array<i64: 32, 128>}, {pipeline_mode = #tpu.pipeline_mode<synchronous>, transform_indices = @transform_5, window_bounds = array<i64: 128, 128>}, {pipeline_mode = #tpu.pipeline_mode<synchronous>, transform_indices = @transform_6, window_bounds = array<i64: 1, 128>}, {pipeline_mode = #tpu.pipeline_mode<synchronous>, transform_indices = @transform_7, window_bounds = array<i64: 128, 128>}, {pipeline_mode = #tpu.pipeline_mode<synchronous>, transform_indices = @transform_8, window_bounds = array<i64: 1, 128>}, {pipeline_mode = #tpu.pipeline_mode<synchronous>, transform_indices = @transform_9, window_bounds = array<i64: 128, 128>}, {pipeline_mode = #tpu.pipeline_mode<synchronous>, transform_indices = @transform_10, window_bounds = array<i64: 1, 128>}, {pipeline_mode = #tpu.pipeline_mode<synchronous>, transform_indices = @transform_11, window_bounds = array<i64: 128, 128>}, {pipeline_mode = #tpu.pipeline_mode<synchronous>, transform_indices = @transform_12, window_bounds = array<i64: 1, 128>}, {transform_indices = @transform_13, window_bounds = array<i64: 1, 256, 128>}]} {
    %c0_i32 = arith.constant 0 : i32
    %0 = arith.cmpi eq, %arg1, %c0_i32 : i32
    %1 = arith.extui %0 : i1 to i32
    %c0_i32_0 = arith.constant 0 : i32
    %2 = arith.cmpi ne, %1, %c0_i32_0 : i32
    scf.if %2 {
      %c0_18 = arith.constant 0 : index
      %c0_19 = arith.constant 0 : index
      %c0_20 = arith.constant 0 : index
      %35 = vector.load %arg2[%c0_18, %c0_19, %c0_20] : memref<1x256x128xf32, #tpu.memory_space<vmem>>, vector<1x256x128xf32>
      %36 = vector.shape_cast %35 : vector<1x256x128xf32> to vector<256x128xf32>
      %cst_21 = arith.constant dense<0.000000e+00> : vector<128xf32>
      %37 = vector.multi_reduction <add>, %36, %cst_21 [0] : vector<256x128xf32> to vector<128xf32>
      %38 = vector.shape_cast %37 : vector<128xf32> to vector<1x128xf32>
      %39 = arith.mulf %36, %36 : vector<256x128xf32>
      %cst_22 = arith.constant dense<0.000000e+00> : vector<128xf32>
      %40 = vector.multi_reduction <add>, %39, %cst_22 [0] : vector<256x128xf32> to vector<128xf32>
      %41 = vector.shape_cast %40 : vector<128xf32> to vector<1x128xf32>
      %c0_23 = arith.constant 0 : index
      %c0_24 = arith.constant 0 : index
      %42 = vector.load %arg5[%c0_23, %c0_24] : memref<128x32xf32, #tpu.memory_space<vmem>>, vector<128x32xf32>
      %cst_25 = arith.constant dense<0.000000e+00> : vector<1x32xf32>
      %43 = tpu.matmul %38, %42, %cst_25 {dimension_numbers = #tpu.dot_dimension_numbers<[1], [0], [0], [1], [0, 0, 1, 1], [], []>} : vector<1x128xf32>, vector<128x32xf32>, vector<1x32xf32> -> vector<1x32xf32>
      %cst_26 = arith.constant 9.765625E-4 : f32
      %44 = vector.broadcast %cst_26 : f32 to vector<1x32xf32>
      %45 = arith.mulf %43, %44 : vector<1x32xf32>
      %c0_27 = arith.constant 0 : index
      %c0_28 = arith.constant 0 : index
      %46 = vector.load %arg5[%c0_27, %c0_28] : memref<128x32xf32, #tpu.memory_space<vmem>>, vector<128x32xf32>
      %cst_29 = arith.constant dense<0.000000e+00> : vector<1x32xf32>
      %47 = tpu.matmul %41, %46, %cst_29 {dimension_numbers = #tpu.dot_dimension_numbers<[1], [0], [0], [1], [0, 0, 1, 1], [], []>} : vector<1x128xf32>, vector<128x32xf32>, vector<1x32xf32> -> vector<1x32xf32>
      %cst_30 = arith.constant 9.765625E-4 : f32
      %48 = vector.broadcast %cst_30 : f32 to vector<1x32xf32>
      %49 = arith.mulf %47, %48 : vector<1x32xf32>
      %50 = arith.mulf %45, %45 : vector<1x32xf32>
      %51 = arith.subf %49, %50 : vector<1x32xf32>
      %cst_31 = arith.constant 9.99999974E-6 : f32
      %52 = vector.broadcast %cst_31 : f32 to vector<1x32xf32>
      %53 = arith.addf %51, %52 : vector<1x32xf32>
      %54 = math.rsqrt %53 : vector<1x32xf32>
      %c0_32 = arith.constant 0 : index
      %c0_33 = arith.constant 0 : index
      %55 = vector.load %arg6[%c0_32, %c0_33] : memref<32x128xf32, #tpu.memory_space<vmem>>, vector<32x128xf32>
      %cst_34 = arith.constant dense<0.000000e+00> : vector<1x128xf32>
      %56 = tpu.matmul %45, %55, %cst_34 {dimension_numbers = #tpu.dot_dimension_numbers<[1], [0], [0], [1], [0, 0, 1, 1], [], []>} : vector<1x32xf32>, vector<32x128xf32>, vector<1x128xf32> -> vector<1x128xf32>
      %c0_35 = arith.constant 0 : index
      %c0_36 = arith.constant 0 : index
      %57 = vector.load %arg6[%c0_35, %c0_36] : memref<32x128xf32, #tpu.memory_space<vmem>>, vector<32x128xf32>
      %cst_37 = arith.constant dense<0.000000e+00> : vector<1x128xf32>
      %58 = tpu.matmul %54, %57, %cst_37 {dimension_numbers = #tpu.dot_dimension_numbers<[1], [0], [0], [1], [0, 0, 1, 1], [], []>} : vector<1x32xf32>, vector<32x128xf32>, vector<1x128xf32> -> vector<1x128xf32>
      %c0_38 = arith.constant 0 : index
      %c0_39 = arith.constant 0 : index
      %59 = vector.load %arg3[%c0_38, %c0_39] : memref<1x128xf32, #tpu.memory_space<vmem>>, vector<1x128xf32>
      %60 = arith.mulf %58, %59 : vector<1x128xf32>
      %c0_40 = arith.constant 0 : index
      %c0_41 = arith.constant 0 : index
      %61 = vector.load %arg4[%c0_40, %c0_41] : memref<1x128xf32, #tpu.memory_space<vmem>>, vector<1x128xf32>
      %62 = arith.mulf %56, %60 : vector<1x128xf32>
      %63 = arith.subf %61, %62 : vector<1x128xf32>
      %64 = vector.broadcast %60 : vector<1x128xf32> to vector<256x128xf32>
      %65 = arith.mulf %36, %64 : vector<256x128xf32>
      %66 = vector.broadcast %63 : vector<1x128xf32> to vector<256x128xf32>
      %67 = arith.addf %65, %66 : vector<256x128xf32>
      %68 = arith.truncf %67 : vector<256x128xf32> to vector<256x128xbf16>
      %c0_42 = arith.constant 0 : index
      %c0_43 = arith.constant 0 : index
      %69 = vector.load %arg7[%c0_42, %c0_43] : memref<128x128xbf16, #tpu.memory_space<vmem>>, vector<128x128xbf16>
      %cst_44 = arith.constant dense<0.000000e+00> : vector<256x128xf32>
      %70 = tpu.matmul %68, %69, %cst_44 {dimension_numbers = #tpu.dot_dimension_numbers<[1], [0], [0], [1], [0, 0, 1, 1], [], []>} : vector<256x128xbf16>, vector<128x128xbf16>, vector<256x128xf32> -> vector<256x128xf32>
      %c0_45 = arith.constant 0 : index
      %c0_46 = arith.constant 0 : index
      %71 = vector.load %arg8[%c0_45, %c0_46] : memref<1x128xf32, #tpu.memory_space<vmem>>, vector<1x128xf32>
      %72 = vector.broadcast %71 : vector<1x128xf32> to vector<256x128xf32>
      %73 = arith.addf %70, %72 : vector<256x128xf32>
      %74 = arith.truncf %73 : vector<256x128xf32> to vector<256x128xbf16>
      %c0_47 = arith.constant 0 : index
      %c0_48 = arith.constant 0 : index
      %75 = vector.load %arg16[%c0_47, %c0_48] : memref<256x128xbf16, #tpu.memory_space<vmem>>, vector<256x128xbf16>
      tpu.vector_store %arg16[%c0_47, %c0_48], %74 {strides = array<i32>} : memref<256x128xbf16, #tpu.memory_space<vmem>>, vector<256x128xbf16>,
      %c0_49 = arith.constant 0 : index
      %c0_50 = arith.constant 0 : index
      %76 = vector.load %arg9[%c0_49, %c0_50] : memref<128x128xbf16, #tpu.memory_space<vmem>>, vector<128x128xbf16>
      %cst_51 = arith.constant dense<0.000000e+00> : vector<256x128xf32>
      %77 = tpu.matmul %68, %76, %cst_51 {dimension_numbers = #tpu.dot_dimension_numbers<[1], [0], [0], [1], [0, 0, 1, 1], [], []>} : vector<256x128xbf16>, vector<128x128xbf16>, vector<256x128xf32> -> vector<256x128xf32>
      %c0_52 = arith.constant 0 : index
      %c0_53 = arith.constant 0 : index
      %78 = vector.load %arg10[%c0_52, %c0_53] : memref<1x128xf32, #tpu.memory_space<vmem>>, vector<1x128xf32>
      %79 = vector.broadcast %78 : vector<1x128xf32> to vector<256x128xf32>
      %80 = arith.addf %77, %79 : vector<256x128xf32>
      %81 = tpu.transpose %80, [1, 0] : vector<256x128xf32> -> vector<128x256xf32>
      %82 = arith.truncf %81 : vector<128x256xf32> to vector<128x256xbf16>
      %c0_54 = arith.constant 0 : index
      %c0_55 = arith.constant 0 : index
      %83 = vector.load %arg17[%c0_54, %c0_55] : memref<128x256xbf16, #tpu.memory_space<vmem>>, vector<128x256xbf16>
      tpu.vector_store %arg17[%c0_54, %c0_55], %82 {strides = array<i32>} : memref<128x256xbf16, #tpu.memory_space<vmem>>, vector<128x256xbf16>,
      %c0_56 = arith.constant 0 : index
      %c0_57 = arith.constant 0 : index
      %84 = vector.load %arg11[%c0_56, %c0_57] : memref<128x128xbf16, #tpu.memory_space<vmem>>, vector<128x128xbf16>
      %cst_58 = arith.constant dense<0.000000e+00> : vector<256x128xf32>
      %85 = tpu.matmul %68, %84, %cst_58 {dimension_numbers = #tpu.dot_dimension_numbers<[1], [0], [0], [1], [0, 0, 1, 1], [], []>} : vector<256x128xbf16>, vector<128x128xbf16>, vector<256x128xf32> -> vector<256x128xf32>
      %c0_59 = arith.constant 0 : index
      %c0_60 = arith.constant 0 : index
      %86 = vector.load %arg12[%c0_59, %c0_60] : memref<1x128xf32, #tpu.memory_space<vmem>>, vector<1x128xf32>
      %87 = vector.broadcast %86 : vector<1x128xf32> to vector<256x128xf32>
      %88 = arith.addf %85, %87 : vector<256x128xf32>
      %89 = arith.truncf %88 : vector<256x128xf32> to vector<256x128xbf16>
      %c0_61 = arith.constant 0 : index
      %c0_62 = arith.constant 0 : index
      %90 = vector.load %arg18[%c0_61, %c0_62] : memref<256x128xbf16, #tpu.memory_space<vmem>>, vector<256x128xbf16>
      tpu.vector_store %arg18[%c0_61, %c0_62], %89 {strides = array<i32>} : memref<256x128xbf16, #tpu.memory_space<vmem>>, vector<256x128xbf16>,
    } else {
    }
    %c256_i32 = arith.constant 256 : i32
    %3 = arith.muli %arg1, %c256_i32 : i32
    %4 = tpu.assume_multiple %3, 256 : i32
    %5 = arith.index_cast %4 : i32 to index
    %c0 = arith.constant 0 : index
    %6 = vector.load %arg16[%5, %c0] : memref<256x128xbf16, #tpu.memory_space<vmem>>, vector<256x128xbf16>
    %c0_1 = arith.constant 0 : index
    %c0_2 = arith.constant 0 : index
    %7 = vector.load %arg17[%c0_1, %c0_2] : memref<128x256xbf16, #tpu.memory_space<vmem>>, vector<128x256xbf16>
    %cst = arith.constant dense<0.000000e+00> : vector<256x256xf32>
    %8 = tpu.matmul %6, %7, %cst {dimension_numbers = #tpu.dot_dimension_numbers<[1], [0], [0], [1], [0, 0, 1, 1], [], []>} : vector<256x128xbf16>, vector<128x256xbf16>, vector<256x256xf32> -> vector<256x256xf32>
    %cst_3 = arith.constant dense<0xFF800000> : vector<256xf32>
    %9 = vector.multi_reduction <maximumf>, %8, %cst_3 [1] : vector<256x256xf32> to vector<256xf32>
    %10 = vector.shape_cast %9 : vector<256xf32> to vector<256x1xf32>
    %11 = vector.broadcast %10 : vector<256x1xf32> to vector<256x256xf32>
    %12 = arith.subf %8, %11 : vector<256x256xf32>
    %13 = math.exp %12 : vector<256x256xf32>
    %cst_4 = arith.constant dense<0.000000e+00> : vector<256xf32>
    %14 = vector.multi_reduction <add>, %13, %cst_4 [1] : vector<256x256xf32> to vector<256xf32>
    %15 = vector.shape_cast %14 : vector<256xf32> to vector<256x1xf32>
    %16 = tpu.reciprocal %15 {approx = true} : vector<256x1xf32> -> vector<256x1xf32>
    %17 = vector.broadcast %16 : vector<256x1xf32> to vector<256x256xf32>
    %18 = arith.mulf %13, %17 : vector<256x256xf32>
    %19 = arith.truncf %18 : vector<256x256xf32> to vector<256x256xbf16>
    %c0_5 = arith.constant 0 : index
    %c0_6 = arith.constant 0 : index
    %20 = vector.load %arg18[%c0_5, %c0_6] : memref<256x128xbf16, #tpu.memory_space<vmem>>, vector<256x128xbf16>
    %cst_7 = arith.constant dense<0.000000e+00> : vector<256x128xf32>
    %21 = tpu.matmul %19, %20, %cst_7 {dimension_numbers = #tpu.dot_dimension_numbers<[1], [0], [0], [1], [0, 0, 1, 1], [], []>} : vector<256x256xbf16>, vector<256x128xbf16>, vector<256x128xf32> -> vector<256x128xf32>
    %22 = arith.truncf %21 : vector<256x128xf32> to vector<256x128xbf16>
    %c0_8 = arith.constant 0 : index
    %c0_9 = arith.constant 0 : index
    %23 = vector.load %arg13[%c0_8, %c0_9] : memref<128x128xbf16, #tpu.memory_space<vmem>>, vector<128x128xbf16>
    %cst_10 = arith.constant dense<0.000000e+00> : vector<256x128xf32>
    %24 = tpu.matmul %22, %23, %cst_10 {dimension_numbers = #tpu.dot_dimension_numbers<[1], [0], [0], [1], [0, 0, 1, 1], [], []>} : vector<256x128xbf16>, vector<128x128xbf16>, vector<256x128xf32> -> vector<256x128xf32>
    %c0_11 = arith.constant 0 : index
    %c0_12 = arith.constant 0 : index
    %25 = vector.load %arg14[%c0_11, %c0_12] : memref<1x128xf32, #tpu.memory_space<vmem>>, vector<1x128xf32>
    %26 = vector.broadcast %25 : vector<1x128xf32> to vector<256x128xf32>
    %27 = arith.addf %24, %26 : vector<256x128xf32>
    %c0_13 = arith.constant 0 : index
    %28 = arith.index_cast %4 : i32 to index
    %c0_14 = arith.constant 0 : index
    %29 = vector.load %arg2[%c0_13, %28, %c0_14] : memref<1x256x128xf32, #tpu.memory_space<vmem>>, vector<1x256x128xf32>
    %30 = vector.shape_cast %29 : vector<1x256x128xf32> to vector<256x128xf32>
    %31 = arith.addf %30, %27 : vector<256x128xf32>
    %c0_15 = arith.constant 0 : index
    %c0_16 = arith.constant 0 : index
    %c0_17 = arith.constant 0 : index
    %32 = vector.load %arg15[%c0_15, %c0_16, %c0_17] : memref<1x256x128xf32, #tpu.memory_space<vmem>>, vector<1x256x128xf32>
    %33 = vector.shape_cast %32 : vector<1x256x128xf32> to vector<256x128xf32>
    %34 = vector.shape_cast %31 : vector<256x128xf32> to vector<1x256x128xf32>
    tpu.vector_store %arg15[%c0_15, %c0_16, %c0_17], %34 {strides = array<i32>} : memref<1x256x128xf32, #tpu.memory_space<vmem>>, vector<1x256x128xf32>,
    return
  }
  func.func @transform_0(%arg0: i32, %arg1: i32) -> (i32, i32, i32) {
    %c0_i32 = arith.constant 0 : i32
    %c0_i32_0 = arith.constant 0 : i32
    %c0_i32_1 = arith.constant 0 : i32
    return %arg0, %c0_i32, %c0_i32_0 : i32, i32, i32
  }
  func.func @transform_1(%arg0: i32, %arg1: i32) -> (i32, i32) {
    %c0_i32 = arith.constant 0 : i32
    %c0_i32_0 = arith.constant 0 : i32
    %c0_i32_1 = arith.constant 0 : i32
    return %c0_i32, %c0_i32_0 : i32, i32
  }
  func.func @transform_2(%arg0: i32, %arg1: i32) -> (i32, i32) {
    %c0_i32 = arith.constant 0 : i32
    %c0_i32_0 = arith.constant 0 : i32
    %c0_i32_1 = arith.constant 0 : i32
    return %c0_i32, %c0_i32_0 : i32, i32
  }
  func.func @transform_3(%arg0: i32, %arg1: i32) -> (i32, i32) {
    %c0_i32 = arith.constant 0 : i32
    %c0_i32_0 = arith.constant 0 : i32
    %c0_i32_1 = arith.constant 0 : i32
    return %c0_i32, %c0_i32_0 : i32, i32
  }
  func.func @transform_4(%arg0: i32, %arg1: i32) -> (i32, i32) {
    %c0_i32 = arith.constant 0 : i32
    %c0_i32_0 = arith.constant 0 : i32
    %c0_i32_1 = arith.constant 0 : i32
    return %c0_i32, %c0_i32_0 : i32, i32
  }
  func.func @transform_5(%arg0: i32, %arg1: i32) -> (i32, i32) {
    %c0_i32 = arith.constant 0 : i32
    %c0_i32_0 = arith.constant 0 : i32
    %c0_i32_1 = arith.constant 0 : i32
    return %c0_i32, %c0_i32_0 : i32, i32
  }
  func.func @transform_6(%arg0: i32, %arg1: i32) -> (i32, i32) {
    %c0_i32 = arith.constant 0 : i32
    %c0_i32_0 = arith.constant 0 : i32
    %c0_i32_1 = arith.constant 0 : i32
    return %c0_i32, %c0_i32_0 : i32, i32
  }
  func.func @transform_7(%arg0: i32, %arg1: i32) -> (i32, i32) {
    %c0_i32 = arith.constant 0 : i32
    %c0_i32_0 = arith.constant 0 : i32
    %c0_i32_1 = arith.constant 0 : i32
    return %c0_i32, %c0_i32_0 : i32, i32
  }
  func.func @transform_8(%arg0: i32, %arg1: i32) -> (i32, i32) {
    %c0_i32 = arith.constant 0 : i32
    %c0_i32_0 = arith.constant 0 : i32
    %c0_i32_1 = arith.constant 0 : i32
    return %c0_i32, %c0_i32_0 : i32, i32
  }
  func.func @transform_9(%arg0: i32, %arg1: i32) -> (i32, i32) {
    %c0_i32 = arith.constant 0 : i32
    %c0_i32_0 = arith.constant 0 : i32
    %c0_i32_1 = arith.constant 0 : i32
    return %c0_i32, %c0_i32_0 : i32, i32
  }
  func.func @transform_10(%arg0: i32, %arg1: i32) -> (i32, i32) {
    %c0_i32 = arith.constant 0 : i32
    %c0_i32_0 = arith.constant 0 : i32
    %c0_i32_1 = arith.constant 0 : i32
    return %c0_i32, %c0_i32_0 : i32, i32
  }
  func.func @transform_11(%arg0: i32, %arg1: i32) -> (i32, i32) {
    %c0_i32 = arith.constant 0 : i32
    %c0_i32_0 = arith.constant 0 : i32
    %c0_i32_1 = arith.constant 0 : i32
    return %c0_i32, %c0_i32_0 : i32, i32
  }
  func.func @transform_12(%arg0: i32, %arg1: i32) -> (i32, i32) {
    %c0_i32 = arith.constant 0 : i32
    %c0_i32_0 = arith.constant 0 : i32
    %c0_i32_1 = arith.constant 0 : i32
    return %c0_i32, %c0_i32_0 : i32, i32
  }
  func.func @transform_13(%arg0: i32, %arg1: i32) -> (i32, i32, i32) {
    %c0_i32 = arith.constant 0 : i32
    %c0_i32_0 = arith.constant 0 : i32
    return %arg0, %arg1, %c0_i32 : i32, i32, i32
  }
}

</mosaic_0001>

<llo_original>
// kernel: tpu_custom_call.1
$region0: #{tpu_custom_call.1}
  #allocation0 [shape = 'u32[]', space=smem, size = 0x4, offset = 0x4, fixed_abs, tag = 'smem constant byte address 0x4 - core index']
  #allocation1 [shape = 'u32[144,128]{1,0:T(1,128)}', space=vmem, size = 0x12000, scoped, tag = 'internal scratch']
  #allocation2 [shape = 'bf16[256,128]{1,0:T(16,128)(2,1)}', space=vmem, size = 0x10000, scoped, tag = 'scratch operand']
  #allocation3 [shape = 'bf16[128,256]{1,0:T(16,128)(2,1)}', space=vmem, size = 0x10000, scoped, tag = 'scratch operand']
  #allocation4 [shape = 'bf16[256,128]{1,0:T(16,128)(2,1)}', space=vmem, size = 0x10000, scoped, tag = 'scratch operand']
  %s0 = inlined_call_operand.hbm [shape: f32[2,256,128], index: 0, kind: input, shape index: {}]
  %s1 = inlined_call_operand.vmem [shape: f32[1,128], index: 1, kind: input, shape index: {}]
  %s2 = inlined_call_operand.vmem [shape: f32[1,128], index: 2, kind: input, shape index: {}]
  %s3 = inlined_call_operand.vmem [shape: f32[128,32], index: 3, kind: input, shape index: {}]
  %s4 = inlined_call_operand.hbm [shape: f32[32,128], index: 4, kind: input, shape index: {}]
  %s5 = inlined_call_operand.vmem [shape: bf16[128,128], index: 5, kind: input, shape index: {}]
  %s6 = inlined_call_operand.hbm [shape: f32[1,128], index: 6, kind: input, shape index: {}]
  %s7 = inlined_call_operand.vmem [shape: bf16[128,128], index: 7, kind: input, shape index: {}]
  %s8 = inlined_call_operand.hbm [shape: f32[1,128], index: 8, kind: input, shape index: {}]
  %s9 = inlined_call_operand.vmem [shape: bf16[128,128], index: 9, kind: input, shape index: {}]
  %s10 = inlined_call_operand.vmem [shape: f32[1,128], index: 10, kind: input, shape index: {}]
  %s11 = inlined_call_operand.hbm [shape: bf16[128,128], index: 11, kind: input, shape index: {}]
  %s12 = inlined_call_operand.vmem [shape: f32[1,128], index: 12, kind: input, shape index: {}]
  %s13 = inlined_call_operand.hbm [shape: f32[2,256,128], index: 13, kind: output, shape index: {}]
  %s14 = sld [smem:[#allocation0]]
  $region109: #{tpu_custom_call.1} parent=0
    _
  %s16 = ssub.s32 1, %s14
  %s17 = scalar_select 0, %s16, %s14
  $region1: #{tpu_custom_call.1} parent=0
    #allocation5 [shape = 'u8[262144]{0}', space=vmem, size = 0x40000, scoped, tag = 'input window, operand 0']
    #allocation6 [shape = 's32[2]{0}', space=sflag, size = 0x8, scoped, tag = 'scoped memory for tpu_custom_call.1']
    #allocation7 [shape = 's32[2]{0}', space=sflag, size = 0x8, scoped, tag = 'scoped memory for tpu_custom_call.1']
    #allocation8 [shape = 'u8[16384]{0}', space=vmem, size = 0x4000, scoped, tag = 'input window, operand 4, single buffered']
    #allocation9 [shape = 's32[1]{0}', space=sflag, size = 0x4, scoped, tag = 'scoped memory for tpu_custom_call.1']
    #allocation10 [shape = 'u8[512]{0}', space=vmem, size = 0x400, scoped, tag = 'input window, operand 6, single buffered']
    #allocation11 [shape = 'u8[512]{0}', space=vmem, size = 0x400, scoped, tag = 'input window, operand 8, single buffered']
    #allocation12 [shape = 's32[1]{0}', space=sflag, size = 0x4, scoped, tag = 'scoped memory for tpu_custom_call.1']
    #allocation13 [shape = 'u8[32768]{0}', space=vmem, size = 0x8000, scoped, tag = 'input window, operand 11, single buffered']
    #allocation14 [shape = 'u8[262144]{0}', space=vmem, size = 0x40000, scoped, tag = 'output window, operand 0']
    %18 = vsyncpa [#allocation6], 0
    %s19 = scalar_lea.sflag [#allocation6], 1
    %20 = vsyncpa %s19, 0
    %21 = vsyncpa [#allocation9], 0
    %22 = vsyncpa [#allocation12], 0
    %23 = vsyncpa [#allocation7], 0
    %s24 = scalar_lea.sflag [#allocation7], 1
    %25 = vsyncpa %s24, 0
    loop: start=0, step=1, limit=4
    $region2: #{tpu_custom_call.1} parent=1 // loop_pre_header
      _
    $region3: #{tpu_custom_call.1} parent=1 // loop_header
      %s27 = sphi 0, %s31
      %p28 = scmp.ge.s32.totalorder %s27, 4
      %s34 = sphi 0, %s46
      %s35 = sphi 0, %s42
      %s36 = sphi 0, %s34
      %s37 = sphi 0, %s35
      %s38 = sphi 0, %s36
      %s39 = sphi 0, %s37
      %s49 = sphi 0, %s51
      %s52 = sphi 0, %s49
      %s53 = sphi 0, %s52
      %s69 = sphi 0, %s53
      %s73 = sphi 0, %s73
      %s75 = sphi 0, %s73
      %s76 = sphi 0, %s75
      %s90 = sphi 0, %s76
      %s94 = sphi 0, %s94
      %s96 = sphi 0, %s94
      %s97 = sphi 0, %s96
      %s111 = sphi 0, %s97
      %s115 = sphi 0, %s115
      %s117 = sphi 0, %s115
      %s118 = sphi 0, %s117
      %s132 = sphi 0, %s118
      %s136 = sphi 0, %s136
      %s138 = sphi 0, %s136
      %s139 = sphi 0, %s138
      %s153 = sphi 0, %s139
      %s157 = sphi 0, %s157
      %s159 = sphi 0, %s157
      %s160 = sphi 0, %s159
      %s174 = sphi 0, %s160
      %s178 = sphi 0, %s178
      %s180 = sphi 0, %s178
      %s181 = sphi 0, %s180
      %s195 = sphi 0, %s181
      %s199 = sphi 0, %s199
      %s201 = sphi 0, %s199
      %s202 = sphi 0, %s201
      %s216 = sphi 0, %s202
      %s220 = sphi 0, %s220
      %s222 = sphi 0, %s220
      %s223 = sphi 0, %s222
      %s237 = sphi 0, %s223
      %s241 = sphi 0, %s241
      %s243 = sphi 0, %s241
      %s244 = sphi 0, %s243
      %s258 = sphi 0, %s244
      %s262 = sphi 0, %s262
      %s264 = sphi 0, %s262
      %s265 = sphi 0, %s264
      %s279 = sphi 0, %s265
      %s283 = sphi 0, %s283
      %s285 = sphi 0, %s283
      %s286 = sphi 0, %s285
      %s300 = sphi 0, %s286
      %s304 = sphi 0, %s304
      %s306 = sphi 0, %s304
      %s307 = sphi 0, %s306
      %s321 = sphi 0, %s307
      %s329 = sphi 0, %s331
      %s332 = sphi 0, %s329
      %s333 = sphi 0, %s332
      %s349 = sphi 0, %s333
    $region4: #{tpu_custom_call.1} parent=1 // loop_header_branch
      %30 = sbr.rel (%p28) target = $region8
    $region5: #{tpu_custom_call.1} parent=1 // loop_body
      %s32 = ssub.s32 %s27, 1
      %s33 = ssub.s32 %s27, 2
      %s40 = sadd.s32 1, %s35
      %p41 = scmp.ge.s32.totalorder %s40, 1
      %s42 = scalar_select %p41, 0, %s40
      %s43 = sadd.s32 1, %s34
      %s44 = scalar_select %p41, %s43, %s34
      %p45 = scmp.ge.s32.totalorder %s44, 2
      %s46 = scalar_select %p45, 0, %s44
      %s47 = ssub.s32 %s34, %s46
      %p48 = scmp.eq.s32.totalorder %s47, 0
      %s50 = sadd.s32 %s49, 1
      %s51 = scalar_select %p48, %s49, %s50
      %p54 = pneg %p48
      %p55 = scmp.eq.s32.totalorder %s27, 1
      %p56 = por %p54, %p55
      %p57 = scmp.ne.s32.totalorder %s49, %s52
      %p58 = scmp.eq.s32.totalorder %s27, 0
      %p59 = por %p57, %p58
      %p60 = scmp.ne.s32.totalorder %s49, %s52
      %p61 = scmp.eq.s32.totalorder %s32, 1
      %p62 = por %p60, %p61
      %p63 = scmp.ne.s32.totalorder %s52, %s53
      %p64 = scmp.eq.s32.totalorder %s32, 0
      %p65 = por %p63, %p64
      %p66 = scmp.ne.s32.totalorder %s52, %s53
      %p67 = scmp.eq.s32.totalorder %s33, 1
      %p68 = por %p66, %p67
      %p70 = scmp.ne.s32.totalorder %s53, %s69
      %p71 = scmp.eq.s32.totalorder %s33, 0
      %p72 = por %p70, %p71
      %s74 = sadd.s32 %s73, 1
      %p77 = scmp.eq.s32.totalorder %s27, 1
      %p78 = scmp.ne.s32.totalorder %s73, %s75
      %p79 = scmp.eq.s32.totalorder %s27, 0
      %p80 = por %p78, %p79
      %p81 = scmp.ne.s32.totalorder %s73, %s75
      %p82 = scmp.eq.s32.totalorder %s32, 1
      %p83 = por %p81, %p82
      %p84 = scmp.ne.s32.totalorder %s75, %s76
      %p85 = scmp.eq.s32.totalorder %s32, 0
      %p86 = por %p84, %p85
      %p87 = scmp.ne.s32.totalorder %s75, %s76
      %p88 = scmp.eq.s32.totalorder %s33, 1
      %p89 = por %p87, %p88
      %p91 = scmp.ne.s32.totalorder %s76, %s90
      %p92 = scmp.eq.s32.totalorder %s33, 0
      %p93 = por %p91, %p92
      %s95 = sadd.s32 %s94, 1
      %p98 = scmp.eq.s32.totalorder %s27, 1
      %p99 = scmp.ne.s32.totalorder %s94, %s96
      %p100 = scmp.eq.s32.totalorder %s27, 0
      %p101 = por %p99, %p100
      %p102 = scmp.ne.s32.totalorder %s94, %s96
      %p103 = scmp.eq.s32.totalorder %s32, 1
      %p104 = por %p102, %p103
      %p105 = scmp.ne.s32.totalorder %s96, %s97
      %p106 = scmp.eq.s32.totalorder %s32, 0
      %p107 = por %p105, %p106
      %p108 = scmp.ne.s32.totalorder %s96, %s97
      %p109 = scmp.eq.s32.totalorder %s33, 1
      %p110 = por %p108, %p109
      %p112 = scmp.ne.s32.totalorder %s97, %s111
      %p113 = scmp.eq.s32.totalorder %s33, 0
      %p114 = por %p112, %p113
      %s116 = sadd.s32 %s115, 1
      %p119 = scmp.eq.s32.totalorder %s27, 1
      %p120 = scmp.ne.s32.totalorder %s115, %s117
      %p121 = scmp.eq.s32.totalorder %s27, 0
      %p122 = por %p120, %p121
      %p123 = scmp.ne.s32.totalorder %s115, %s117
      %p124 = scmp.eq.s32.totalorder %s32, 1
      %p125 = por %p123, %p124
      %p126 = scmp.ne.s32.totalorder %s117, %s118
      %p127 = scmp.eq.s32.totalorder %s32, 0
      %p128 = por %p126, %p127
      %p129 = scmp.ne.s32.totalorder %s117, %s118
      %p130 = scmp.eq.s32.totalorder %s33, 1
      %p131 = por %p129, %p130
      %p133 = scmp.ne.s32.totalorder %s118, %s132
      %p134 = scmp.eq.s32.totalorder %s33, 0
      %p135 = por %p133, %p134
      %s137 = sadd.s32 %s136, 1
      %p140 = scmp.eq.s32.totalorder %s27, 1
      %p141 = scmp.ne.s32.totalorder %s136, %s138
      %p142 = scmp.eq.s32.totalorder %s27, 0
      %p143 = por %p141, %p142
      %p144 = scmp.ne.s32.totalorder %s136, %s138
      %p145 = scmp.eq.s32.totalorder %s32, 1
      %p146 = por %p144, %p145
      %p147 = scmp.ne.s32.totalorder %s138, %s139
      %p148 = scmp.eq.s32.totalorder %s32, 0
      %p149 = por %p147, %p148
      %p150 = scmp.ne.s32.totalorder %s138, %s139
      %p151 = scmp.eq.s32.totalorder %s33, 1
      %p152 = por %p150, %p151
      %p154 = scmp.ne.s32.totalorder %s139, %s153
      %p155 = scmp.eq.s32.totalorder %s33, 0
      %p156 = por %p154, %p155
      %s158 = sadd.s32 %s157, 1
      %p161 = scmp.eq.s32.totalorder %s27, 1
      %p162 = scmp.ne.s32.totalorder %s157, %s159
      %p163 = scmp.eq.s32.totalorder %s27, 0
      %p164 = por %p162, %p163
      %p165 = scmp.ne.s32.totalorder %s157, %s159
      %p166 = scmp.eq.s32.totalorder %s32, 1
      %p167 = por %p165, %p166
      %p168 = scmp.ne.s32.totalorder %s159, %s160
      %p169 = scmp.eq.s32.totalorder %s32, 0
      %p170 = por %p168, %p169
      %p171 = scmp.ne.s32.totalorder %s159, %s160
      %p172 = scmp.eq.s32.totalorder %s33, 1
      %p173 = por %p171, %p172
      %p175 = scmp.ne.s32.totalorder %s160, %s174
      %p176 = scmp.eq.s32.totalorder %s33, 0
      %p177 = por %p175, %p176
      %s179 = sadd.s32 %s178, 1
      %p182 = scmp.eq.s32.totalorder %s27, 1
      %p183 = scmp.ne.s32.totalorder %s178, %s180
      %p184 = scmp.eq.s32.totalorder %s27, 0
      %p185 = por %p183, %p184
      %p186 = scmp.ne.s32.totalorder %s178, %s180
      %p187 = scmp.eq.s32.totalorder %s32, 1
      %p188 = por %p186, %p187
      %p189 = scmp.ne.s32.totalorder %s180, %s181
      %p190 = scmp.eq.s32.totalorder %s32, 0
      %p191 = por %p189, %p190
      %p192 = scmp.ne.s32.totalorder %s180, %s181
      %p193 = scmp.eq.s32.totalorder %s33, 1
      %p194 = por %p192, %p193
      %p196 = scmp.ne.s32.totalorder %s181, %s195
      %p197 = scmp.eq.s32.totalorder %s33, 0
      %p198 = por %p196, %p197
      %s200 = sadd.s32 %s199, 1
      %p203 = scmp.eq.s32.totalorder %s27, 1
      %p204 = scmp.ne.s32.totalorder %s199, %s201
      %p205 = scmp.eq.s32.totalorder %s27, 0
      %p206 = por %p204, %p205
      %p207 = scmp.ne.s32.totalorder %s199, %s201
      %p208 = scmp.eq.s32.totalorder %s32, 1
      %p209 = por %p207, %p208
      %p210 = scmp.ne.s32.totalorder %s201, %s202
      %p211 = scmp.eq.s32.totalorder %s32, 0
      %p212 = por %p210, %p211
      %p213 = scmp.ne.s32.totalorder %s201, %s202
      %p214 = scmp.eq.s32.totalorder %s33, 1
      %p215 = por %p213, %p214
      %p217 = scmp.ne.s32.totalorder %s202, %s216
      %p218 = scmp.eq.s32.totalorder %s33, 0
      %p219 = por %p217, %p218
      %s221 = sadd.s32 %s220, 1
      %p224 = scmp.eq.s32.totalorder %s27, 1
      %p225 = scmp.ne.s32.totalorder %s220, %s222
      %p226 = scmp.eq.s32.totalorder %s27, 0
      %p227 = por %p225, %p226
      %p228 = scmp.ne.s32.totalorder %s220, %s222
      %p229 = scmp.eq.s32.totalorder %s32, 1
      %p230 = por %p228, %p229
      %p231 = scmp.ne.s32.totalorder %s222, %s223
      %p232 = scmp.eq.s32.totalorder %s32, 0
      %p233 = por %p231, %p232
      %p234 = scmp.ne.s32.totalorder %s222, %s223
      %p235 = scmp.eq.s32.totalorder %s33, 1
      %p236 = por %p234, %p235
      %p238 = scmp.ne.s32.totalorder %s223, %s237
      %p239 = scmp.eq.s32.totalorder %s33, 0
      %p240 = por %p238, %p239
      %s242 = sadd.s32 %s241, 1
      %p245 = scmp.eq.s32.totalorder %s27, 1
      %p246 = scmp.ne.s32.totalorder %s241, %s243
      %p247 = scmp.eq.s32.totalorder %s27, 0
      %p248 = por %p246, %p247
      %p249 = scmp.ne.s32.totalorder %s241, %s243
      %p250 = scmp.eq.s32.totalorder %s32, 1
      %p251 = por %p249, %p250
      %p252 = scmp.ne.s32.totalorder %s243, %s244
      %p253 = scmp.eq.s32.totalorder %s32, 0
      %p254 = por %p252, %p253
      %p255 = scmp.ne.s32.totalorder %s243, %s244
      %p256 = scmp.eq.s32.totalorder %s33, 1
      %p257 = por %p255, %p256
      %p259 = scmp.ne.s32.totalorder %s244, %s258
      %p260 = scmp.eq.s32.totalorder %s33, 0
      %p261 = por %p259, %p260
      %s263 = sadd.s32 %s262, 1
      %p266 = scmp.eq.s32.totalorder %s27, 1
      %p267 = scmp.ne.s32.totalorder %s262, %s264
      %p268 = scmp.eq.s32.totalorder %s27, 0
      %p269 = por %p267, %p268
      %p270 = scmp.ne.s32.totalorder %s262, %s264
      %p271 = scmp.eq.s32.totalorder %s32, 1
      %p272 = por %p270, %p271
      %p273 = scmp.ne.s32.totalorder %s264, %s265
      %p274 = scmp.eq.s32.totalorder %s32, 0
      %p275 = por %p273, %p274
      %p276 = scmp.ne.s32.totalorder %s264, %s265
      %p277 = scmp.eq.s32.totalorder %s33, 1
      %p278 = por %p276, %p277
      %p280 = scmp.ne.s32.totalorder %s265, %s279
      %p281 = scmp.eq.s32.totalorder %s33, 0
      %p282 = por %p280, %p281
      %s284 = sadd.s32 %s283, 1
      %p287 = scmp.eq.s32.totalorder %s27, 1
      %p288 = scmp.ne.s32.totalorder %s283, %s285
      %p289 = scmp.eq.s32.totalorder %s27, 0
      %p290 = por %p288, %p289
      %p291 = scmp.ne.s32.totalorder %s283, %s285
      %p292 = scmp.eq.s32.totalorder %s32, 1
      %p293 = por %p291, %p292
      %p294 = scmp.ne.s32.totalorder %s285, %s286
      %p295 = scmp.eq.s32.totalorder %s32, 0
      %p296 = por %p294, %p295
      %p297 = scmp.ne.s32.totalorder %s285, %s286
      %p298 = scmp.eq.s32.totalorder %s33, 1
      %p299 = por %p297, %p298
      %p301 = scmp.ne.s32.totalorder %s286, %s300
      %p302 = scmp.eq.s32.totalorder %s33, 0
      %p303 = por %p301, %p302
      %s305 = sadd.s32 %s304, 1
      %p308 = scmp.eq.s32.totalorder %s27, 1
      %p309 = scmp.ne.s32.totalorder %s304, %s306
      %p310 = scmp.eq.s32.totalorder %s27, 0
      %p311 = por %p309, %p310
      %p312 = scmp.ne.s32.totalorder %s304, %s306
      %p313 = scmp.eq.s32.totalorder %s32, 1
      %p314 = por %p312, %p313
      %p315 = scmp.ne.s32.totalorder %s306, %s307
      %p316 = scmp.eq.s32.totalorder %s32, 0
      %p317 = por %p315, %p316
      %p318 = scmp.ne.s32.totalorder %s306, %s307
      %p319 = scmp.eq.s32.totalorder %s33, 1
      %p320 = por %p318, %p319
      %p322 = scmp.ne.s32.totalorder %s307, %s321
      %p323 = scmp.eq.s32.totalorder %s33, 0
      %p324 = por %p322, %p323
      %s325 = ssub.s32 %s34, %s46
      %s326 = ssub.s32 %s35, %s42
      %s327 = sor.u32 %s325, %s326
      %p328 = scmp.eq.s32.totalorder %s327, 0
      %s330 = sadd.s32 %s329, 1
      %s331 = scalar_select %p328, %s329, %s330
      %p334 = pneg %p328
      %p335 = scmp.eq.s32.totalorder %s27, 1
      %p336 = por %p334, %p335
      %p337 = scmp.ne.s32.totalorder %s329, %s332
      %p338 = scmp.eq.s32.totalorder %s27, 0
      %p339 = por %p337, %p338
      %p340 = scmp.ne.s32.totalorder %s329, %s332
      %p341 = scmp.eq.s32.totalorder %s32, 1
      %p342 = por %p340, %p341
      %p343 = scmp.ne.s32.totalorder %s332, %s333
      %p344 = scmp.eq.s32.totalorder %s32, 0
      %p345 = por %p343, %p344
      %p346 = scmp.ne.s32.totalorder %s332, %s333
      %p347 = scmp.eq.s32.totalorder %s33, 1
      %p348 = por %p346, %p347
      %p350 = scmp.ne.s32.totalorder %s333, %s349
      %p351 = scmp.eq.s32.totalorder %s33, 0
      %p352 = por %p350, %p351
      %p353 = scmp.le.s32.totalorder 1, %s27
      %p354 = scmp.lt.s32.totalorder %s27, 3
      %p355 = pnand %p353, %p354
      %p356 = pneg %p355
      // Predicated region
      $region9: #{tpu_custom_call.1} parent=5 // pred_check
        _
      $region10: #{tpu_custom_call.1} parent=5 // pred_check_branch
        %358 = sbr.rel (%p355) target = $region12
      $region11: #{tpu_custom_call.1} parent=5 // pred_region
        %s359 = ssub.s32 %s27, 1
        // Predicated region
        $region13: #{tpu_custom_call.1} parent=11 // pred_check
          %p360 = pneg %p86
        $region14: #{tpu_custom_call.1} parent=11 // pred_check_branch
          %362 = sbr.rel (%p360) target = $region16
        $region15: #{tpu_custom_call.1} parent=11 // pred_region
          _
        $region16: #{tpu_custom_call.1} parent=11 // pred_fallthru
          _
        // Predicated region
        $region17: #{tpu_custom_call.1} parent=11 // pred_check
          %p363 = pneg %p107
        $region18: #{tpu_custom_call.1} parent=11 // pred_check_branch
          %365 = sbr.rel (%p363) target = $region20
        $region19: #{tpu_custom_call.1} parent=11 // pred_region
          _
        $region20: #{tpu_custom_call.1} parent=11 // pred_fallthru
          _
        // Predicated region
        $region21: #{tpu_custom_call.1} parent=11 // pred_check
          %p366 = pneg %p128
        $region22: #{tpu_custom_call.1} parent=11 // pred_check_branch
          %368 = sbr.rel (%p366) target = $region24
        $region23: #{tpu_custom_call.1} parent=11 // pred_region
          _
        $region24: #{tpu_custom_call.1} parent=11 // pred_fallthru
          _
        // Predicated region
        $region25: #{tpu_custom_call.1} parent=11 // pred_check
          %p369 = pneg %p149
        $region26: #{tpu_custom_call.1} parent=11 // pred_check_branch
          %371 = sbr.rel (%p369) target = $region28
        $region27: #{tpu_custom_call.1} parent=11 // pred_region
          %s373 = ssub.s32 512, 512
          %374 = vsyncadd [#allocation9], %s373
          %s375 = sshll.u32 [#allocation8], 4
          %s376 = int_to_ptr.vmem [resolvable:$true] %s375
          %381 = dma.hbm_to_vmem [thread:$0]  %s4, 512, %s376, [#allocation9], 128, 128, 8
        $region28: #{tpu_custom_call.1} parent=11 // pred_fallthru
          _
        // Predicated region
        $region29: #{tpu_custom_call.1} parent=11 // pred_check
          %p382 = pneg %p170
        $region30: #{tpu_custom_call.1} parent=11 // pred_check_branch
          %384 = sbr.rel (%p382) target = $region32
        $region31: #{tpu_custom_call.1} parent=11 // pred_region
          _
        $region32: #{tpu_custom_call.1} parent=11 // pred_fallthru
          _
        // Predicated region
        $region33: #{tpu_custom_call.1} parent=11 // pred_check
          %p385 = pneg %p191
        $region34: #{tpu_custom_call.1} parent=11 // pred_check_branch
          %387 = sbr.rel (%p385) target = $region36
        $region35: #{tpu_custom_call.1} parent=11 // pred_region
          %s389 = ssub.s32 16, 16
          %390 = vsyncadd [#allocation9], %s389
          %s392 = sshll.u32 [#allocation10], 4
          %s393 = int_to_ptr.vmem [resolvable:$true] %s392
          %395 = dma.hbm_to_vmem [thread:$0]  %s6, 16, %s393, [#allocation9]
        $region36: #{tpu_custom_call.1} parent=11 // pred_fallthru
          _
        // Predicated region
        $region37: #{tpu_custom_call.1} parent=11 // pred_check
          %p396 = pneg %p212
        $region38: #{tpu_custom_call.1} parent=11 // pred_check_branch
          %398 = sbr.rel (%p396) target = $region40
        $region39: #{tpu_custom_call.1} parent=11 // pred_region
          _
        $region40: #{tpu_custom_call.1} parent=11 // pred_fallthru
          _
        // Predicated region
        $region41: #{tpu_custom_call.1} parent=11 // pred_check
          %p399 = pneg %p233
        $region42: #{tpu_custom_call.1} parent=11 // pred_check_branch
          %401 = sbr.rel (%p399) target = $region44
        $region43: #{tpu_custom_call.1} parent=11 // pred_region
          %s403 = ssub.s32 16, 16
          %404 = vsyncadd [#allocation12], %s403
          %s406 = sshll.u32 [#allocation11], 4
          %s407 = int_to_ptr.vmem [resolvable:$true] %s406
          %409 = dma.hbm_to_vmem [thread:$0]  %s8, 16, %s407, [#allocation12]
        $region44: #{tpu_custom_call.1} parent=11 // pred_fallthru
          _
        // Predicated region
        $region45: #{tpu_custom_call.1} parent=11 // pred_check
          %p410 = pneg %p254
        $region46: #{tpu_custom_call.1} parent=11 // pred_check_branch
          %412 = sbr.rel (%p410) target = $region48
        $region47: #{tpu_custom_call.1} parent=11 // pred_region
          _
        $region48: #{tpu_custom_call.1} parent=11 // pred_fallthru
          _
        // Predicated region
        $region49: #{tpu_custom_call.1} parent=11 // pred_check
          %p413 = pneg %p275
        $region50: #{tpu_custom_call.1} parent=11 // pred_check_branch
          %415 = sbr.rel (%p413) target = $region52
        $region51: #{tpu_custom_call.1} parent=11 // pred_region
          _
        $region52: #{tpu_custom_call.1} parent=11 // pred_fallthru
          _
        // Predicated region
        $region53: #{tpu_custom_call.1} parent=11 // pred_check
          %p416 = pneg %p296
        $region54: #{tpu_custom_call.1} parent=11 // pred_check_branch
          %418 = sbr.rel (%p416) target = $region56
        $region55: #{tpu_custom_call.1} parent=11 // pred_region
          %s420 = ssub.s32 1024, 1024
          %421 = vsyncadd [#allocation12], %s420
          %s422 = sshll.u32 [#allocation13], 4
          %s423 = int_to_ptr.vmem [resolvable:$true] %s422
          %428 = dma.hbm_to_vmem [thread:$0]  %s11, 1024, %s423, [#allocation12], 64, 64, 4
        $region56: #{tpu_custom_call.1} parent=11 // pred_fallthru
          _
        // Predicated region
        $region57: #{tpu_custom_call.1} parent=11 // pred_check
          %p429 = pneg %p317
        $region58: #{tpu_custom_call.1} parent=11 // pred_check_branch
          %431 = sbr.rel (%p429) target = $region60
        $region59: #{tpu_custom_call.1} parent=11 // pred_region
          _
        $region60: #{tpu_custom_call.1} parent=11 // pred_fallthru
          _
      $region12: #{tpu_custom_call.1} parent=5 // pred_fallthru
        _
      %p432 = scmp.lt.s32.totalorder %s27, 2
      // Predicated region
      $region61: #{tpu_custom_call.1} parent=5 // pred_check
        %p433 = pneg %p432
      $region62: #{tpu_custom_call.1} parent=5 // pred_check_branch
        %435 = sbr.rel (%p433) target = $region64
      $region63: #{tpu_custom_call.1} parent=5 // pred_region
        // Predicated region
        $region65: #{tpu_custom_call.1} parent=63 // pred_check
          %p436 = pneg %p59
        $region66: #{tpu_custom_call.1} parent=63 // pred_check_branch
          %438 = sbr.rel (%p436) target = $region68
        $region67: #{tpu_custom_call.1} parent=63 // pred_region
          %s439 = sand.u32 %s49, 1
          %s440 = scalar_lea.sflag [#allocation6], %s439
          %s441 = sand.u32 %s49, 1
          %s442 = smul.addr %s441, 256
          %s443 = scalar_lea.vmem [#allocation5], %s442
          %s445 = ssub.s32 4096, 4096
          %446 = vsyncadd %s440, %s445
          %s447 = smul.addr %s34, 32
          %s448 = smul.addr %s447, 128
          %s449 = scalar_lea.hbm %s0, %s448
          %s450 = sshll.u32 %s443, 4
          %s451 = int_to_ptr.vmem [resolvable:$true] %s450
          %456 = dma.hbm_to_vmem [thread:$0]  %s449, 4096, %s451, %s440, 128, 128, 8
        $region68: #{tpu_custom_call.1} parent=63 // pred_fallthru
          _
      $region64: #{tpu_custom_call.1} parent=5 // pred_fallthru
        _
      %p457 = scmp.le.s32.totalorder 1, %s27
      %p458 = scmp.lt.s32.totalorder %s27, 3
      %p459 = pnand %p457, %p458
      %p460 = pneg %p459
      // Predicated region
      $region69: #{tpu_custom_call.1} parent=5 // pred_check
        _
      $region70: #{tpu_custom_call.1} parent=5 // pred_check_branch
        %462 = sbr.rel (%p459) target = $region72
      $region71: #{tpu_custom_call.1} parent=5 // pred_region
        %s463 = ssub.s32 %s27, 1
        %s464 = sand.u32 %s52, 1
        %s465 = scalar_lea.sflag [#allocation6], %s464
        %s466 = sand.u32 %s52, 1
        %s467 = smul.addr %s466, 256
        %s468 = scalar_lea.vmem [#allocation5], %s467
        // Predicated region
        $region73: #{tpu_custom_call.1} parent=71 // pred_check
          %p469 = pneg %p65
        $region74: #{tpu_custom_call.1} parent=71 // pred_check_branch
          %471 = sbr.rel (%p469) target = $region76
        $region75: #{tpu_custom_call.1} parent=71 // pred_region
          %472 = dma.done %s465, 4096
        $region76: #{tpu_custom_call.1} parent=71 // pred_fallthru
          _
        // Predicated region
        $region77: #{tpu_custom_call.1} parent=71 // pred_check
          %p473 = pneg %p149
        $region78: #{tpu_custom_call.1} parent=71 // pred_check_branch
          %475 = sbr.rel (%p473) target = $region80
        $region79: #{tpu_custom_call.1} parent=71 // pred_region
          %476 = dma.done [#allocation9], 512
        $region80: #{tpu_custom_call.1} parent=71 // pred_fallthru
          _
        // Predicated region
        $region81: #{tpu_custom_call.1} parent=71 // pred_check
          %p477 = pneg %p191
        $region82: #{tpu_custom_call.1} parent=71 // pred_check_branch
          %479 = sbr.rel (%p477) target = $region84
        $region83: #{tpu_custom_call.1} parent=71 // pred_region
          %480 = dma.done [#allocation9], 16
        $region84: #{tpu_custom_call.1} parent=71 // pred_fallthru
          _
        // Predicated region
        $region85: #{tpu_custom_call.1} parent=71 // pred_check
          %p481 = pneg %p233
        $region86: #{tpu_custom_call.1} parent=71 // pred_check_branch
          %483 = sbr.rel (%p481) target = $region88
        $region87: #{tpu_custom_call.1} parent=71 // pred_region
          %484 = dma.done [#allocation12], 16
        $region88: #{tpu_custom_call.1} parent=71 // pred_fallthru
          _
        // Predicated region
        $region89: #{tpu_custom_call.1} parent=71 // pred_check
          %p485 = pneg %p296
        $region90: #{tpu_custom_call.1} parent=71 // pred_check_branch
          %487 = sbr.rel (%p485) target = $region92
        $region91: #{tpu_custom_call.1} parent=71 // pred_region
          %488 = dma.done [#allocation12], 1024
        $region92: #{tpu_custom_call.1} parent=71 // pred_fallthru
          _
        %s489 = sand.u32 %s52, 1
        %s490 = scalar_lea.sflag [#allocation6], %s489
        %s491 = sand.u32 %s52, 1
        %s492 = smul.addr %s491, 256
        %s493 = scalar_lea.vmem [#allocation5], %s492
        %p494 = pneg %p65
        %p495 = pneg %p62
        %p496 = pneg %p86
        %p497 = pneg %p83
        %p498 = pneg %p107
        %p499 = pneg %p104
        %p500 = pneg %p128
        %p501 = pneg %p125
        %p502 = pneg %p149
        %p503 = pneg %p146
        %p504 = pneg %p170
        %p505 = pneg %p167
        %p506 = pneg %p191
        %p507 = pneg %p188
        %p508 = pneg %p212
        %p509 = pneg %p209
        %p510 = pneg %p233
        %p511 = pneg %p230
        %p512 = pneg %p254
        %p513 = pneg %p251
        %p514 = pneg %p275
        %p515 = pneg %p272
        %p516 = pneg %p296
        %p517 = pneg %p293
        %p518 = pneg %p317
        %p519 = pneg %p314
        %p520 = pneg %p345
        %p521 = pneg %p342
        %s522 = sand.u32 %s332, 1
        %s523 = scalar_lea.sflag [#allocation7], %s522
        %s524 = sand.u32 %s332, 1
        %s525 = smul.addr %s524, 256
        %s526 = scalar_lea.vmem [#allocation14], %s525
        %s527 = smul.u32 32, %s37
        %p529 = scmp.eq.s32.totalorder %s37, 0
        // Predicated region
        $region93: #{tpu_custom_call.1} parent=71 // pred_check
          %p530 = pneg %p529
        $region94: #{tpu_custom_call.1} parent=71 // pred_check_branch
          %532 = sbr.rel (%p530) target = $region96
        $region95: #{tpu_custom_call.1} parent=71 // pred_region
          %v533 = vld [vmem:[%s468] sm:$0xff]
          %v534 = vld [vmem:[%s468 + $0x8] sm:$0xff]
          %v535 = vld [vmem:[%s468 + $0x10] sm:$0xff]
          %v536 = vld [vmem:[%s468 + $0x18] sm:$0xff]
          %v537 = vld [vmem:[%s468 + $0x20] sm:$0xff]
          %v538 = vld [vmem:[%s468 + $0x28] sm:$0xff]
          %v539 = vld [vmem:[%s468 + $0x30] sm:$0xff]
          %v540 = vld [vmem:[%s468 + $0x38] sm:$0xff]
          %v541 = vld [vmem:[%s468 + $0x40] sm:$0xff]
          %v542 = vld [vmem:[%s468 + $0x48] sm:$0xff]
          %v543 = vld [vmem:[%s468 + $0x50] sm:$0xff]
          %v544 = vld [vmem:[%s468 + $0x58] sm:$0xff]
          %v545 = vld [vmem:[%s468 + $0x60] sm:$0xff]
          %v546 = vld [vmem:[%s468 + $0x68] sm:$0xff]
          %v547 = vld [vmem:[%s468 + $0x70] sm:$0xff]
          %v548 = vld [vmem:[%s468 + $0x78] sm:$0xff]
          %v549 = vld [vmem:[%s468 + $0x80] sm:$0xff]
          %v550 = vld [vmem:[%s468 + $0x88] sm:$0xff]
          %v551 = vld [vmem:[%s468 + $0x90] sm:$0xff]
          %v552 = vld [vmem:[%s468 + $0x98] sm:$0xff]
          %v553 = vld [vmem:[%s468 + $0xa0] sm:$0xff]
          %v554 = vld [vmem:[%s468 + $0xa8] sm:$0xff]
          %v555 = vld [vmem:[%s468 + $0xb0] sm:$0xff]
          %v556 = vld [vmem:[%s468 + $0xb8] sm:$0xff]
          %v557 = vld [vmem:[%s468 + $0xc0] sm:$0xff]
          %v558 = vld [vmem:[%s468 + $0xc8] sm:$0xff]
          %v559 = vld [vmem:[%s468 + $0xd0] sm:$0xff]
          %v560 = vld [vmem:[%s468 + $0xd8] sm:$0xff]
          %v561 = vld [vmem:[%s468 + $0xe0] sm:$0xff]
          %v562 = vld [vmem:[%s468 + $0xe8] sm:$0xff]
          %v563 = vld [vmem:[%s468 + $0xf0] sm:$0xff]
          %v564 = vld [vmem:[%s468 + $0xf8] sm:$0xff]
          %v565 = vadd.f32 %v533, %v534
          %v566 = vadd.f32 %v565, %v535
          %v567 = vadd.f32 %v566, %v536
          %v568 = vadd.f32 %v567, %v537
          %v569 = vadd.f32 %v568, %v538
          %v570 = vadd.f32 %v569, %v539
          %v571 = vadd.f32 %v570, %v540
          %v572 = vadd.f32 %v571, %v541
          %v573 = vadd.f32 %v572, %v542
          %v574 = vadd.f32 %v573, %v543
          %v575 = vadd.f32 %v574, %v544
          %v576 = vadd.f32 %v575, %v545
          %v577 = vadd.f32 %v576, %v546
          %v578 = vadd.f32 %v577, %v547
          %v579 = vadd.f32 %v578, %v548
          %v580 = vadd.f32 %v579, %v549
          %v581 = vadd.f32 %v580, %v550
          %v582 = vadd.f32 %v581, %v551
          %v583 = vadd.f32 %v582, %v552
          %v584 = vadd.f32 %v583, %v553
          %v585 = vadd.f32 %v584, %v554
          %v586 = vadd.f32 %v585, %v555
          %v587 = vadd.f32 %v586, %v556
          %v588 = vadd.f32 %v587, %v557
          %v589 = vadd.f32 %v588, %v558
          %v590 = vadd.f32 %v589, %v559
          %v591 = vadd.f32 %v590, %v560
          %v592 = vadd.f32 %v591, %v561
          %v593 = vadd.f32 %v592, %v562
          %v594 = vadd.f32 %v593, %v563
          %v595 = vadd.f32 %v594, %v564
          %v596 = vrot.slane %v595, 4
          %v597 = vadd.f32 %v595, %v596
          %v598 = vrot.slane %v597, 2
          %v599 = vadd.f32 %v597, %v598
          %v600 = vrot.slane %v599, 1
          %v601 = vadd.f32 %v599, %v600
          %v602 = vmul.f32 %v533, %v533
          %v603 = vmul.f32 %v534, %v534
          %v604 = vmul.f32 %v535, %v535
          %v605 = vmul.f32 %v536, %v536
          %v606 = vmul.f32 %v537, %v537
          %v607 = vmul.f32 %v538, %v538
          %v608 = vmul.f32 %v539, %v539
          %v609 = vmul.f32 %v540, %v540
          %v610 = vmul.f32 %v541, %v541
          %v611 = vmul.f32 %v542, %v542
          %v612 = vmul.f32 %v543, %v543
          %v613 = vmul.f32 %v544, %v544
          %v614 = vmul.f32 %v545, %v545
          %v615 = vmul.f32 %v546, %v546
          %v616 = vmul.f32 %v547, %v547
          %v617 = vmul.f32 %v548, %v548
          %v618 = vmul.f32 %v549, %v549
          %v619 = vmul.f32 %v550, %v550
          %v620 = vmul.f32 %v551, %v551
          %v621 = vmul.f32 %v552, %v552
          %v622 = vmul.f32 %v553, %v553
          %v623 = vmul.f32 %v554, %v554
          %v624 = vmul.f32 %v555, %v555
          %v625 = vmul.f32 %v556, %v556
          %v626 = vmul.f32 %v557, %v557
          %v627 = vmul.f32 %v558, %v558
          %v628 = vmul.f32 %v559, %v559
          %v629 = vmul.f32 %v560, %v560
          %v630 = vmul.f32 %v561, %v561
          %v631 = vmul.f32 %v562, %v562
          %v632 = vmul.f32 %v563, %v563
          %v633 = vmul.f32 %v564, %v564
          %v634 = vadd.f32 %v602, %v603
          %v635 = vadd.f32 %v634, %v604
          %v636 = vadd.f32 %v635, %v605
          %v637 = vadd.f32 %v636, %v606
          %v638 = vadd.f32 %v637, %v607
          %v639 = vadd.f32 %v638, %v608
          %v640 = vadd.f32 %v639, %v609
          %v641 = vadd.f32 %v640, %v610
          %v642 = vadd.f32 %v641, %v611
          %v643 = vadd.f32 %v642, %v612
          %v644 = vadd.f32 %v643, %v613
          %v645 = vadd.f32 %v644, %v614
          %v646 = vadd.f32 %v645, %v615
          %v647 = vadd.f32 %v646, %v616
          %v648 = vadd.f32 %v647, %v617
          %v649 = vadd.f32 %v648, %v618
          %v650 = vadd.f32 %v649, %v619
          %v651 = vadd.f32 %v650, %v620
          %v652 = vadd.f32 %v651, %v621
          %v653 = vadd.f32 %v652, %v622
          %v654 = vadd.f32 %v653, %v623
          %v655 = vadd.f32 %v654, %v624
          %v656 = vadd.f32 %v655, %v625
          %v657 = vadd.f32 %v656, %v626
          %v658 = vadd.f32 %v657, %v627
          %v659 = vadd.f32 %v658, %v628
          %v660 = vadd.f32 %v659, %v629
          %v661 = vadd.f32 %v660, %v630
          %v662 = vadd.f32 %v661, %v631
          %v663 = vadd.f32 %v662, %v632
          %v664 = vadd.f32 %v663, %v633
          %v665 = vrot.slane %v664, 4
          %v666 = vadd.f32 %v664, %v665
          %v667 = vrot.slane %v666, 2
          %v668 = vadd.f32 %v666, %v667
          %v669 = vrot.slane %v668, 1
          %v670 = vadd.f32 %v668, %v669
          %v671 = vld [vmem:[%s3] sm:$0xff]
          %v672 = vld [vmem:[%s3 + $0x8] sm:$0xff]
          %v673 = vld [vmem:[%s3 + $0x10] sm:$0xff]
          %v674 = vld [vmem:[%s3 + $0x18] sm:$0xff]
          %v675 = vld [vmem:[%s3 + $0x20] sm:$0xff]
          %v676 = vld [vmem:[%s3 + $0x28] sm:$0xff]
          %v677 = vld [vmem:[%s3 + $0x30] sm:$0xff]
          %v678 = vld [vmem:[%s3 + $0x38] sm:$0xff]
          %v679 = vld [vmem:[%s3 + $0x40] sm:$0xff]
          %v680 = vld [vmem:[%s3 + $0x48] sm:$0xff]
          %v681 = vld [vmem:[%s3 + $0x50] sm:$0xff]
          %v682 = vld [vmem:[%s3 + $0x58] sm:$0xff]
          %v683 = vld [vmem:[%s3 + $0x60] sm:$0xff]
          %v684 = vld [vmem:[%s3 + $0x68] sm:$0xff]
          %v685 = vld [vmem:[%s3 + $0x70] sm:$0xff]
          %v686 = vld [vmem:[%s3 + $0x78] sm:$0xff]
          %687 = vmatprep.subr.mxu0 0.0
          %688 = vmatpush1.msra.mxu0 %v671
          %689 = vmatprep.subr.mxu0 0.0
          %690 = vmatpush1.msra.mxu0 %v672
          %691 = vmatprep.subr.mxu0 0.0
          %692 = vmatpush1.msra.mxu0 %v673
          %693 = vmatprep.subr.mxu0 0.0
          %694 = vmatpush1.msra.mxu0 %v674
          %695 = vmatprep.subr.mxu0 0.0
          %696 = vmatpush1.msra.mxu0 %v675
          %697 = vmatprep.subr.mxu0 0.0
          %698 = vmatpush1.msra.mxu0 %v676
          %699 = vmatprep.subr.mxu0 0.0
          %700 = vmatpush1.msra.mxu0 %v677
          %701 = vmatprep.subr.mxu0 0.0
          %702 = vmatpush1.msra.mxu0 %v678
          %703 = vmatprep.subr.mxu0 0.0
          %704 = vmatpush1.msra.mxu0 %v679
          %705 = vmatprep.subr.mxu0 0.0
          %706 = vmatpush1.msra.mxu0 %v680
          %707 = vmatprep.subr.mxu0 0.0
          %708 = vmatpush1.msra.mxu0 %v681
          %709 = vmatprep.subr.mxu0 0.0
          %710 = vmatpush1.msra.mxu0 %v682
          %711 = vmatprep.subr.mxu0 0.0
          %712 = vmatpush1.msra.mxu0 %v683
          %713 = vmatprep.subr.mxu0 0.0
          %714 = vmatpush1.msra.mxu0 %v684
          %715 = vmatprep.subr.mxu0 0.0
          %716 = vmatpush1.msra.mxu0 %v685
          %717 = vmatprep.subr.mxu0 0.0
          %718 = vmatpush1.msra.mxu0 %v686
          %719 = vmatprep.subr.mxu0 0.0
          %720 = vmatpush1.msra.mxu0 0.0
          %721 = vmatprep.subr.mxu0 0.0
          %722 = vmatpush1.msra.mxu0 0.0
          %723 = vmatprep.subr.mxu0 0.0
          %724 = vmatpush1.msra.mxu0 0.0
          %725 = vmatprep.subr.mxu0 0.0
          %726 = vmatpush1.msra.mxu0 0.0
          %727 = vmatprep.subr.mxu0 0.0
          %728 = vmatpush1.msra.mxu0 0.0
          %729 = vmatprep.subr.mxu0 0.0
          %730 = vmatpush1.msra.mxu0 0.0
          %731 = vmatprep.subr.mxu0 0.0
          %732 = vmatpush1.msra.mxu0 0.0
          %733 = vmatprep.subr.mxu0 0.0
          %734 = vmatpush1.msra.mxu0 0.0
          %735 = vmatprep.subr.mxu0 0.0
          %736 = vmatpush1.msra.mxu0 0.0
          %737 = vmatprep.subr.mxu0 0.0
          %738 = vmatpush1.msra.mxu0 0.0
          %739 = vmatprep.subr.mxu0 0.0
          %740 = vmatpush1.msra.mxu0 0.0
          %741 = vmatprep.subr.mxu0 0.0
          %742 = vmatpush1.msra.mxu0 0.0
          %743 = vmatprep.subr.mxu0 0.0
          %744 = vmatpush1.msra.mxu0 0.0
          %745 = vmatprep.subr.mxu0 0.0
          %746 = vmatpush1.msra.mxu0 0.0
          %747 = vmatprep.subr.mxu0 0.0
          %748 = vmatpush1.msra.mxu0 0.0
          %749 = vmatprep.subr.mxu0 0.0
          %750 = vmatpush1.msra.mxu0 0.0
          %751 = vmatprep.mubr.f32.mxu0 0.0
          %752 = vmatmul.mubr.f32.gmra.mrb[0].mxu0 %v601
          %v753 = vpop.f32.mrb[0].mxu0
          %v754 = vadd.f32 0.0, %v753
          %v755 = vpop.f32.mrb[0].mxu0
          %756 = vdwg.mxu0
          %v757 = vmul.f32 %v754, 0.0009765625
          %758 = vmatprep.subr.mxu0 0.0
          %759 = vmatpush1.msra.mxu0 %v671
          %760 = vmatprep.subr.mxu0 0.0
          %761 = vmatpush1.msra.mxu0 %v672
          %762 = vmatprep.subr.mxu0 0.0
          %763 = vmatpush1.msra.mxu0 %v673
          %764 = vmatprep.subr.mxu0 0.0
          %765 = vmatpush1.msra.mxu0 %v674
          %766 = vmatprep.subr.mxu0 0.0
          %767 = vmatpush1.msra.mxu0 %v675
          %768 = vmatprep.subr.mxu0 0.0
          %769 = vmatpush1.msra.mxu0 %v676
          %770 = vmatprep.subr.mxu0 0.0
          %771 = vmatpush1.msra.mxu0 %v677
          %772 = vmatprep.subr.mxu0 0.0
          %773 = vmatpush1.msra.mxu0 %v678
          %774 = vmatprep.subr.mxu0 0.0
          %775 = vmatpush1.msra.mxu0 %v679
          %776 = vmatprep.subr.mxu0 0.0
          %777 = vmatpush1.msra.mxu0 %v680
          %778 = vmatprep.subr.mxu0 0.0
          %779 = vmatpush1.msra.mxu0 %v681
          %780 = vmatprep.subr.mxu0 0.0
          %781 = vmatpush1.msra.mxu0 %v682
          %782 = vmatprep.subr.mxu0 0.0
          %783 = vmatpush1.msra.mxu0 %v683
          %784 = vmatprep.subr.mxu0 0.0
          %785 = vmatpush1.msra.mxu0 %v684
          %786 = vmatprep.subr.mxu0 0.0
          %787 = vmatpush1.msra.mxu0 %v685
          %788 = vmatprep.subr.mxu0 0.0
          %789 = vmatpush1.msra.mxu0 %v686
          %790 = vmatprep.subr.mxu0 0.0
          %791 = vmatpush1.msra.mxu0 0.0
          %792 = vmatprep.subr.mxu0 0.0
          %793 = vmatpush1.msra.mxu0 0.0
          %794 = vmatprep.subr.mxu0 0.0
          %795 = vmatpush1.msra.mxu0 0.0
          %796 = vmatprep.subr.mxu0 0.0
          %797 = vmatpush1.msra.mxu0 0.0
          %798 = vmatprep.subr.mxu0 0.0
          %799 = vmatpush1.msra.mxu0 0.0
          %800 = vmatprep.subr.mxu0 0.0
          %801 = vmatpush1.msra.mxu0 0.0
          %802 = vmatprep.subr.mxu0 0.0
          %803 = vmatpush1.msra.mxu0 0.0
          %804 = vmatprep.subr.mxu0 0.0
          %805 = vmatpush1.msra.mxu0 0.0
          %806 = vmatprep.subr.mxu0 0.0
          %807 = vmatpush1.msra.mxu0 0.0
          %808 = vmatprep.subr.mxu0 0.0
          %809 = vmatpush1.msra.mxu0 0.0
          %810 = vmatprep.subr.mxu0 0.0
          %811 = vmatpush1.msra.mxu0 0.0
          %812 = vmatprep.subr.mxu0 0.0
          %813 = vmatpush1.msra.mxu0 0.0
          %814 = vmatprep.subr.mxu0 0.0
          %815 = vmatpush1.msra.mxu0 0.0
          %816 = vmatprep.subr.mxu0 0.0
          %817 = vmatpush1.msra.mxu0 0.0
          %818 = vmatprep.subr.mxu0 0.0
          %819 = vmatpush1.msra.mxu0 0.0
          %820 = vmatprep.subr.mxu0 0.0
          %821 = vmatpush1.msra.mxu0 0.0
          %822 = vmatprep.mubr.f32.mxu0 0.0
          %823 = vmatmul.mubr.f32.gmra.mrb[0].mxu0 %v670
          %v824 = vpop.f32.mrb[0].mxu0
          %v825 = vadd.f32 0.0, %v824
          %v826 = vpop.f32.mrb[0].mxu0
          %827 = vdwg.mxu0
          %v828 = vmul.f32 %v825, 0.0009765625
          %v829 = vmul.f32 %v757, %v757
          %v830 = vsub.f32 %v828, %v829
          %v831 = vadd.f32 %v830, 1e-05
          %v832 = vrsqrt.pop %v831
          %v833 = vld [vmem:[#allocation8] sm:$0xff]
          %v834 = vld [vmem:[#allocation8 + $0x8] sm:$0xff]
          %v835 = vld [vmem:[#allocation8 + $0x10] sm:$0xff]
          %v836 = vld [vmem:[#allocation8 + $0x18] sm:$0xff]
          %vm837 = vcmask 261120
          %v839 = vsel %vm837, %v757, 0
          %841 = vmatprep.subr.mxu0 0.0
          %842 = vmatpush1.msra.mxu0 %v833
          %843 = vmatprep.subr.mxu0 0.0
          %844 = vmatpush1.msra.mxu0 %v834
          %845 = vmatprep.subr.mxu0 0.0
          %846 = vmatpush1.msra.mxu0 %v835
          %847 = vmatprep.subr.mxu0 0.0
          %848 = vmatpush1.msra.mxu0 %v836
          %849 = vmatprep.subr.mxu0 0.0
          %850 = vmatpush1.msra.mxu0 0.0
          %851 = vmatprep.subr.mxu0 0.0
          %852 = vmatpush1.msra.mxu0 0.0
          %853 = vmatprep.subr.mxu0 0.0
          %854 = vmatpush1.msra.mxu0 0.0
          %855 = vmatprep.subr.mxu0 0.0
          %856 = vmatpush1.msra.mxu0 0.0
          %857 = vmatprep.subr.mxu0 0.0
          %858 = vmatpush1.msra.mxu0 0.0
          %859 = vmatprep.subr.mxu0 0.0
          %860 = vmatpush1.msra.mxu0 0.0
          %861 = vmatprep.subr.mxu0 0.0
          %862 = vmatpush1.msra.mxu0 0.0
          %863 = vmatprep.subr.mxu0 0.0
          %864 = vmatpush1.msra.mxu0 0.0
          %865 = vmatprep.subr.mxu0 0.0
          %866 = vmatpush1.msra.mxu0 0.0
          %867 = vmatprep.subr.mxu0 0.0
          %868 = vmatpush1.msra.mxu0 0.0
          %869 = vmatprep.subr.mxu0 0.0
          %870 = vmatpush1.msra.mxu0 0.0
          %871 = vmatprep.subr.mxu0 0.0
          %872 = vmatpush1.msra.mxu0 0.0
          %873 = vmatprep.subr.mxu0 0.0
          %874 = vmatpush1.msra.mxu0 0.0
          %875 = vmatprep.subr.mxu0 0.0
          %876 = vmatpush1.msra.mxu0 0.0
          %877 = vmatprep.subr.mxu0 0.0
          %878 = vmatpush1.msra.mxu0 0.0
          %879 = vmatprep.subr.mxu0 0.0
          %880 = vmatpush1.msra.mxu0 0.0
          %881 = vmatprep.subr.mxu0 0.0
          %882 = vmatpush1.msra.mxu0 0.0
          %883 = vmatprep.subr.mxu0 0.0
          %884 = vmatpush1.msra.mxu0 0.0
          %885 = vmatprep.subr.mxu0 0.0
          %886 = vmatpush1.msra.mxu0 0.0
          %887 = vmatprep.subr.mxu0 0.0
          %888 = vmatpush1.msra.mxu0 0.0
          %889 = vmatprep.subr.mxu0 0.0
          %890 = vmatpush1.msra.mxu0 0.0
          %891 = vmatprep.subr.mxu0 0.0
          %892 = vmatpush1.msra.mxu0 0.0
          %893 = vmatprep.subr.mxu0 0.0
          %894 = vmatpush1.msra.mxu0 0.0
          %895 = vmatprep.subr.mxu0 0.0
          %896 = vmatpush1.msra.mxu0 0.0
          %897 = vmatprep.subr.mxu0 0.0
          %898 = vmatpush1.msra.mxu0 0.0
          %899 = vmatprep.subr.mxu0 0.0
          %900 = vmatpush1.msra.mxu0 0.0
          %901 = vmatprep.subr.mxu0 0.0
          %902 = vmatpush1.msra.mxu0 0.0
          %903 = vmatprep.subr.mxu0 0.0
          %904 = vmatpush1.msra.mxu0 0.0
          %905 = vmatprep.mubr.f32.mxu0 0.0
          %906 = vmatmul.mubr.f32.gmra.mrb[0].mxu0 %v839
          %v907 = vpop.f32.mrb[0].mxu0
          %v908 = vadd.f32 0.0, %v907
          %v909 = vpop.f32.mrb[0].mxu0
          %910 = vdwg.mxu0
          %v912 = vsel %vm837, %v832, 0
          %914 = vmatprep.subr.mxu0 0.0
          %915 = vmatpush1.msra.mxu0 %v833
          %916 = vmatprep.subr.mxu0 0.0
          %917 = vmatpush1.msra.mxu0 %v834
          %918 = vmatprep.subr.mxu0 0.0
          %919 = vmatpush1.msra.mxu0 %v835
          %920 = vmatprep.subr.mxu0 0.0
          %921 = vmatpush1.msra.mxu0 %v836
          %922 = vmatprep.subr.mxu0 0.0
          %923 = vmatpush1.msra.mxu0 0.0
          %924 = vmatprep.subr.mxu0 0.0
          %925 = vmatpush1.msra.mxu0 0.0
          %926 = vmatprep.subr.mxu0 0.0
          %927 = vmatpush1.msra.mxu0 0.0
          %928 = vmatprep.subr.mxu0 0.0
          %929 = vmatpush1.msra.mxu0 0.0
          %930 = vmatprep.subr.mxu0 0.0
          %931 = vmatpush1.msra.mxu0 0.0
          %932 = vmatprep.subr.mxu0 0.0
          %933 = vmatpush1.msra.mxu0 0.0
          %934 = vmatprep.subr.mxu0 0.0
          %935 = vmatpush1.msra.mxu0 0.0
          %936 = vmatprep.subr.mxu0 0.0
          %937 = vmatpush1.msra.mxu0 0.0
          %938 = vmatprep.subr.mxu0 0.0
          %939 = vmatpush1.msra.mxu0 0.0
          %940 = vmatprep.subr.mxu0 0.0
          %941 = vmatpush1.msra.mxu0 0.0
          %942 = vmatprep.subr.mxu0 0.0
          %943 = vmatpush1.msra.mxu0 0.0
          %944 = vmatprep.subr.mxu0 0.0
          %945 = vmatpush1.msra.mxu0 0.0
          %946 = vmatprep.subr.mxu0 0.0
          %947 = vmatpush1.msra.mxu0 0.0
          %948 = vmatprep.subr.mxu0 0.0
          %949 = vmatpush1.msra.mxu0 0.0
          %950 = vmatprep.subr.mxu0 0.0
          %951 = vmatpush1.msra.mxu0 0.0
          %952 = vmatprep.subr.mxu0 0.0
          %953 = vmatpush1.msra.mxu0 0.0
          %954 = vmatprep.subr.mxu0 0.0
          %955 = vmatpush1.msra.mxu0 0.0
          %956 = vmatprep.subr.mxu0 0.0
          %957 = vmatpush1.msra.mxu0 0.0
          %958 = vmatprep.subr.mxu0 0.0
          %959 = vmatpush1.msra.mxu0 0.0
          %960 = vmatprep.subr.mxu0 0.0
          %961 = vmatpush1.msra.mxu0 0.0
          %962 = vmatprep.subr.mxu0 0.0
          %963 = vmatpush1.msra.mxu0 0.0
          %964 = vmatprep.subr.mxu0 0.0
          %965 = vmatpush1.msra.mxu0 0.0
          %966 = vmatprep.subr.mxu0 0.0
          %967 = vmatpush1.msra.mxu0 0.0
          %968 = vmatprep.subr.mxu0 0.0
          %969 = vmatpush1.msra.mxu0 0.0
          %970 = vmatprep.subr.mxu0 0.0
          %971 = vmatpush1.msra.mxu0 0.0
          %972 = vmatprep.subr.mxu0 0.0
          %973 = vmatpush1.msra.mxu0 0.0
          %974 = vmatprep.subr.mxu0 0.0
          %975 = vmatpush1.msra.mxu0 0.0
          %976 = vmatprep.subr.mxu0 0.0
          %977 = vmatpush1.msra.mxu0 0.0
          %978 = vmatprep.mubr.f32.mxu0 0.0
          %979 = vmatmul.mubr.f32.gmra.mrb[0].mxu0 %v912
          %v980 = vpop.f32.mrb[0].mxu0
          %v981 = vadd.f32 0.0, %v980
          %v982 = vpop.f32.mrb[0].mxu0
          %983 = vdwg.mxu0
          %v984 = vld [vmem:[%s1] sm:$0x1]
          %v985 = vmul.f32 %v981, %v984
          %v986 = vld [vmem:[%s2] sm:$0x1]
          %v987 = vmul.f32 %v908, %v985
          %v988 = vsub.f32 %v986, %v987
          %v989 = vlaneseq
          %v990 = vshrl.u32 %v989, 7
          %v991 = vsub.s32 0, %v990
          %v992 = vrot.slane %v985, %v991
          %v993 = vmul.f32 %v533, %v992
          %v994 = vmul.f32 %v534, %v992
          %v995 = vmul.f32 %v535, %v992
          %v996 = vmul.f32 %v536, %v992
          %v997 = vmul.f32 %v537, %v992
          %v998 = vmul.f32 %v538, %v992
          %v999 = vmul.f32 %v539, %v992
          %v1000 = vmul.f32 %v540, %v992
          %v1001 = vmul.f32 %v541, %v992
          %v1002 = vmul.f32 %v542, %v992
          %v1003 = vmul.f32 %v543, %v992
          %v1004 = vmul.f32 %v544, %v992
          %v1005 = vmul.f32 %v545, %v992
          %v1006 = vmul.f32 %v546, %v992
          %v1007 = vmul.f32 %v547, %v992
          %v1008 = vmul.f32 %v548, %v992
          %v1009 = vmul.f32 %v549, %v992
          %v1010 = vmul.f32 %v550, %v992
          %v1011 = vmul.f32 %v551, %v992
          %v1012 = vmul.f32 %v552, %v992
          %v1013 = vmul.f32 %v553, %v992
          %v1014 = vmul.f32 %v554, %v992
          %v1015 = vmul.f32 %v555, %v992
          %v1016 = vmul.f32 %v556, %v992
          %v1017 = vmul.f32 %v557, %v992
          %v1018 = vmul.f32 %v558, %v992
          %v1019 = vmul.f32 %v559, %v992
          %v1020 = vmul.f32 %v560, %v992
          %v1021 = vmul.f32 %v561, %v992
          %v1022 = vmul.f32 %v562, %v992
          %v1023 = vmul.f32 %v563, %v992
          %v1024 = vmul.f32 %v564, %v992
          %v1026 = vlaneseq
          %v1027 = vshrl.u32 %v1026, 7
          %v1028 = vsub.s32 0, %v1027
          %v1029 = vrot.slane %v988, %v1028
          %v1031 = vadd.f32 %v993, %v1029
          %v1032 = vadd.f32 %v994, %v1029
          %v1033 = vadd.f32 %v995, %v1029
          %v1034 = vadd.f32 %v996, %v1029
          %v1035 = vadd.f32 %v997, %v1029
          %v1036 = vadd.f32 %v998, %v1029
          %v1037 = vadd.f32 %v999, %v1029
          %v1038 = vadd.f32 %v1000, %v1029
          %v1039 = vadd.f32 %v1001, %v1029
          %v1040 = vadd.f32 %v1002, %v1029
          %v1041 = vadd.f32 %v1003, %v1029
          %v1042 = vadd.f32 %v1004, %v1029
          %v1043 = vadd.f32 %v1005, %v1029
          %v1044 = vadd.f32 %v1006, %v1029
          %v1045 = vadd.f32 %v1007, %v1029
          %v1046 = vadd.f32 %v1008, %v1029
          %v1047 = vadd.f32 %v1009, %v1029
          %v1048 = vadd.f32 %v1010, %v1029
          %v1049 = vadd.f32 %v1011, %v1029
          %v1050 = vadd.f32 %v1012, %v1029
          %v1051 = vadd.f32 %v1013, %v1029
          %v1052 = vadd.f32 %v1014, %v1029
          %v1053 = vadd.f32 %v1015, %v1029
          %v1054 = vadd.f32 %v1016, %v1029
          %v1055 = vadd.f32 %v1017, %v1029
          %v1056 = vadd.f32 %v1018, %v1029
          %v1057 = vadd.f32 %v1019, %v1029
          %v1058 = vadd.f32 %v1020, %v1029
          %v1059 = vadd.f32 %v1021, %v1029
          %v1060 = vadd.f32 %v1022, %v1029
          %v1061 = vadd.f32 %v1023, %v1029
          %v1062 = vadd.f32 %v1024, %v1029
          %v1063 = vpack.c.bf16 %v1032, %v1031
          %v1064 = vpack.c.bf16 %v1034, %v1033
          %v1065 = vpack.c.bf16 %v1036, %v1035
          %v1066 = vpack.c.bf16 %v1038, %v1037
          %v1067 = vpack.c.bf16 %v1040, %v1039
          %v1068 = vpack.c.bf16 %v1042, %v1041
          %v1069 = vpack.c.bf16 %v1044, %v1043
          %v1070 = vpack.c.bf16 %v1046, %v1045
          %v1071 = vpack.c.bf16 %v1048, %v1047
          %v1072 = vpack.c.bf16 %v1050, %v1049
          %v1073 = vpack.c.bf16 %v1052, %v1051
          %v1074 = vpack.c.bf16 %v1054, %v1053
          %v1075 = vpack.c.bf16 %v1056, %v1055
          %v1076 = vpack.c.bf16 %v1058, %v1057
          %v1077 = vpack.c.bf16 %v1060, %v1059
          %v1078 = vpack.c.bf16 %v1062, %v1061
          %v1079 = vld [vmem:[%s5] sm:$0xf]
          %v1080 = vld [vmem:[%s5 + $0x4] sm:$0xf]
          %v1081 = vld [vmem:[%s5 + $0x8] sm:$0xf]
          %v1082 = vld [vmem:[%s5 + $0xc] sm:$0xf]
          %v1083 = vld [vmem:[%s5 + $0x10] sm:$0xf]
          %v1084 = vld [vmem:[%s5 + $0x14] sm:$0xf]
          %v1085 = vld [vmem:[%s5 + $0x18] sm:$0xf]
          %v1086 = vld [vmem:[%s5 + $0x1c] sm:$0xf]
          %v1087 = vld [vmem:[%s5 + $0x20] sm:$0xf]
          %v1088 = vld [vmem:[%s5 + $0x24] sm:$0xf]
          %v1089 = vld [vmem:[%s5 + $0x28] sm:$0xf]
          %v1090 = vld [vmem:[%s5 + $0x2c] sm:$0xf]
          %v1091 = vld [vmem:[%s5 + $0x30] sm:$0xf]
          %v1092 = vld [vmem:[%s5 + $0x34] sm:$0xf]
          %v1093 = vld [vmem:[%s5 + $0x38] sm:$0xf]
          %v1094 = vld [vmem:[%s5 + $0x3c] sm:$0xf]
          %v1095 = vld [vmem:[#allocation10] sm:$0x1]
          %v1097 = vlaneseq
          %v1098 = vshrl.u32 %v1097, 7
          %v1099 = vsub.s32 0, %v1098
          %v1100 = vrot.slane %v1095, %v1099
          %v1118 = vunpack.c.l.b16 %v1079
          %v1119 = vunpack.c.l.b16 %v1080
          %v1120 = vunpack.c.l.b16 %v1081
          %v1121 = vunpack.c.l.b16 %v1082
          %v1122 = vunpack.c.l.b16 %v1083
          %v1123 = vunpack.c.l.b16 %v1084
          %v1124 = vunpack.c.l.b16 %v1085
          %v1125 = vunpack.c.l.b16 %v1086
          %v1126 = vunpack.c.l.b16 %v1087
          %v1127 = vunpack.c.l.b16 %v1088
          %v1128 = vunpack.c.l.b16 %v1089
          %v1129 = vunpack.c.l.b16 %v1090
          %v1130 = vunpack.c.l.b16 %v1091
          %v1131 = vunpack.c.l.b16 %v1092
          %v1132 = vunpack.c.l.b16 %v1093
          %v1133 = vunpack.c.l.b16 %v1094
          %v1134 = vpack.c.b16 %v1119, %v1118
          %v1135 = vpack.c.b16 %v1121, %v1120
          %v1136 = vpack.c.b16 %v1123, %v1122
          %v1137 = vpack.c.b16 %v1125, %v1124
          %v1138 = vpack.c.b16 %v1127, %v1126
          %v1139 = vpack.c.b16 %v1129, %v1128
          %v1140 = vpack.c.b16 %v1131, %v1130
          %v1141 = vpack.c.b16 %v1133, %v1132
          %1150 = vmatprep.subr.bf16.mxu0 0
          %1151 = vmatpush1.bf16.msra.mxu0 %v1134
          %1152 = vmatprep.subr.bf16.mxu0 0
          %1153 = vmatpush1.bf16.msra.mxu0 %v1135
          %1154 = vmatprep.subr.bf16.mxu0 0
          %1155 = vmatpush1.bf16.msra.mxu0 %v1136
          %1156 = vmatprep.subr.bf16.mxu0 0
          %1157 = vmatpush1.bf16.msra.mxu0 %v1137
          %1158 = vmatprep.subr.bf16.mxu0 0
          %1159 = vmatpush1.bf16.msra.mxu0 %v1138
          %1160 = vmatprep.subr.bf16.mxu0 0
          %1161 = vmatpush1.bf16.msra.mxu0 %v1139
          %1162 = vmatprep.subr.bf16.mxu0 0
          %1163 = vmatpush1.bf16.msra.mxu0 %v1140
          %1164 = vmatprep.subr.bf16.mxu0 0
          %1165 = vmatpush1.bf16.msra.mxu0 %v1141
          %1166 = vmatprep.subr.bf16.mxu0 0
          %1167 = vmatpush1.bf16.msra.mxu0 0
          %1168 = vmatprep.subr.bf16.mxu0 0
          %1169 = vmatpush1.bf16.msra.mxu0 0
          %1170 = vmatprep.subr.bf16.mxu0 0
          %1171 = vmatpush1.bf16.msra.mxu0 0
          %1172 = vmatprep.subr.bf16.mxu0 0
          %1173 = vmatpush1.bf16.msra.mxu0 0
          %1174 = vmatprep.subr.bf16.mxu0 0
          %1175 = vmatpush1.bf16.msra.mxu0 0
          %1176 = vmatprep.subr.bf16.mxu0 0
          %1177 = vmatpush1.bf16.msra.mxu0 0
          %1178 = vmatprep.subr.bf16.mxu0 0
          %1179 = vmatpush1.bf16.msra.mxu0 0
          %1180 = vmatprep.subr.bf16.mxu0 0
          %1181 = vmatpush1.bf16.msra.mxu0 0
          %1182 = vmatprep.mubr.bf16.mxu0 0
          %1183 = vmatmul.mubr.bf16.gmra.mrb[0].mxu0 %v1063
          %v1184 = vpop.f32.mrb[0].mxu0
          %v1185 = vadd.f32 %v1100, %v1184
          %v1186 = vpop.f32.mrb[0].mxu0
          %v1187 = vpop.f32.mrb[0].mxu0
          %v1188 = vadd.f32 %v1100, %v1187
          %v1189 = vpop.f32.mrb[0].mxu0
          %1190 = vmatprep.mubr.bf16.mxu0 0
          %1191 = vmatmul.mubr.bf16.gmra.mrb[0].mxu0 %v1064
          %v1192 = vpop.f32.mrb[0].mxu0
          %v1193 = vadd.f32 %v1100, %v1192
          %v1194 = vpop.f32.mrb[0].mxu0
          %v1195 = vpop.f32.mrb[0].mxu0
          %v1196 = vadd.f32 %v1100, %v1195
          %v1197 = vpop.f32.mrb[0].mxu0
          %1198 = vmatprep.mubr.bf16.mxu0 0
          %1199 = vmatmul.mubr.bf16.gmra.mrb[0].mxu0 %v1065
          %v1200 = vpop.f32.mrb[0].mxu0
          %v1201 = vadd.f32 %v1100, %v1200
          %v1202 = vpop.f32.mrb[0].mxu0
          %v1203 = vpop.f32.mrb[0].mxu0
          %v1204 = vadd.f32 %v1100, %v1203
          %v1205 = vpop.f32.mrb[0].mxu0
          %1206 = vmatprep.mubr.bf16.mxu0 0
          %1207 = vmatmul.mubr.bf16.gmra.mrb[0].mxu0 %v1066
          %v1208 = vpop.f32.mrb[0].mxu0
          %v1209 = vadd.f32 %v1100, %v1208
          %v1210 = vpop.f32.mrb[0].mxu0
          %v1211 = vpop.f32.mrb[0].mxu0
          %v1212 = vadd.f32 %v1100, %v1211
          %v1213 = vpop.f32.mrb[0].mxu0
          %1214 = vmatprep.mubr.bf16.mxu0 0
          %1215 = vmatmul.mubr.bf16.gmra.mrb[0].mxu0 %v1067
          %v1216 = vpop.f32.mrb[0].mxu0
          %v1217 = vadd.f32 %v1100, %v1216
          %v1218 = vpop.f32.mrb[0].mxu0
          %v1219 = vpop.f32.mrb[0].mxu0
          %v1220 = vadd.f32 %v1100, %v1219
          %v1221 = vpop.f32.mrb[0].mxu0
          %1222 = vmatprep.mubr.bf16.mxu0 0
          %1223 = vmatmul.mubr.bf16.gmra.mrb[0].mxu0 %v1068
          %v1224 = vpop.f32.mrb[0].mxu0
          %v1225 = vadd.f32 %v1100, %v1224
          %v1226 = vpop.f32.mrb[0].mxu0
          %v1227 = vpop.f32.mrb[0].mxu0
          %v1228 = vadd.f32 %v1100, %v1227
          %v1229 = vpop.f32.mrb[0].mxu0
          %1230 = vmatprep.mubr.bf16.mxu0 0
          %1231 = vmatmul.mubr.bf16.gmra.mrb[0].mxu0 %v1069
          %v1232 = vpop.f32.mrb[0].mxu0
          %v1233 = vadd.f32 %v1100, %v1232
          %v1234 = vpop.f32.mrb[0].mxu0
          %v1235 = vpop.f32.mrb[0].mxu0
          %v1236 = vadd.f32 %v1100, %v1235
          %v1237 = vpop.f32.mrb[0].mxu0
          %1238 = vmatprep.mubr.bf16.mxu0 0
          %1239 = vmatmul.mubr.bf16.gmra.mrb[0].mxu0 %v1070
          %v1240 = vpop.f32.mrb[0].mxu0
          %v1241 = vadd.f32 %v1100, %v1240
          %v1242 = vpop.f32.mrb[0].mxu0
          %v1243 = vpop.f32.mrb[0].mxu0
          %v1244 = vadd.f32 %v1100, %v1243
          %v1245 = vpop.f32.mrb[0].mxu0
          %1246 = vmatprep.mubr.bf16.mxu0 0
          %1247 = vmatmul.mubr.bf16.gmra.mrb[0].mxu0 %v1071
          %v1248 = vpop.f32.mrb[0].mxu0
          %v1249 = vadd.f32 %v1100, %v1248
          %v1250 = vpop.f32.mrb[0].mxu0
          %v1251 = vpop.f32.mrb[0].mxu0
          %v1252 = vadd.f32 %v1100, %v1251
          %v1253 = vpop.f32.mrb[0].mxu0
          %1254 = vmatprep.mubr.bf16.mxu0 0
          %1255 = vmatmul.mubr.bf16.gmra.mrb[0].mxu0 %v1072
          %v1256 = vpop.f32.mrb[0].mxu0
          %v1257 = vadd.f32 %v1100, %v1256
          %v1258 = vpop.f32.mrb[0].mxu0
          %v1259 = vpop.f32.mrb[0].mxu0
          %v1260 = vadd.f32 %v1100, %v1259
          %v1261 = vpop.f32.mrb[0].mxu0
          %1262 = vmatprep.mubr.bf16.mxu0 0
          %1263 = vmatmul.mubr.bf16.gmra.mrb[0].mxu0 %v1073
          %v1264 = vpop.f32.mrb[0].mxu0
          %v1265 = vadd.f32 %v1100, %v1264
          %v1266 = vpop.f32.mrb[0].mxu0
          %v1267 = vpop.f32.mrb[0].mxu0
          %v1268 = vadd.f32 %v1100, %v1267
          %v1269 = vpop.f32.mrb[0].mxu0
          %1270 = vmatprep.mubr.bf16.mxu0 0
          %1271 = vmatmul.mubr.bf16.gmra.mrb[0].mxu0 %v1074
          %v1272 = vpop.f32.mrb[0].mxu0
          %v1273 = vadd.f32 %v1100, %v1272
          %v1274 = vpop.f32.mrb[0].mxu0
          %v1275 = vpop.f32.mrb[0].mxu0
          %v1276 = vadd.f32 %v1100, %v1275
          %v1277 = vpop.f32.mrb[0].mxu0
          %1278 = vmatprep.mubr.bf16.mxu0 0
          %1279 = vmatmul.mubr.bf16.gmra.mrb[0].mxu0 %v1075
          %v1280 = vpop.f32.mrb[0].mxu0
          %v1281 = vadd.f32 %v1100, %v1280
          %v1282 = vpop.f32.mrb[0].mxu0
          %v1283 = vpop.f32.mrb[0].mxu0
          %v1284 = vadd.f32 %v1100, %v1283
          %v1285 = vpop.f32.mrb[0].mxu0
          %1286 = vmatprep.mubr.bf16.mxu0 0
          %1287 = vmatmul.mubr.bf16.gmra.mrb[0].mxu0 %v1076
          %v1288 = vpop.f32.mrb[0].mxu0
          %v1289 = vadd.f32 %v1100, %v1288
          %v1290 = vpop.f32.mrb[0].mxu0
          %v1291 = vpop.f32.mrb[0].mxu0
          %v1292 = vadd.f32 %v1100, %v1291
          %v1293 = vpop.f32.mrb[0].mxu0
          %1294 = vmatprep.mubr.bf16.mxu0 0
          %1295 = vmatmul.mubr.bf16.gmra.mrb[0].mxu0 %v1077
          %v1296 = vpop.f32.mrb[0].mxu0
          %v1297 = vadd.f32 %v1100, %v1296
          %v1298 = vpop.f32.mrb[0].mxu0
          %v1299 = vpop.f32.mrb[0].mxu0
          %v1300 = vadd.f32 %v1100, %v1299
          %v1301 = vpop.f32.mrb[0].mxu0
          %1302 = vmatprep.mubr.bf16.mxu0 0
          %1303 = vmatmul.mubr.bf16.gmra.mrb[0].mxu0 %v1078
          %v1304 = vpop.f32.mrb[0].mxu0
          %v1305 = vadd.f32 %v1100, %v1304
          %v1306 = vpop.f32.mrb[0].mxu0
          %v1307 = vpop.f32.mrb[0].mxu0
          %v1308 = vadd.f32 %v1100, %v1307
          %v1309 = vpop.f32.mrb[0].mxu0
          %1310 = vdwg.mxu0
          %v1311 = vpack.c.bf16 %v1188, %v1185
          %v1312 = vpack.c.bf16 %v1196, %v1193
          %v1313 = vpack.c.bf16 %v1204, %v1201
          %v1314 = vpack.c.bf16 %v1212, %v1209
          %v1315 = vpack.c.bf16 %v1220, %v1217
          %v1316 = vpack.c.bf16 %v1228, %v1225
          %v1317 = vpack.c.bf16 %v1236, %v1233
          %v1318 = vpack.c.bf16 %v1244, %v1241
          %v1319 = vpack.c.bf16 %v1252, %v1249
          %v1320 = vpack.c.bf16 %v1260, %v1257
          %v1321 = vpack.c.bf16 %v1268, %v1265
          %v1322 = vpack.c.bf16 %v1276, %v1273
          %v1323 = vpack.c.bf16 %v1284, %v1281
          %v1324 = vpack.c.bf16 %v1292, %v1289
          %v1325 = vpack.c.bf16 %v1300, %v1297
          %v1326 = vpack.c.bf16 %v1308, %v1305
          %1327 = vst [vmem:[#allocation2] sm:$0xff] %v1311
          %1328 = vst [vmem:[#allocation2 + $0x8] sm:$0xff] %v1312
          %1329 = vst [vmem:[#allocation2 + $0x10] sm:$0xff] %v1313
          %1330 = vst [vmem:[#allocation2 + $0x18] sm:$0xff] %v1314
          %1331 = vst [vmem:[#allocation2 + $0x20] sm:$0xff] %v1315
          %1332 = vst [vmem:[#allocation2 + $0x28] sm:$0xff] %v1316
          %1333 = vst [vmem:[#allocation2 + $0x30] sm:$0xff] %v1317
          %1334 = vst [vmem:[#allocation2 + $0x38] sm:$0xff] %v1318
          %1335 = vst [vmem:[#allocation2 + $0x40] sm:$0xff] %v1319
          %1336 = vst [vmem:[#allocation2 + $0x48] sm:$0xff] %v1320
          %1337 = vst [vmem:[#allocation2 + $0x50] sm:$0xff] %v1321
          %1338 = vst [vmem:[#allocation2 + $0x58] sm:$0xff] %v1322
          %1339 = vst [vmem:[#allocation2 + $0x60] sm:$0xff] %v1323
          %1340 = vst [vmem:[#allocation2 + $0x68] sm:$0xff] %v1324
          %1341 = vst [vmem:[#allocation2 + $0x70] sm:$0xff] %v1325
          %1342 = vst [vmem:[#allocation2 + $0x78] sm:$0xff] %v1326
          %v1343 = vld [vmem:[%s7] sm:$0xf]
          %v1344 = vld [vmem:[%s7 + $0x4] sm:$0xf]
          %v1345 = vld [vmem:[%s7 + $0x8] sm:$0xf]
          %v1346 = vld [vmem:[%s7 + $0xc] sm:$0xf]
          %v1347 = vld [vmem:[%s7 + $0x10] sm:$0xf]
          %v1348 = vld [vmem:[%s7 + $0x14] sm:$0xf]
          %v1349 = vld [vmem:[%s7 + $0x18] sm:$0xf]
          %v1350 = vld [vmem:[%s7 + $0x1c] sm:$0xf]
          %v1351 = vld [vmem:[%s7 + $0x20] sm:$0xf]
          %v1352 = vld [vmem:[%s7 + $0x24] sm:$0xf]
          %v1353 = vld [vmem:[%s7 + $0x28] sm:$0xf]
          %v1354 = vld [vmem:[%s7 + $0x2c] sm:$0xf]
          %v1355 = vld [vmem:[%s7 + $0x30] sm:$0xf]
          %v1356 = vld [vmem:[%s7 + $0x34] sm:$0xf]
          %v1357 = vld [vmem:[%s7 + $0x38] sm:$0xf]
          %v1358 = vld [vmem:[%s7 + $0x3c] sm:$0xf]
          %v1359 = vld [vmem:[#allocation11] sm:$0x1]
          %v1361 = vlaneseq
          %v1362 = vshrl.u32 %v1361, 7
          %v1363 = vsub.s32 0, %v1362
          %v1364 = vrot.slane %v1359, %v1363
          %v1382 = vunpack.c.l.b16 %v1343
          %v1383 = vunpack.c.l.b16 %v1344
          %v1384 = vunpack.c.l.b16 %v1345
          %v1385 = vunpack.c.l.b16 %v1346
          %v1386 = vunpack.c.l.b16 %v1347
          %v1387 = vunpack.c.l.b16 %v1348
          %v1388 = vunpack.c.l.b16 %v1349
          %v1389 = vunpack.c.l.b16 %v1350
          %v1390 = vunpack.c.l.b16 %v1351
          %v1391 = vunpack.c.l.b16 %v1352
          %v1392 = vunpack.c.l.b16 %v1353
          %v1393 = vunpack.c.l.b16 %v1354
          %v1394 = vunpack.c.l.b16 %v1355
          %v1395 = vunpack.c.l.b16 %v1356
          %v1396 = vunpack.c.l.b16 %v1357
          %v1397 = vunpack.c.l.b16 %v1358
          %v1398 = vpack.c.b16 %v1383, %v1382
          %v1399 = vpack.c.b16 %v1385, %v1384
          %v1400 = vpack.c.b16 %v1387, %v1386
          %v1401 = vpack.c.b16 %v1389, %v1388
          %v1402 = vpack.c.b16 %v1391, %v1390
          %v1403 = vpack.c.b16 %v1393, %v1392
          %v1404 = vpack.c.b16 %v1395, %v1394
          %v1405 = vpack.c.b16 %v1397, %v1396
          %1414 = vmatprep.subr.bf16.mxu0 0
          %1415 = vmatpush1.bf16.msra.mxu0 %v1398
          %1416 = vmatprep.subr.bf16.mxu0 0
          %1417 = vmatpush1.bf16.msra.mxu0 %v1399
          %1418 = vmatprep.subr.bf16.mxu0 0
          %1419 = vmatpush1.bf16.msra.mxu0 %v1400
          %1420 = vmatprep.subr.bf16.mxu0 0
          %1421 = vmatpush1.bf16.msra.mxu0 %v1401
          %1422 = vmatprep.subr.bf16.mxu0 0
          %1423 = vmatpush1.bf16.msra.mxu0 %v1402
          %1424 = vmatprep.subr.bf16.mxu0 0
          %1425 = vmatpush1.bf16.msra.mxu0 %v1403
          %1426 = vmatprep.subr.bf16.mxu0 0
          %1427 = vmatpush1.bf16.msra.mxu0 %v1404
          %1428 = vmatprep.subr.bf16.mxu0 0
          %1429 = vmatpush1.bf16.msra.mxu0 %v1405
          %1430 = vmatprep.subr.bf16.mxu0 0
          %1431 = vmatpush1.bf16.msra.mxu0 0
          %1432 = vmatprep.subr.bf16.mxu0 0
          %1433 = vmatpush1.bf16.msra.mxu0 0
          %1434 = vmatprep.subr.bf16.mxu0 0
          %1435 = vmatpush1.bf16.msra.mxu0 0
          %1436 = vmatprep.subr.bf16.mxu0 0
          %1437 = vmatpush1.bf16.msra.mxu0 0
          %1438 = vmatprep.subr.bf16.mxu0 0
          %1439 = vmatpush1.bf16.msra.mxu0 0
          %1440 = vmatprep.subr.bf16.mxu0 0
          %1441 = vmatpush1.bf16.msra.mxu0 0
          %1442 = vmatprep.subr.bf16.mxu0 0
          %1443 = vmatpush1.bf16.msra.mxu0 0
          %1444 = vmatprep.subr.bf16.mxu0 0
          %1445 = vmatpush1.bf16.msra.mxu0 0
          %1446 = vmatprep.mubr.bf16.mxu0 0
          %1447 = vmatmul.mubr.bf16.gmra.mrb[0].mxu0 %v1063
          %v1448 = vpop.f32.mrb[0].mxu0
          %v1449 = vadd.f32 %v1364, %v1448
          %v1450 = vpop.f32.mrb[0].mxu0
          %v1451 = vpop.f32.mrb[0].mxu0
          %v1452 = vadd.f32 %v1364, %v1451
          %v1453 = vpop.f32.mrb[0].mxu0
          %1454 = vmatprep.mubr.bf16.mxu0 0
          %1455 = vmatmul.mubr.bf16.gmra.mrb[0].mxu0 %v1064
          %v1456 = vpop.f32.mrb[0].mxu0
          %v1457 = vadd.f32 %v1364, %v1456
          %v1458 = vpop.f32.mrb[0].mxu0
          %v1459 = vpop.f32.mrb[0].mxu0
          %v1460 = vadd.f32 %v1364, %v1459
          %v1461 = vpop.f32.mrb[0].mxu0
          %1462 = vmatprep.mubr.bf16.mxu0 0
          %1463 = vmatmul.mubr.bf16.gmra.mrb[0].mxu0 %v1065
          %v1464 = vpop.f32.mrb[0].mxu0
          %v1465 = vadd.f32 %v1364, %v1464
          %v1466 = vpop.f32.mrb[0].mxu0
          %v1467 = vpop.f32.mrb[0].mxu0
          %v1468 = vadd.f32 %v1364, %v1467
          %v1469 = vpop.f32.mrb[0].mxu0
          %1470 = vmatprep.mubr.bf16.mxu0 0
          %1471 = vmatmul.mubr.bf16.gmra.mrb[0].mxu0 %v1066
          %v1472 = vpop.f32.mrb[0].mxu0
          %v1473 = vadd.f32 %v1364, %v1472
          %v1474 = vpop.f32.mrb[0].mxu0
          %v1475 = vpop.f32.mrb[0].mxu0
          %v1476 = vadd.f32 %v1364, %v1475
          %v1477 = vpop.f32.mrb[0].mxu0
          %1478 = vmatprep.mubr.bf16.mxu0 0
          %1479 = vmatmul.mubr.bf16.gmra.mrb[0].mxu0 %v1067
          %v1480 = vpop.f32.mrb[0].mxu0
          %v1481 = vadd.f32 %v1364, %v1480
          %v1482 = vpop.f32.mrb[0].mxu0
          %v1483 = vpop.f32.mrb[0].mxu0
          %v1484 = vadd.f32 %v1364, %v1483
          %v1485 = vpop.f32.mrb[0].mxu0
          %1486 = vmatprep.mubr.bf16.mxu0 0
          %1487 = vmatmul.mubr.bf16.gmra.mrb[0].mxu0 %v1068
          %v1488 = vpop.f32.mrb[0].mxu0
          %v1489 = vadd.f32 %v1364, %v1488
          %v1490 = vpop.f32.mrb[0].mxu0
          %v1491 = vpop.f32.mrb[0].mxu0
          %v1492 = vadd.f32 %v1364, %v1491
          %v1493 = vpop.f32.mrb[0].mxu0
          %1494 = vmatprep.mubr.bf16.mxu0 0
          %1495 = vmatmul.mubr.bf16.gmra.mrb[0].mxu0 %v1069
          %v1496 = vpop.f32.mrb[0].mxu0
          %v1497 = vadd.f32 %v1364, %v1496
          %v1498 = vpop.f32.mrb[0].mxu0
          %v1499 = vpop.f32.mrb[0].mxu0
          %v1500 = vadd.f32 %v1364, %v1499
          %v1501 = vpop.f32.mrb[0].mxu0
          %1502 = vmatprep.mubr.bf16.mxu0 0
          %1503 = vmatmul.mubr.bf16.gmra.mrb[0].mxu0 %v1070
          %v1504 = vpop.f32.mrb[0].mxu0
          %v1505 = vadd.f32 %v1364, %v1504
          %v1506 = vpop.f32.mrb[0].mxu0
          %v1507 = vpop.f32.mrb[0].mxu0
          %v1508 = vadd.f32 %v1364, %v1507
          %v1509 = vpop.f32.mrb[0].mxu0
          %1510 = vmatprep.mubr.bf16.mxu0 0
          %1511 = vmatmul.mubr.bf16.gmra.mrb[0].mxu0 %v1071
          %v1512 = vpop.f32.mrb[0].mxu0
          %v1513 = vadd.f32 %v1364, %v1512
          %v1514 = vpop.f32.mrb[0].mxu0
          %v1515 = vpop.f32.mrb[0].mxu0
          %v1516 = vadd.f32 %v1364, %v1515
          %v1517 = vpop.f32.mrb[0].mxu0
          %1518 = vmatprep.mubr.bf16.mxu0 0
          %1519 = vmatmul.mubr.bf16.gmra.mrb[0].mxu0 %v1072
          %v1520 = vpop.f32.mrb[0].mxu0
          %v1521 = vadd.f32 %v1364, %v1520
          %v1522 = vpop.f32.mrb[0].mxu0
          %v1523 = vpop.f32.mrb[0].mxu0
          %v1524 = vadd.f32 %v1364, %v1523
          %v1525 = vpop.f32.mrb[0].mxu0
          %1526 = vmatprep.mubr.bf16.mxu0 0
          %1527 = vmatmul.mubr.bf16.gmra.mrb[0].mxu0 %v1073
          %v1528 = vpop.f32.mrb[0].mxu0
          %v1529 = vadd.f32 %v1364, %v1528
          %v1530 = vpop.f32.mrb[0].mxu0
          %v1531 = vpop.f32.mrb[0].mxu0
          %v1532 = vadd.f32 %v1364, %v1531
          %v1533 = vpop.f32.mrb[0].mxu0
          %1534 = vmatprep.mubr.bf16.mxu0 0
          %1535 = vmatmul.mubr.bf16.gmra.mrb[0].mxu0 %v1074
          %v1536 = vpop.f32.mrb[0].mxu0
          %v1537 = vadd.f32 %v1364, %v1536
          %v1538 = vpop.f32.mrb[0].mxu0
          %v1539 = vpop.f32.mrb[0].mxu0
          %v1540 = vadd.f32 %v1364, %v1539
          %v1541 = vpop.f32.mrb[0].mxu0
          %1542 = vmatprep.mubr.bf16.mxu0 0
          %1543 = vmatmul.mubr.bf16.gmra.mrb[0].mxu0 %v1075
          %v1544 = vpop.f32.mrb[0].mxu0
          %v1545 = vadd.f32 %v1364, %v1544
          %v1546 = vpop.f32.mrb[0].mxu0
          %v1547 = vpop.f32.mrb[0].mxu0
          %v1548 = vadd.f32 %v1364, %v1547
          %v1549 = vpop.f32.mrb[0].mxu0
          %1550 = vmatprep.mubr.bf16.mxu0 0
          %1551 = vmatmul.mubr.bf16.gmra.mrb[0].mxu0 %v1076
          %v1552 = vpop.f32.mrb[0].mxu0
          %v1553 = vadd.f32 %v1364, %v1552
          %v1554 = vpop.f32.mrb[0].mxu0
          %v1555 = vpop.f32.mrb[0].mxu0
          %v1556 = vadd.f32 %v1364, %v1555
          %v1557 = vpop.f32.mrb[0].mxu0
          %1558 = vmatprep.mubr.bf16.mxu0 0
          %1559 = vmatmul.mubr.bf16.gmra.mrb[0].mxu0 %v1077
          %v1560 = vpop.f32.mrb[0].mxu0
          %v1561 = vadd.f32 %v1364, %v1560
          %v1562 = vpop.f32.mrb[0].mxu0
          %v1563 = vpop.f32.mrb[0].mxu0
          %v1564 = vadd.f32 %v1364, %v1563
          %v1565 = vpop.f32.mrb[0].mxu0
          %1566 = vmatprep.mubr.bf16.mxu0 0
          %1567 = vmatmul.mubr.bf16.gmra.mrb[0].mxu0 %v1078
          %v1568 = vpop.f32.mrb[0].mxu0
          %v1569 = vadd.f32 %v1364, %v1568
          %v1570 = vpop.f32.mrb[0].mxu0
          %v1571 = vpop.f32.mrb[0].mxu0
          %v1572 = vadd.f32 %v1364, %v1571
          %v1573 = vpop.f32.mrb[0].mxu0
          %1574 = vdwg.mxu0
          %1575 = vxpose.xlu0.b32.start [1/16] %v1449, 128
          %1576 = vxpose.xlu0.b32.cont [2/16] %v1452, 128
          %1577 = vxpose.xlu0.b32.cont [3/16] %v1457, 128
          %1578 = vxpose.xlu0.b32.cont [4/16] %v1460, 128
          %1579 = vxpose.xlu0.b32.cont [5/16] %v1465, 128
          %1580 = vxpose.xlu0.b32.cont [6/16] %v1468, 128
          %1581 = vxpose.xlu0.b32.cont [7/16] %v1473, 128
          %1582 = vxpose.xlu0.b32.cont [8/16] %v1476, 128
          %1583 = vxpose.xlu0.b32.cont [9/16] %v1481, 128
          %1584 = vxpose.xlu0.b32.cont [10/16] %v1484, 128
          %1585 = vxpose.xlu0.b32.cont [11/16] %v1489, 128
          %1586 = vxpose.xlu0.b32.cont [12/16] %v1492, 128
          %1587 = vxpose.xlu0.b32.cont [13/16] %v1497, 128
          %1588 = vxpose.xlu0.b32.cont [14/16] %v1500, 128
          %1589 = vxpose.xlu0.b32.cont [15/16] %v1505, 128
          %1590 = vxpose.xlu0.b32.end [16/16] %v1508, 128
          %v1591 = vpop.trf.xlu0
          %v1592 = vpop.trf.xlu0
          %v1593 = vpop.trf.xlu0
          %v1594 = vpop.trf.xlu0
          %v1595 = vpop.trf.xlu0
          %v1596 = vpop.trf.xlu0
          %v1597 = vpop.trf.xlu0
          %v1598 = vpop.trf.xlu0
          %v1599 = vpop.trf.xlu0
          %v1600 = vpop.trf.xlu0
          %v1601 = vpop.trf.xlu0
          %v1602 = vpop.trf.xlu0
          %v1603 = vpop.trf.xlu0
          %v1604 = vpop.trf.xlu0
          %v1605 = vpop.trf.xlu0
          %v1606 = vpop.trf.xlu0
          %1607 = vxpose.xlu0.b32.start [1/16] %v1513, 128
          %1608 = vxpose.xlu0.b32.cont [2/16] %v1516, 128
          %1609 = vxpose.xlu0.b32.cont [3/16] %v1521, 128
          %1610 = vxpose.xlu0.b32.cont [4/16] %v1524, 128
          %1611 = vxpose.xlu0.b32.cont [5/16] %v1529, 128
          %1612 = vxpose.xlu0.b32.cont [6/16] %v1532, 128
          %1613 = vxpose.xlu0.b32.cont [7/16] %v1537, 128
          %1614 = vxpose.xlu0.b32.cont [8/16] %v1540, 128
          %1615 = vxpose.xlu0.b32.cont [9/16] %v1545, 128
          %1616 = vxpose.xlu0.b32.cont [10/16] %v1548, 128
          %1617 = vxpose.xlu0.b32.cont [11/16] %v1553, 128
          %1618 = vxpose.xlu0.b32.cont [12/16] %v1556, 128
          %1619 = vxpose.xlu0.b32.cont [13/16] %v1561, 128
          %1620 = vxpose.xlu0.b32.cont [14/16] %v1564, 128
          %1621 = vxpose.xlu0.b32.cont [15/16] %v1569, 128
          %1622 = vxpose.xlu0.b32.end [16/16] %v1572, 128
          %v1623 = vpop.trf.xlu0
          %v1624 = vpop.trf.xlu0
          %v1625 = vpop.trf.xlu0
          %v1626 = vpop.trf.xlu0
          %v1627 = vpop.trf.xlu0
          %v1628 = vpop.trf.xlu0
          %v1629 = vpop.trf.xlu0
          %v1630 = vpop.trf.xlu0
          %v1631 = vpop.trf.xlu0
          %v1632 = vpop.trf.xlu0
          %v1633 = vpop.trf.xlu0
          %v1634 = vpop.trf.xlu0
          %v1635 = vpop.trf.xlu0
          %v1636 = vpop.trf.xlu0
          %v1637 = vpop.trf.xlu0
          %v1638 = vpop.trf.xlu0
          %v1639 = vpack.c.bf16 %v1592, %v1591
          %v1640 = vpack.c.bf16 %v1624, %v1623
          %v1641 = vpack.c.bf16 %v1594, %v1593
          %v1642 = vpack.c.bf16 %v1626, %v1625
          %v1643 = vpack.c.bf16 %v1596, %v1595
          %v1644 = vpack.c.bf16 %v1628, %v1627
          %v1645 = vpack.c.bf16 %v1598, %v1597
          %v1646 = vpack.c.bf16 %v1630, %v1629
          %v1647 = vpack.c.bf16 %v1600, %v1599
          %v1648 = vpack.c.bf16 %v1632, %v1631
          %v1649 = vpack.c.bf16 %v1602, %v1601
          %v1650 = vpack.c.bf16 %v1634, %v1633
          %v1651 = vpack.c.bf16 %v1604, %v1603
          %v1652 = vpack.c.bf16 %v1636, %v1635
          %v1653 = vpack.c.bf16 %v1606, %v1605
          %v1654 = vpack.c.bf16 %v1638, %v1637
          %1655 = vst [vmem:[#allocation3] sm:$0xff] %v1639
          %1656 = vst [vmem:[#allocation3 + $0x8] sm:$0xff] %v1640
          %1657 = vst [vmem:[#allocation3 + $0x10] sm:$0xff] %v1641
          %1658 = vst [vmem:[#allocation3 + $0x18] sm:$0xff] %v1642
          %1659 = vst [vmem:[#allocation3 + $0x20] sm:$0xff] %v1643
          %1660 = vst [vmem:[#allocation3 + $0x28] sm:$0xff] %v1644
          %1661 = vst [vmem:[#allocation3 + $0x30] sm:$0xff] %v1645
          %1662 = vst [vmem:[#allocation3 + $0x38] sm:$0xff] %v1646
          %1663 = vst [vmem:[#allocation3 + $0x40] sm:$0xff] %v1647
          %1664 = vst [vmem:[#allocation3 + $0x48] sm:$0xff] %v1648
          %1665 = vst [vmem:[#allocation3 + $0x50] sm:$0xff] %v1649
          %1666 = vst [vmem:[#allocation3 + $0x58] sm:$0xff] %v1650
          %1667 = vst [vmem:[#allocation3 + $0x60] sm:$0xff] %v1651
          %1668 = vst [vmem:[#allocation3 + $0x68] sm:$0xff] %v1652
          %1669 = vst [vmem:[#allocation3 + $0x70] sm:$0xff] %v1653
          %1670 = vst [vmem:[#allocation3 + $0x78] sm:$0xff] %v1654
          %v1671 = vld [vmem:[%s9] sm:$0xf]
          %v1672 = vld [vmem:[%s9 + $0x4] sm:$0xf]
          %v1673 = vld [vmem:[%s9 + $0x8] sm:$0xf]
          %v1674 = vld [vmem:[%s9 + $0xc] sm:$0xf]
          %v1675 = vld [vmem:[%s9 + $0x10] sm:$0xf]
          %v1676 = vld [vmem:[%s9 + $0x14] sm:$0xf]
          %v1677 = vld [vmem:[%s9 + $0x18] sm:$0xf]
          %v1678 = vld [vmem:[%s9 + $0x1c] sm:$0xf]
          %v1679 = vld [vmem:[%s9 + $0x20] sm:$0xf]
          %v1680 = vld [vmem:[%s9 + $0x24] sm:$0xf]
          %v1681 = vld [vmem:[%s9 + $0x28] sm:$0xf]
          %v1682 = vld [vmem:[%s9 + $0x2c] sm:$0xf]
          %v1683 = vld [vmem:[%s9 + $0x30] sm:$0xf]
          %v1684 = vld [vmem:[%s9 + $0x34] sm:$0xf]
          %v1685 = vld [vmem:[%s9 + $0x38] sm:$0xf]
          %v1686 = vld [vmem:[%s9 + $0x3c] sm:$0xf]
          %v1687 = vld [vmem:[%s10] sm:$0x1]
          %v1689 = vlaneseq
          %v1690 = vshrl.u32 %v1689, 7
          %v1691 = vsub.s32 0, %v1690
          %v1692 = vrot.slane %v1687, %v1691
          %v1710 = vunpack.c.l.b16 %v1671
          %v1711 = vunpack.c.l.b16 %v1672
          %v1712 = vunpack.c.l.b16 %v1673
          %v1713 = vunpack.c.l.b16 %v1674
          %v1714 = vunpack.c.l.b16 %v1675
          %v1715 = vunpack.c.l.b16 %v1676
          %v1716 = vunpack.c.l.b16 %v1677
          %v1717 = vunpack.c.l.b16 %v1678
          %v1718 = vunpack.c.l.b16 %v1679
          %v1719 = vunpack.c.l.b16 %v1680
          %v1720 = vunpack.c.l.b16 %v1681
          %v1721 = vunpack.c.l.b16 %v1682
          %v1722 = vunpack.c.l.b16 %v1683
          %v1723 = vunpack.c.l.b16 %v1684
          %v1724 = vunpack.c.l.b16 %v1685
          %v1725 = vunpack.c.l.b16 %v1686
          %v1726 = vpack.c.b16 %v1711, %v1710
          %v1727 = vpack.c.b16 %v1713, %v1712
          %v1728 = vpack.c.b16 %v1715, %v1714
          %v1729 = vpack.c.b16 %v1717, %v1716
          %v1730 = vpack.c.b16 %v1719, %v1718
          %v1731 = vpack.c.b16 %v1721, %v1720
          %v1732 = vpack.c.b16 %v1723, %v1722
          %v1733 = vpack.c.b16 %v1725, %v1724
          %1742 = vmatprep.subr.bf16.mxu0 0
          %1743 = vmatpush1.bf16.msra.mxu0 %v1726
          %1744 = vmatprep.subr.bf16.mxu0 0
          %1745 = vmatpush1.bf16.msra.mxu0 %v1727
          %1746 = vmatprep.subr.bf16.mxu0 0
          %1747 = vmatpush1.bf16.msra.mxu0 %v1728
          %1748 = vmatprep.subr.bf16.mxu0 0
          %1749 = vmatpush1.bf16.msra.mxu0 %v1729
          %1750 = vmatprep.subr.bf16.mxu0 0
          %1751 = vmatpush1.bf16.msra.mxu0 %v1730
          %1752 = vmatprep.subr.bf16.mxu0 0
          %1753 = vmatpush1.bf16.msra.mxu0 %v1731
          %1754 = vmatprep.subr.bf16.mxu0 0
          %1755 = vmatpush1.bf16.msra.mxu0 %v1732
          %1756 = vmatprep.subr.bf16.mxu0 0
          %1757 = vmatpush1.bf16.msra.mxu0 %v1733
          %1758 = vmatprep.subr.bf16.mxu0 0
          %1759 = vmatpush1.bf16.msra.mxu0 0
          %1760 = vmatprep.subr.bf16.mxu0 0
          %1761 = vmatpush1.bf16.msra.mxu0 0
          %1762 = vmatprep.subr.bf16.mxu0 0
          %1763 = vmatpush1.bf16.msra.mxu0 0
          %1764 = vmatprep.subr.bf16.mxu0 0
          %1765 = vmatpush1.bf16.msra.mxu0 0
          %1766 = vmatprep.subr.bf16.mxu0 0
          %1767 = vmatpush1.bf16.msra.mxu0 0
          %1768 = vmatprep.subr.bf16.mxu0 0
          %1769 = vmatpush1.bf16.msra.mxu0 0
          %1770 = vmatprep.subr.bf16.mxu0 0
          %1771 = vmatpush1.bf16.msra.mxu0 0
          %1772 = vmatprep.subr.bf16.mxu0 0
          %1773 = vmatpush1.bf16.msra.mxu0 0
          %1774 = vmatprep.mubr.bf16.mxu0 0
          %1775 = vmatmul.mubr.bf16.gmra.mrb[0].mxu0 %v1063
          %v1776 = vpop.f32.mrb[0].mxu0
          %v1777 = vadd.f32 %v1692, %v1776
          %v1778 = vpop.f32.mrb[0].mxu0
          %v1779 = vpop.f32.mrb[0].mxu0
          %v1780 = vadd.f32 %v1692, %v1779
          %v1781 = vpop.f32.mrb[0].mxu0
          %1782 = vmatprep.mubr.bf16.mxu0 0
          %1783 = vmatmul.mubr.bf16.gmra.mrb[0].mxu0 %v1064
          %v1784 = vpop.f32.mrb[0].mxu0
          %v1785 = vadd.f32 %v1692, %v1784
          %v1786 = vpop.f32.mrb[0].mxu0
          %v1787 = vpop.f32.mrb[0].mxu0
          %v1788 = vadd.f32 %v1692, %v1787
          %v1789 = vpop.f32.mrb[0].mxu0
          %1790 = vmatprep.mubr.bf16.mxu0 0
          %1791 = vmatmul.mubr.bf16.gmra.mrb[0].mxu0 %v1065
          %v1792 = vpop.f32.mrb[0].mxu0
          %v1793 = vadd.f32 %v1692, %v1792
          %v1794 = vpop.f32.mrb[0].mxu0
          %v1795 = vpop.f32.mrb[0].mxu0
          %v1796 = vadd.f32 %v1692, %v1795
          %v1797 = vpop.f32.mrb[0].mxu0
          %1798 = vmatprep.mubr.bf16.mxu0 0
          %1799 = vmatmul.mubr.bf16.gmra.mrb[0].mxu0 %v1066
          %v1800 = vpop.f32.mrb[0].mxu0
          %v1801 = vadd.f32 %v1692, %v1800
          %v1802 = vpop.f32.mrb[0].mxu0
          %v1803 = vpop.f32.mrb[0].mxu0
          %v1804 = vadd.f32 %v1692, %v1803
          %v1805 = vpop.f32.mrb[0].mxu0
          %1806 = vmatprep.mubr.bf16.mxu0 0
          %1807 = vmatmul.mubr.bf16.gmra.mrb[0].mxu0 %v1067
          %v1808 = vpop.f32.mrb[0].mxu0
          %v1809 = vadd.f32 %v1692, %v1808
          %v1810 = vpop.f32.mrb[0].mxu0
          %v1811 = vpop.f32.mrb[0].mxu0
          %v1812 = vadd.f32 %v1692, %v1811
          %v1813 = vpop.f32.mrb[0].mxu0
          %1814 = vmatprep.mubr.bf16.mxu0 0
          %1815 = vmatmul.mubr.bf16.gmra.mrb[0].mxu0 %v1068
          %v1816 = vpop.f32.mrb[0].mxu0
          %v1817 = vadd.f32 %v1692, %v1816
          %v1818 = vpop.f32.mrb[0].mxu0
          %v1819 = vpop.f32.mrb[0].mxu0
          %v1820 = vadd.f32 %v1692, %v1819
          %v1821 = vpop.f32.mrb[0].mxu0
          %1822 = vmatprep.mubr.bf16.mxu0 0
          %1823 = vmatmul.mubr.bf16.gmra.mrb[0].mxu0 %v1069
          %v1824 = vpop.f32.mrb[0].mxu0
          %v1825 = vadd.f32 %v1692, %v1824
          %v1826 = vpop.f32.mrb[0].mxu0
          %v1827 = vpop.f32.mrb[0].mxu0
          %v1828 = vadd.f32 %v1692, %v1827
          %v1829 = vpop.f32.mrb[0].mxu0
          %1830 = vmatprep.mubr.bf16.mxu0 0
          %1831 = vmatmul.mubr.bf16.gmra.mrb[0].mxu0 %v1070
          %v1832 = vpop.f32.mrb[0].mxu0
          %v1833 = vadd.f32 %v1692, %v1832
          %v1834 = vpop.f32.mrb[0].mxu0
          %v1835 = vpop.f32.mrb[0].mxu0
          %v1836 = vadd.f32 %v1692, %v1835
          %v1837 = vpop.f32.mrb[0].mxu0
          %1838 = vmatprep.mubr.bf16.mxu0 0
          %1839 = vmatmul.mubr.bf16.gmra.mrb[0].mxu0 %v1071
          %v1840 = vpop.f32.mrb[0].mxu0
          %v1841 = vadd.f32 %v1692, %v1840
          %v1842 = vpop.f32.mrb[0].mxu0
          %v1843 = vpop.f32.mrb[0].mxu0
          %v1844 = vadd.f32 %v1692, %v1843
          %v1845 = vpop.f32.mrb[0].mxu0
          %1846 = vmatprep.mubr.bf16.mxu0 0
          %1847 = vmatmul.mubr.bf16.gmra.mrb[0].mxu0 %v1072
          %v1848 = vpop.f32.mrb[0].mxu0
          %v1849 = vadd.f32 %v1692, %v1848
          %v1850 = vpop.f32.mrb[0].mxu0
          %v1851 = vpop.f32.mrb[0].mxu0
          %v1852 = vadd.f32 %v1692, %v1851
          %v1853 = vpop.f32.mrb[0].mxu0
          %1854 = vmatprep.mubr.bf16.mxu0 0
          %1855 = vmatmul.mubr.bf16.gmra.mrb[0].mxu0 %v1073
          %v1856 = vpop.f32.mrb[0].mxu0
          %v1857 = vadd.f32 %v1692, %v1856
          %v1858 = vpop.f32.mrb[0].mxu0
          %v1859 = vpop.f32.mrb[0].mxu0
          %v1860 = vadd.f32 %v1692, %v1859
          %v1861 = vpop.f32.mrb[0].mxu0
          %1862 = vmatprep.mubr.bf16.mxu0 0
          %1863 = vmatmul.mubr.bf16.gmra.mrb[0].mxu0 %v1074
          %v1864 = vpop.f32.mrb[0].mxu0
          %v1865 = vadd.f32 %v1692, %v1864
          %v1866 = vpop.f32.mrb[0].mxu0
          %v1867 = vpop.f32.mrb[0].mxu0
          %v1868 = vadd.f32 %v1692, %v1867
          %v1869 = vpop.f32.mrb[0].mxu0
          %1870 = vmatprep.mubr.bf16.mxu0 0
          %1871 = vmatmul.mubr.bf16.gmra.mrb[0].mxu0 %v1075
          %v1872 = vpop.f32.mrb[0].mxu0
          %v1873 = vadd.f32 %v1692, %v1872
          %v1874 = vpop.f32.mrb[0].mxu0
          %v1875 = vpop.f32.mrb[0].mxu0
          %v1876 = vadd.f32 %v1692, %v1875
          %v1877 = vpop.f32.mrb[0].mxu0
          %1878 = vmatprep.mubr.bf16.mxu0 0
          %1879 = vmatmul.mubr.bf16.gmra.mrb[0].mxu0 %v1076
          %v1880 = vpop.f32.mrb[0].mxu0
          %v1881 = vadd.f32 %v1692, %v1880
          %v1882 = vpop.f32.mrb[0].mxu0
          %v1883 = vpop.f32.mrb[0].mxu0
          %v1884 = vadd.f32 %v1692, %v1883
          %v1885 = vpop.f32.mrb[0].mxu0
          %1886 = vmatprep.mubr.bf16.mxu0 0
          %1887 = vmatmul.mubr.bf16.gmra.mrb[0].mxu0 %v1077
          %v1888 = vpop.f32.mrb[0].mxu0
          %v1889 = vadd.f32 %v1692, %v1888
          %v1890 = vpop.f32.mrb[0].mxu0
          %v1891 = vpop.f32.mrb[0].mxu0
          %v1892 = vadd.f32 %v1692, %v1891
          %v1893 = vpop.f32.mrb[0].mxu0
          %1894 = vmatprep.mubr.bf16.mxu0 0
          %1895 = vmatmul.mubr.bf16.gmra.mrb[0].mxu0 %v1078
          %v1896 = vpop.f32.mrb[0].mxu0
          %v1897 = vadd.f32 %v1692, %v1896
          %v1898 = vpop.f32.mrb[0].mxu0
          %v1899 = vpop.f32.mrb[0].mxu0
          %v1900 = vadd.f32 %v1692, %v1899
          %v1901 = vpop.f32.mrb[0].mxu0
          %1902 = vdwg.mxu0
          %v1903 = vpack.c.bf16 %v1780, %v1777
          %v1904 = vpack.c.bf16 %v1788, %v1785
          %v1905 = vpack.c.bf16 %v1796, %v1793
          %v1906 = vpack.c.bf16 %v1804, %v1801
          %v1907 = vpack.c.bf16 %v1812, %v1809
          %v1908 = vpack.c.bf16 %v1820, %v1817
          %v1909 = vpack.c.bf16 %v1828, %v1825
          %v1910 = vpack.c.bf16 %v1836, %v1833
          %v1911 = vpack.c.bf16 %v1844, %v1841
          %v1912 = vpack.c.bf16 %v1852, %v1849
          %v1913 = vpack.c.bf16 %v1860, %v1857
          %v1914 = vpack.c.bf16 %v1868, %v1865
          %v1915 = vpack.c.bf16 %v1876, %v1873
          %v1916 = vpack.c.bf16 %v1884, %v1881
          %v1917 = vpack.c.bf16 %v1892, %v1889
          %v1918 = vpack.c.bf16 %v1900, %v1897
          %1919 = vst [vmem:[#allocation4] sm:$0xff] %v1903
          %1920 = vst [vmem:[#allocation4 + $0x8] sm:$0xff] %v1904
          %1921 = vst [vmem:[#allocation4 + $0x10] sm:$0xff] %v1905
          %1922 = vst [vmem:[#allocation4 + $0x18] sm:$0xff] %v1906
          %1923 = vst [vmem:[#allocation4 + $0x20] sm:$0xff] %v1907
          %1924 = vst [vmem:[#allocation4 + $0x28] sm:$0xff] %v1908
          %1925 = vst [vmem:[#allocation4 + $0x30] sm:$0xff] %v1909
          %1926 = vst [vmem:[#allocation4 + $0x38] sm:$0xff] %v1910
          %1927 = vst [vmem:[#allocation4 + $0x40] sm:$0xff] %v1911
          %1928 = vst [vmem:[#allocation4 + $0x48] sm:$0xff] %v1912
          %1929 = vst [vmem:[#allocation4 + $0x50] sm:$0xff] %v1913
          %1930 = vst [vmem:[#allocation4 + $0x58] sm:$0xff] %v1914
          %1931 = vst [vmem:[#allocation4 + $0x60] sm:$0xff] %v1915
          %1932 = vst [vmem:[#allocation4 + $0x68] sm:$0xff] %v1916
          %1933 = vst [vmem:[#allocation4 + $0x70] sm:$0xff] %v1917
          %1934 = vst [vmem:[#allocation4 + $0x78] sm:$0xff] %v1918
        $region96: #{tpu_custom_call.1} parent=71 // pred_fallthru
          _
        %s1935 = smul.u32 %s37, 256
        %s1936 = sshra.s32 %s1935, 4
        %s1937 = sand.u32 %s1935, 15
        %s1938 = smul.addr %s1936, 8
        %s1939 = scalar_lea.vmem [#allocation2], %s1938
        %v1940 = vld [vmem:[%s1939] sm:$0xff]
        %v1941 = vld [vmem:[%s1939 + $0x8] sm:$0xff]
        %v1942 = vld [vmem:[%s1939 + $0x10] sm:$0xff]
        %v1943 = vld [vmem:[%s1939 + $0x18] sm:$0xff]
        %v1944 = vld [vmem:[%s1939 + $0x20] sm:$0xff]
        %v1945 = vld [vmem:[%s1939 + $0x28] sm:$0xff]
        %v1946 = vld [vmem:[%s1939 + $0x30] sm:$0xff]
        %v1947 = vld [vmem:[%s1939 + $0x38] sm:$0xff]
        %v1948 = vld [vmem:[%s1939 + $0x40] sm:$0xff]
        %v1949 = vld [vmem:[%s1939 + $0x48] sm:$0xff]
        %v1950 = vld [vmem:[%s1939 + $0x50] sm:$0xff]
        %v1951 = vld [vmem:[%s1939 + $0x58] sm:$0xff]
        %v1952 = vld [vmem:[%s1939 + $0x60] sm:$0xff]
        %v1953 = vld [vmem:[%s1939 + $0x68] sm:$0xff]
        %v1954 = vld [vmem:[%s1939 + $0x70] sm:$0xff]
        %v1955 = vld [vmem:[%s1939 + $0x78] sm:$0xff]
        %v1956 = vld [vmem:[#allocation3] sm:$0xff]
        %v1957 = vld [vmem:[#allocation3 + $0x8] sm:$0xff]
        %v1958 = vld [vmem:[#allocation3 + $0x10] sm:$0xff]
        %v1959 = vld [vmem:[#allocation3 + $0x18] sm:$0xff]
        %v1960 = vld [vmem:[#allocation3 + $0x20] sm:$0xff]
        %v1961 = vld [vmem:[#allocation3 + $0x28] sm:$0xff]
        %v1962 = vld [vmem:[#allocation3 + $0x30] sm:$0xff]
        %v1963 = vld [vmem:[#allocation3 + $0x38] sm:$0xff]
        %v1964 = vld [vmem:[#allocation3 + $0x40] sm:$0xff]
        %v1965 = vld [vmem:[#allocation3 + $0x48] sm:$0xff]
        %v1966 = vld [vmem:[#allocation3 + $0x50] sm:$0xff]
        %v1967 = vld [vmem:[#allocation3 + $0x58] sm:$0xff]
        %v1968 = vld [vmem:[#allocation3 + $0x60] sm:$0xff]
        %v1969 = vld [vmem:[#allocation3 + $0x68] sm:$0xff]
        %v1970 = vld [vmem:[#allocation3 + $0x70] sm:$0xff]
        %v1971 = vld [vmem:[#allocation3 + $0x78] sm:$0xff]
        %1972 = vmatprep.subr.bf16.mxu0 %v1957
        %1973 = vmatpush1.bf16.msra.mxu0 %v1956
        %1974 = vmatprep.subr.bf16.mxu0 %v1959
        %1975 = vmatpush1.bf16.msra.mxu0 %v1958
        %1976 = vmatprep.subr.bf16.mxu0 %v1961
        %1977 = vmatpush1.bf16.msra.mxu0 %v1960
        %1978 = vmatprep.subr.bf16.mxu0 %v1963
        %1979 = vmatpush1.bf16.msra.mxu0 %v1962
        %1980 = vmatprep.subr.bf16.mxu0 %v1965
        %1981 = vmatpush1.bf16.msra.mxu0 %v1964
        %1982 = vmatprep.subr.bf16.mxu0 %v1967
        %1983 = vmatpush1.bf16.msra.mxu0 %v1966
        %1984 = vmatprep.subr.bf16.mxu0 %v1969
        %1985 = vmatpush1.bf16.msra.mxu0 %v1968
        %1986 = vmatprep.subr.bf16.mxu0 %v1971
        %1987 = vmatpush1.bf16.msra.mxu0 %v1970
        %1988 = vmatprep.subr.bf16.mxu0 0
        %1989 = vmatpush1.bf16.msra.mxu0 0
        %1990 = vmatprep.subr.bf16.mxu0 0
        %1991 = vmatpush1.bf16.msra.mxu0 0
        %1992 = vmatprep.subr.bf16.mxu0 0
        %1993 = vmatpush1.bf16.msra.mxu0 0
        %1994 = vmatprep.subr.bf16.mxu0 0
        %1995 = vmatpush1.bf16.msra.mxu0 0
        %1996 = vmatprep.subr.bf16.mxu0 0
        %1997 = vmatpush1.bf16.msra.mxu0 0
        %1998 = vmatprep.subr.bf16.mxu0 0
        %1999 = vmatpush1.bf16.msra.mxu0 0
        %2000 = vmatprep.subr.bf16.mxu0 0
        %2001 = vmatpush1.bf16.msra.mxu0 0
        %2002 = vmatprep.subr.bf16.mxu0 0
        %2003 = vmatpush1.bf16.msra.mxu0 0
        %2004 = vmatprep.mubr.bf16.mxu0 0
        %2005 = vmatmul.mubr.bf16.gmra.mrb[0].mxu0 %v1940
        %v2006 = vpop.f32.mrb[0].mxu0
        %v2007 = vadd.f32 0.0, %v2006
        %v2008 = vpop.f32.mrb[0].mxu0
        %v2009 = vadd.f32 0.0, %v2008
        %v2010 = vpop.f32.mrb[0].mxu0
        %v2011 = vadd.f32 0.0, %v2010
        %v2012 = vpop.f32.mrb[0].mxu0
        %v2013 = vadd.f32 0.0, %v2012
        %2014 = vmatprep.mubr.bf16.mxu0 0
        %2015 = vmatmul.mubr.bf16.gmra.mrb[0].mxu0 %v1941
        %v2016 = vpop.f32.mrb[0].mxu0
        %v2017 = vadd.f32 0.0, %v2016
        %v2018 = vpop.f32.mrb[0].mxu0
        %v2019 = vadd.f32 0.0, %v2018
        %v2020 = vpop.f32.mrb[0].mxu0
        %v2021 = vadd.f32 0.0, %v2020
        %v2022 = vpop.f32.mrb[0].mxu0
        %v2023 = vadd.f32 0.0, %v2022
        %2024 = vmatprep.mubr.bf16.mxu0 0
        %2025 = vmatmul.mubr.bf16.gmra.mrb[0].mxu0 %v1942
        %v2026 = vpop.f32.mrb[0].mxu0
        %v2027 = vadd.f32 0.0, %v2026
        %v2028 = vpop.f32.mrb[0].mxu0
        %v2029 = vadd.f32 0.0, %v2028
        %v2030 = vpop.f32.mrb[0].mxu0
        %v2031 = vadd.f32 0.0, %v2030
        %v2032 = vpop.f32.mrb[0].mxu0
        %v2033 = vadd.f32 0.0, %v2032
        %2034 = vmatprep.mubr.bf16.mxu0 0
        %2035 = vmatmul.mubr.bf16.gmra.mrb[0].mxu0 %v1943
        %v2036 = vpop.f32.mrb[0].mxu0
        %v2037 = vadd.f32 0.0, %v2036
        %v2038 = vpop.f32.mrb[0].mxu0
        %v2039 = vadd.f32 0.0, %v2038
        %v2040 = vpop.f32.mrb[0].mxu0
        %v2041 = vadd.f32 0.0, %v2040
        %v2042 = vpop.f32.mrb[0].mxu0
        %v2043 = vadd.f32 0.0, %v2042
        %2044 = vmatprep.mubr.bf16.mxu0 0
        %2045 = vmatmul.mubr.bf16.gmra.mrb[0].mxu0 %v1944
        %v2046 = vpop.f32.mrb[0].mxu0
        %v2047 = vadd.f32 0.0, %v2046
        %v2048 = vpop.f32.mrb[0].mxu0
        %v2049 = vadd.f32 0.0, %v2048
        %v2050 = vpop.f32.mrb[0].mxu0
        %v2051 = vadd.f32 0.0, %v2050
        %v2052 = vpop.f32.mrb[0].mxu0
        %v2053 = vadd.f32 0.0, %v2052
        %2054 = vmatprep.mubr.bf16.mxu0 0
        %2055 = vmatmul.mubr.bf16.gmra.mrb[0].mxu0 %v1945
        %v2056 = vpop.f32.mrb[0].mxu0
        %v2057 = vadd.f32 0.0, %v2056
        %v2058 = vpop.f32.mrb[0].mxu0
        %v2059 = vadd.f32 0.0, %v2058
        %v2060 = vpop.f32.mrb[0].mxu0
        %v2061 = vadd.f32 0.0, %v2060
        %v2062 = vpop.f32.mrb[0].mxu0
        %v2063 = vadd.f32 0.0, %v2062
        %2064 = vmatprep.mubr.bf16.mxu0 0
        %2065 = vmatmul.mubr.bf16.gmra.mrb[0].mxu0 %v1946
        %v2066 = vpop.f32.mrb[0].mxu0
        %v2067 = vadd.f32 0.0, %v2066
        %v2068 = vpop.f32.mrb[0].mxu0
        %v2069 = vadd.f32 0.0, %v2068
        %v2070 = vpop.f32.mrb[0].mxu0
        %v2071 = vadd.f32 0.0, %v2070
        %v2072 = vpop.f32.mrb[0].mxu0
        %v2073 = vadd.f32 0.0, %v2072
        %2074 = vmatprep.mubr.bf16.mxu0 0
        %2075 = vmatmul.mubr.bf16.gmra.mrb[0].mxu0 %v1947
        %v2076 = vpop.f32.mrb[0].mxu0
        %v2077 = vadd.f32 0.0, %v2076
        %v2078 = vpop.f32.mrb[0].mxu0
        %v2079 = vadd.f32 0.0, %v2078
        %v2080 = vpop.f32.mrb[0].mxu0
        %v2081 = vadd.f32 0.0, %v2080
        %v2082 = vpop.f32.mrb[0].mxu0
        %v2083 = vadd.f32 0.0, %v2082
        %2084 = vmatprep.mubr.bf16.mxu0 0
        %2085 = vmatmul.mubr.bf16.gmra.mrb[0].mxu0 %v1948
        %v2086 = vpop.f32.mrb[0].mxu0
        %v2087 = vadd.f32 0.0, %v2086
        %v2088 = vpop.f32.mrb[0].mxu0
        %v2089 = vadd.f32 0.0, %v2088
        %v2090 = vpop.f32.mrb[0].mxu0
        %v2091 = vadd.f32 0.0, %v2090
        %v2092 = vpop.f32.mrb[0].mxu0
        %v2093 = vadd.f32 0.0, %v2092
        %2094 = vmatprep.mubr.bf16.mxu0 0
        %2095 = vmatmul.mubr.bf16.gmra.mrb[0].mxu0 %v1949
        %v2096 = vpop.f32.mrb[0].mxu0
        %v2097 = vadd.f32 0.0, %v2096
        %v2098 = vpop.f32.mrb[0].mxu0
        %v2099 = vadd.f32 0.0, %v2098
        %v2100 = vpop.f32.mrb[0].mxu0
        %v2101 = vadd.f32 0.0, %v2100
        %v2102 = vpop.f32.mrb[0].mxu0
        %v2103 = vadd.f32 0.0, %v2102
        %2104 = vmatprep.mubr.bf16.mxu0 0
        %2105 = vmatmul.mubr.bf16.gmra.mrb[0].mxu0 %v1950
        %v2106 = vpop.f32.mrb[0].mxu0
        %v2107 = vadd.f32 0.0, %v2106
        %v2108 = vpop.f32.mrb[0].mxu0
        %v2109 = vadd.f32 0.0, %v2108
        %v2110 = vpop.f32.mrb[0].mxu0
        %v2111 = vadd.f32 0.0, %v2110
        %v2112 = vpop.f32.mrb[0].mxu0
        %v2113 = vadd.f32 0.0, %v2112
        %2114 = vmatprep.mubr.bf16.mxu0 0
        %2115 = vmatmul.mubr.bf16.gmra.mrb[0].mxu0 %v1951
        %v2116 = vpop.f32.mrb[0].mxu0
        %v2117 = vadd.f32 0.0, %v2116
        %v2118 = vpop.f32.mrb[0].mxu0
        %v2119 = vadd.f32 0.0, %v2118
        %v2120 = vpop.f32.mrb[0].mxu0
        %v2121 = vadd.f32 0.0, %v2120
        %v2122 = vpop.f32.mrb[0].mxu0
        %v2123 = vadd.f32 0.0, %v2122
        %2124 = vmatprep.mubr.bf16.mxu0 0
        %2125 = vmatmul.mubr.bf16.gmra.mrb[0].mxu0 %v1952
        %v2126 = vpop.f32.mrb[0].mxu0
        %v2127 = vadd.f32 0.0, %v2126
        %v2128 = vpop.f32.mrb[0].mxu0
        %v2129 = vadd.f32 0.0, %v2128
        %v2130 = vpop.f32.mrb[0].mxu0
        %v2131 = vadd.f32 0.0, %v2130
        %v2132 = vpop.f32.mrb[0].mxu0
        %v2133 = vadd.f32 0.0, %v2132
        %2134 = vmatprep.mubr.bf16.mxu0 0
        %2135 = vmatmul.mubr.bf16.gmra.mrb[0].mxu0 %v1953
        %v2136 = vpop.f32.mrb[0].mxu0
        %v2137 = vadd.f32 0.0, %v2136
        %v2138 = vpop.f32.mrb[0].mxu0
        %v2139 = vadd.f32 0.0, %v2138
        %v2140 = vpop.f32.mrb[0].mxu0
        %v2141 = vadd.f32 0.0, %v2140
        %v2142 = vpop.f32.mrb[0].mxu0
        %v2143 = vadd.f32 0.0, %v2142
        %2144 = vmatprep.mubr.bf16.mxu0 0
        %2145 = vmatmul.mubr.bf16.gmra.mrb[0].mxu0 %v1954
        %v2146 = vpop.f32.mrb[0].mxu0
        %v2147 = vadd.f32 0.0, %v2146
        %v2148 = vpop.f32.mrb[0].mxu0
        %v2149 = vadd.f32 0.0, %v2148
        %v2150 = vpop.f32.mrb[0].mxu0
        %v2151 = vadd.f32 0.0, %v2150
        %v2152 = vpop.f32.mrb[0].mxu0
        %v2153 = vadd.f32 0.0, %v2152
        %2154 = vmatprep.mubr.bf16.mxu0 0
        %2155 = vmatmul.mubr.bf16.gmra.mrb[0].mxu0 %v1955
        %v2156 = vpop.f32.mrb[0].mxu0
        %v2157 = vadd.f32 0.0, %v2156
        %v2158 = vpop.f32.mrb[0].mxu0
        %v2159 = vadd.f32 0.0, %v2158
        %v2160 = vpop.f32.mrb[0].mxu0
        %v2161 = vadd.f32 0.0, %v2160
        %v2162 = vpop.f32.mrb[0].mxu0
        %v2163 = vadd.f32 0.0, %v2162
        %2164 = vdwg.mxu0
        %v2165 = vmax.f32 %v2007, %v2009
        %2166 = vmax.xlane.f32.xlu0 %v2165
        %v2167 = vpop.xlane.xlu0 %2166
        %v2168 = vmax.f32 %v2011, %v2013
        %2169 = vmax.xlane.f32.xlu0 %v2168
        %v2170 = vpop.xlane.xlu0 %2169
        %v2171 = vmax.f32 %v2017, %v2019
        %2172 = vmax.xlane.f32.xlu0 %v2171
        %v2173 = vpop.xlane.xlu0 %2172
        %v2174 = vmax.f32 %v2021, %v2023
        %2175 = vmax.xlane.f32.xlu0 %v2174
        %v2176 = vpop.xlane.xlu0 %2175
        %v2177 = vmax.f32 %v2027, %v2029
        %2178 = vmax.xlane.f32.xlu0 %v2177
        %v2179 = vpop.xlane.xlu0 %2178
        %v2180 = vmax.f32 %v2031, %v2033
        %2181 = vmax.xlane.f32.xlu0 %v2180
        %v2182 = vpop.xlane.xlu0 %2181
        %v2183 = vmax.f32 %v2037, %v2039
        %2184 = vmax.xlane.f32.xlu0 %v2183
        %v2185 = vpop.xlane.xlu0 %2184
        %v2186 = vmax.f32 %v2041, %v2043
        %2187 = vmax.xlane.f32.xlu0 %v2186
        %v2188 = vpop.xlane.xlu0 %2187
        %v2189 = vmax.f32 %v2047, %v2049
        %2190 = vmax.xlane.f32.xlu0 %v2189
        %v2191 = vpop.xlane.xlu0 %2190
        %v2192 = vmax.f32 %v2051, %v2053
        %2193 = vmax.xlane.f32.xlu0 %v2192
        %v2194 = vpop.xlane.xlu0 %2193
        %v2195 = vmax.f32 %v2057, %v2059
        %2196 = vmax.xlane.f32.xlu0 %v2195
        %v2197 = vpop.xlane.xlu0 %2196
        %v2198 = vmax.f32 %v2061, %v2063
        %2199 = vmax.xlane.f32.xlu0 %v2198
        %v2200 = vpop.xlane.xlu0 %2199
        %v2201 = vmax.f32 %v2067, %v2069
        %2202 = vmax.xlane.f32.xlu0 %v2201
        %v2203 = vpop.xlane.xlu0 %2202
        %v2204 = vmax.f32 %v2071, %v2073
        %2205 = vmax.xlane.f32.xlu0 %v2204
        %v2206 = vpop.xlane.xlu0 %2205
        %v2207 = vmax.f32 %v2077, %v2079
        %2208 = vmax.xlane.f32.xlu0 %v2207
        %v2209 = vpop.xlane.xlu0 %2208
        %v2210 = vmax.f32 %v2081, %v2083
        %2211 = vmax.xlane.f32.xlu0 %v2210
        %v2212 = vpop.xlane.xlu0 %2211
        %v2213 = vmax.f32 %v2087, %v2089
        %2214 = vmax.xlane.f32.xlu0 %v2213
        %v2215 = vpop.xlane.xlu0 %2214
        %v2216 = vmax.f32 %v2091, %v2093
        %2217 = vmax.xlane.f32.xlu0 %v2216
        %v2218 = vpop.xlane.xlu0 %2217
        %v2219 = vmax.f32 %v2097, %v2099
        %2220 = vmax.xlane.f32.xlu0 %v2219
        %v2221 = vpop.xlane.xlu0 %2220
        %v2222 = vmax.f32 %v2101, %v2103
        %2223 = vmax.xlane.f32.xlu0 %v2222
        %v2224 = vpop.xlane.xlu0 %2223
        %v2225 = vmax.f32 %v2107, %v2109
        %2226 = vmax.xlane.f32.xlu0 %v2225
        %v2227 = vpop.xlane.xlu0 %2226
        %v2228 = vmax.f32 %v2111, %v2113
        %2229 = vmax.xlane.f32.xlu0 %v2228
        %v2230 = vpop.xlane.xlu0 %2229
        %v2231 = vmax.f32 %v2117, %v2119
        %2232 = vmax.xlane.f32.xlu0 %v2231
        %v2233 = vpop.xlane.xlu0 %2232
        %v2234 = vmax.f32 %v2121, %v2123
        %2235 = vmax.xlane.f32.xlu0 %v2234
        %v2236 = vpop.xlane.xlu0 %2235
        %v2237 = vmax.f32 %v2127, %v2129
        %2238 = vmax.xlane.f32.xlu0 %v2237
        %v2239 = vpop.xlane.xlu0 %2238
        %v2240 = vmax.f32 %v2131, %v2133
        %2241 = vmax.xlane.f32.xlu0 %v2240
        %v2242 = vpop.xlane.xlu0 %2241
        %v2243 = vmax.f32 %v2137, %v2139
        %2244 = vmax.xlane.f32.xlu0 %v2243
        %v2245 = vpop.xlane.xlu0 %2244
        %v2246 = vmax.f32 %v2141, %v2143
        %2247 = vmax.xlane.f32.xlu0 %v2246
        %v2248 = vpop.xlane.xlu0 %2247
        %v2249 = vmax.f32 %v2147, %v2149
        %2250 = vmax.xlane.f32.xlu0 %v2249
        %v2251 = vpop.xlane.xlu0 %2250
        %v2252 = vmax.f32 %v2151, %v2153
        %2253 = vmax.xlane.f32.xlu0 %v2252
        %v2254 = vpop.xlane.xlu0 %2253
        %v2255 = vmax.f32 %v2157, %v2159
        %2256 = vmax.xlane.f32.xlu0 %v2255
        %v2257 = vpop.xlane.xlu0 %2256
        %v2258 = vmax.f32 %v2161, %v2163
        %2259 = vmax.xlane.f32.xlu0 %v2258
        %v2260 = vpop.xlane.xlu0 %2259
        %v2261 = vsub.f32 %v2007, %v2167
        %v2262 = vsub.f32 %v2009, %v2167
        %v2263 = vsub.f32 %v2011, %v2170
        %v2264 = vsub.f32 %v2013, %v2170
        %v2265 = vsub.f32 %v2017, %v2173
        %v2266 = vsub.f32 %v2019, %v2173
        %v2267 = vsub.f32 %v2021, %v2176
        %v2268 = vsub.f32 %v2023, %v2176
        %v2269 = vsub.f32 %v2027, %v2179
        %v2270 = vsub.f32 %v2029, %v2179
        %v2271 = vsub.f32 %v2031, %v2182
        %v2272 = vsub.f32 %v2033, %v2182
        %v2273 = vsub.f32 %v2037, %v2185
        %v2274 = vsub.f32 %v2039, %v2185
        %v2275 = vsub.f32 %v2041, %v2188
        %v2276 = vsub.f32 %v2043, %v2188
        %v2277 = vsub.f32 %v2047, %v2191
        %v2278 = vsub.f32 %v2049, %v2191
        %v2279 = vsub.f32 %v2051, %v2194
        %v2280 = vsub.f32 %v2053, %v2194
        %v2281 = vsub.f32 %v2057, %v2197
        %v2282 = vsub.f32 %v2059, %v2197
        %v2283 = vsub.f32 %v2061, %v2200
        %v2284 = vsub.f32 %v2063, %v2200
        %v2285 = vsub.f32 %v2067, %v2203
        %v2286 = vsub.f32 %v2069, %v2203
        %v2287 = vsub.f32 %v2071, %v2206
        %v2288 = vsub.f32 %v2073, %v2206
        %v2289 = vsub.f32 %v2077, %v2209
        %v2290 = vsub.f32 %v2079, %v2209
        %v2291 = vsub.f32 %v2081, %v2212
        %v2292 = vsub.f32 %v2083, %v2212
        %v2293 = vsub.f32 %v2087, %v2215
        %v2294 = vsub.f32 %v2089, %v2215
        %v2295 = vsub.f32 %v2091, %v2218
        %v2296 = vsub.f32 %v2093, %v2218
        %v2297 = vsub.f32 %v2097, %v2221
        %v2298 = vsub.f32 %v2099, %v2221
        %v2299 = vsub.f32 %v2101, %v2224
        %v2300 = vsub.f32 %v2103, %v2224
        %v2301 = vsub.f32 %v2107, %v2227
        %v2302 = vsub.f32 %v2109, %v2227
        %v2303 = vsub.f32 %v2111, %v2230
        %v2304 = vsub.f32 %v2113, %v2230
        %v2305 = vsub.f32 %v2117, %v2233
        %v2306 = vsub.f32 %v2119, %v2233
        %v2307 = vsub.f32 %v2121, %v2236
        %v2308 = vsub.f32 %v2123, %v2236
        %v2309 = vsub.f32 %v2127, %v2239
        %v2310 = vsub.f32 %v2129, %v2239
        %v2311 = vsub.f32 %v2131, %v2242
        %v2312 = vsub.f32 %v2133, %v2242
        %v2313 = vsub.f32 %v2137, %v2245
        %v2314 = vsub.f32 %v2139, %v2245
        %v2315 = vsub.f32 %v2141, %v2248
        %v2316 = vsub.f32 %v2143, %v2248
        %v2317 = vsub.f32 %v2147, %v2251
        %v2318 = vsub.f32 %v2149, %v2251
        %v2319 = vsub.f32 %v2151, %v2254
        %v2320 = vsub.f32 %v2153, %v2254
        %v2321 = vsub.f32 %v2157, %v2257
        %v2322 = vsub.f32 %v2159, %v2257
        %v2323 = vsub.f32 %v2161, %v2260
        %v2324 = vsub.f32 %v2163, %v2260
        %v2325 = vmul.f32 %v2261, 1.442695
        %v2326 = vpow.pop %v2325
        %v2327 = vmul.f32 %v2262, 1.442695
        %v2328 = vpow.pop %v2327
        %v2329 = vmul.f32 %v2263, 1.442695
        %v2330 = vpow.pop %v2329
        %v2331 = vmul.f32 %v2264, 1.442695
        %v2332 = vpow.pop %v2331
        %v2333 = vmul.f32 %v2265, 1.442695
        %v2334 = vpow.pop %v2333
        %v2335 = vmul.f32 %v2266, 1.442695
        %v2336 = vpow.pop %v2335
        %v2337 = vmul.f32 %v2267, 1.442695
        %v2338 = vpow.pop %v2337
        %v2339 = vmul.f32 %v2268, 1.442695
        %v2340 = vpow.pop %v2339
        %v2341 = vmul.f32 %v2269, 1.442695
        %v2342 = vpow.pop %v2341
        %v2343 = vmul.f32 %v2270, 1.442695
        %v2344 = vpow.pop %v2343
        %v2345 = vmul.f32 %v2271, 1.442695
        %v2346 = vpow.pop %v2345
        %v2347 = vmul.f32 %v2272, 1.442695
        %v2348 = vpow.pop %v2347
        %v2349 = vmul.f32 %v2273, 1.442695
        %v2350 = vpow.pop %v2349
        %v2351 = vmul.f32 %v2274, 1.442695
        %v2352 = vpow.pop %v2351
        %v2353 = vmul.f32 %v2275, 1.442695
        %v2354 = vpow.pop %v2353
        %v2355 = vmul.f32 %v2276, 1.442695
        %v2356 = vpow.pop %v2355
        %v2357 = vmul.f32 %v2277, 1.442695
        %v2358 = vpow.pop %v2357
        %v2359 = vmul.f32 %v2278, 1.442695
        %v2360 = vpow.pop %v2359
        %v2361 = vmul.f32 %v2279, 1.442695
        %v2362 = vpow.pop %v2361
        %v2363 = vmul.f32 %v2280, 1.442695
        %v2364 = vpow.pop %v2363
        %v2365 = vmul.f32 %v2281, 1.442695
        %v2366 = vpow.pop %v2365
        %v2367 = vmul.f32 %v2282, 1.442695
        %v2368 = vpow.pop %v2367
        %v2369 = vmul.f32 %v2283, 1.442695
        %v2370 = vpow.pop %v2369
        %v2371 = vmul.f32 %v2284, 1.442695
        %v2372 = vpow.pop %v2371
        %v2373 = vmul.f32 %v2285, 1.442695
        %v2374 = vpow.pop %v2373
        %v2375 = vmul.f32 %v2286, 1.442695
        %v2376 = vpow.pop %v2375
        %v2377 = vmul.f32 %v2287, 1.442695
        %v2378 = vpow.pop %v2377
        %v2379 = vmul.f32 %v2288, 1.442695
        %v2380 = vpow.pop %v2379
        %v2381 = vmul.f32 %v2289, 1.442695
        %v2382 = vpow.pop %v2381
        %v2383 = vmul.f32 %v2290, 1.442695
        %v2384 = vpow.pop %v2383
        %v2385 = vmul.f32 %v2291, 1.442695
        %v2386 = vpow.pop %v2385
        %v2387 = vmul.f32 %v2292, 1.442695
        %v2388 = vpow.pop %v2387
        %v2389 = vmul.f32 %v2293, 1.442695
        %v2390 = vpow.pop %v2389
        %v2391 = vmul.f32 %v2294, 1.442695
        %v2392 = vpow.pop %v2391
        %v2393 = vmul.f32 %v2295, 1.442695
        %v2394 = vpow.pop %v2393
        %v2395 = vmul.f32 %v2296, 1.442695
        %v2396 = vpow.pop %v2395
        %v2397 = vmul.f32 %v2297, 1.442695
        %v2398 = vpow.pop %v2397
        %v2399 = vmul.f32 %v2298, 1.442695
        %v2400 = vpow.pop %v2399
        %v2401 = vmul.f32 %v2299, 1.442695
        %v2402 = vpow.pop %v2401
        %v2403 = vmul.f32 %v2300, 1.442695
        %v2404 = vpow.pop %v2403
        %v2405 = vmul.f32 %v2301, 1.442695
        %v2406 = vpow.pop %v2405
        %v2407 = vmul.f32 %v2302, 1.442695
        %v2408 = vpow.pop %v2407
        %v2409 = vmul.f32 %v2303, 1.442695
        %v2410 = vpow.pop %v2409
        %v2411 = vmul.f32 %v2304, 1.442695
        %v2412 = vpow.pop %v2411
        %v2413 = vmul.f32 %v2305, 1.442695
        %v2414 = vpow.pop %v2413
        %v2415 = vmul.f32 %v2306, 1.442695
        %v2416 = vpow.pop %v2415
        %v2417 = vmul.f32 %v2307, 1.442695
        %v2418 = vpow.pop %v2417
        %v2419 = vmul.f32 %v2308, 1.442695
        %v2420 = vpow.pop %v2419
        %v2421 = vmul.f32 %v2309, 1.442695
        %v2422 = vpow.pop %v2421
        %v2423 = vmul.f32 %v2310, 1.442695
        %v2424 = vpow.pop %v2423
        %v2425 = vmul.f32 %v2311, 1.442695
        %v2426 = vpow.pop %v2425
        %v2427 = vmul.f32 %v2312, 1.442695
        %v2428 = vpow.pop %v2427
        %v2429 = vmul.f32 %v2313, 1.442695
        %v2430 = vpow.pop %v2429
        %v2431 = vmul.f32 %v2314, 1.442695
        %v2432 = vpow.pop %v2431
        %v2433 = vmul.f32 %v2315, 1.442695
        %v2434 = vpow.pop %v2433
        %v2435 = vmul.f32 %v2316, 1.442695
        %v2436 = vpow.pop %v2435
        %v2437 = vmul.f32 %v2317, 1.442695
        %v2438 = vpow.pop %v2437
        %v2439 = vmul.f32 %v2318, 1.442695
        %v2440 = vpow.pop %v2439
        %v2441 = vmul.f32 %v2319, 1.442695
        %v2442 = vpow.pop %v2441
        %v2443 = vmul.f32 %v2320, 1.442695
        %v2444 = vpow.pop %v2443
        %v2445 = vmul.f32 %v2321, 1.442695
        %v2446 = vpow.pop %v2445
        %v2447 = vmul.f32 %v2322, 1.442695
        %v2448 = vpow.pop %v2447
        %v2449 = vmul.f32 %v2323, 1.442695
        %v2450 = vpow.pop %v2449
        %v2451 = vmul.f32 %v2324, 1.442695
        %v2452 = vpow.pop %v2451
        %v2453 = vadd.f32 %v2326, %v2328
        %2454 = vadd.xlane.f32.xlu0 %v2453
        %v2455 = vpop.xlane.xlu0 %2454
        %v2456 = vadd.f32 %v2330, %v2332
        %2457 = vadd.xlane.f32.xlu0 %v2456
        %v2458 = vpop.xlane.xlu0 %2457
        %v2459 = vadd.f32 %v2334, %v2336
        %2460 = vadd.xlane.f32.xlu0 %v2459
        %v2461 = vpop.xlane.xlu0 %2460
        %v2462 = vadd.f32 %v2338, %v2340
        %2463 = vadd.xlane.f32.xlu0 %v2462
        %v2464 = vpop.xlane.xlu0 %2463
        %v2465 = vadd.f32 %v2342, %v2344
        %2466 = vadd.xlane.f32.xlu0 %v2465
        %v2467 = vpop.xlane.xlu0 %2466
        %v2468 = vadd.f32 %v2346, %v2348
        %2469 = vadd.xlane.f32.xlu0 %v2468
        %v2470 = vpop.xlane.xlu0 %2469
        %v2471 = vadd.f32 %v2350, %v2352
        %2472 = vadd.xlane.f32.xlu0 %v2471
        %v2473 = vpop.xlane.xlu0 %2472
        %v2474 = vadd.f32 %v2354, %v2356
        %2475 = vadd.xlane.f32.xlu0 %v2474
        %v2476 = vpop.xlane.xlu0 %2475
        %v2477 = vadd.f32 %v2358, %v2360
        %2478 = vadd.xlane.f32.xlu0 %v2477
        %v2479 = vpop.xlane.xlu0 %2478
        %v2480 = vadd.f32 %v2362, %v2364
        %2481 = vadd.xlane.f32.xlu0 %v2480
        %v2482 = vpop.xlane.xlu0 %2481
        %v2483 = vadd.f32 %v2366, %v2368
        %2484 = vadd.xlane.f32.xlu0 %v2483
        %v2485 = vpop.xlane.xlu0 %2484
        %v2486 = vadd.f32 %v2370, %v2372
        %2487 = vadd.xlane.f32.xlu0 %v2486
        %v2488 = vpop.xlane.xlu0 %2487
        %v2489 = vadd.f32 %v2374, %v2376
        %2490 = vadd.xlane.f32.xlu0 %v2489
        %v2491 = vpop.xlane.xlu0 %2490
        %v2492 = vadd.f32 %v2378, %v2380
        %2493 = vadd.xlane.f32.xlu0 %v2492
        %v2494 = vpop.xlane.xlu0 %2493
        %v2495 = vadd.f32 %v2382, %v2384
        %2496 = vadd.xlane.f32.xlu0 %v2495
        %v2497 = vpop.xlane.xlu0 %2496
        %v2498 = vadd.f32 %v2386, %v2388
        %2499 = vadd.xlane.f32.xlu0 %v2498
        %v2500 = vpop.xlane.xlu0 %2499
        %v2501 = vadd.f32 %v2390, %v2392
        %2502 = vadd.xlane.f32.xlu0 %v2501
        %v2503 = vpop.xlane.xlu0 %2502
        %v2504 = vadd.f32 %v2394, %v2396
        %2505 = vadd.xlane.f32.xlu0 %v2504
        %v2506 = vpop.xlane.xlu0 %2505
        %v2507 = vadd.f32 %v2398, %v2400
        %2508 = vadd.xlane.f32.xlu0 %v2507
        %v2509 = vpop.xlane.xlu0 %2508
        %v2510 = vadd.f32 %v2402, %v2404
        %2511 = vadd.xlane.f32.xlu0 %v2510
        %v2512 = vpop.xlane.xlu0 %2511
        %v2513 = vadd.f32 %v2406, %v2408
        %2514 = vadd.xlane.f32.xlu0 %v2513
        %v2515 = vpop.xlane.xlu0 %2514
        %v2516 = vadd.f32 %v2410, %v2412
        %2517 = vadd.xlane.f32.xlu0 %v2516
        %v2518 = vpop.xlane.xlu0 %2517
        %v2519 = vadd.f32 %v2414, %v2416
        %2520 = vadd.xlane.f32.xlu0 %v2519
        %v2521 = vpop.xlane.xlu0 %2520
        %v2522 = vadd.f32 %v2418, %v2420
        %2523 = vadd.xlane.f32.xlu0 %v2522
        %v2524 = vpop.xlane.xlu0 %2523
        %v2525 = vadd.f32 %v2422, %v2424
        %2526 = vadd.xlane.f32.xlu0 %v2525
        %v2527 = vpop.xlane.xlu0 %2526
        %v2528 = vadd.f32 %v2426, %v2428
        %2529 = vadd.xlane.f32.xlu0 %v2528
        %v2530 = vpop.xlane.xlu0 %2529
        %v2531 = vadd.f32 %v2430, %v2432
        %2532 = vadd.xlane.f32.xlu0 %v2531
        %v2533 = vpop.xlane.xlu0 %2532
        %v2534 = vadd.f32 %v2434, %v2436
        %2535 = vadd.xlane.f32.xlu0 %v2534
        %v2536 = vpop.xlane.xlu0 %2535
        %v2537 = vadd.f32 %v2438, %v2440
        %2538 = vadd.xlane.f32.xlu0 %v2537
        %v2539 = vpop.xlane.xlu0 %2538
        %v2540 = vadd.f32 %v2442, %v2444
        %2541 = vadd.xlane.f32.xlu0 %v2540
        %v2542 = vpop.xlane.xlu0 %2541
        %v2543 = vadd.f32 %v2446, %v2448
        %2544 = vadd.xlane.f32.xlu0 %v2543
        %v2545 = vpop.xlane.xlu0 %2544
        %v2546 = vadd.f32 %v2450, %v2452
        %2547 = vadd.xlane.f32.xlu0 %v2546
        %v2548 = vpop.xlane.xlu0 %2547
        %v2549 = vrcp.pop %v2455
        %v2550 = vrcp.pop %v2458
        %v2551 = vrcp.pop %v2461
        %v2552 = vrcp.pop %v2464
        %v2553 = vrcp.pop %v2467
        %v2554 = vrcp.pop %v2470
        %v2555 = vrcp.pop %v2473
        %v2556 = vrcp.pop %v2476
        %v2557 = vrcp.pop %v2479
        %v2558 = vrcp.pop %v2482
        %v2559 = vrcp.pop %v2485
        %v2560 = vrcp.pop %v2488
        %v2561 = vrcp.pop %v2491
        %v2562 = vrcp.pop %v2494
        %v2563 = vrcp.pop %v2497
        %v2564 = vrcp.pop %v2500
        %v2565 = vrcp.pop %v2503
        %v2566 = vrcp.pop %v2506
        %v2567 = vrcp.pop %v2509
        %v2568 = vrcp.pop %v2512
        %v2569 = vrcp.pop %v2515
        %v2570 = vrcp.pop %v2518
        %v2571 = vrcp.pop %v2521
        %v2572 = vrcp.pop %v2524
        %v2573 = vrcp.pop %v2527
        %v2574 = vrcp.pop %v2530
        %v2575 = vrcp.pop %v2533
        %v2576 = vrcp.pop %v2536
        %v2577 = vrcp.pop %v2539
        %v2578 = vrcp.pop %v2542
        %v2579 = vrcp.pop %v2545
        %v2580 = vrcp.pop %v2548
        %v2581 = vmul.f32 %v2326, %v2549
        %v2582 = vmul.f32 %v2328, %v2549
        %v2583 = vmul.f32 %v2330, %v2550
        %v2584 = vmul.f32 %v2332, %v2550
        %v2585 = vmul.f32 %v2334, %v2551
        %v2586 = vmul.f32 %v2336, %v2551
        %v2587 = vmul.f32 %v2338, %v2552
        %v2588 = vmul.f32 %v2340, %v2552
        %v2589 = vmul.f32 %v2342, %v2553
        %v2590 = vmul.f32 %v2344, %v2553
        %v2591 = vmul.f32 %v2346, %v2554
        %v2592 = vmul.f32 %v2348, %v2554
        %v2593 = vmul.f32 %v2350, %v2555
        %v2594 = vmul.f32 %v2352, %v2555
        %v2595 = vmul.f32 %v2354, %v2556
        %v2596 = vmul.f32 %v2356, %v2556
        %v2597 = vmul.f32 %v2358, %v2557
        %v2598 = vmul.f32 %v2360, %v2557
        %v2599 = vmul.f32 %v2362, %v2558
        %v2600 = vmul.f32 %v2364, %v2558
        %v2601 = vmul.f32 %v2366, %v2559
        %v2602 = vmul.f32 %v2368, %v2559
        %v2603 = vmul.f32 %v2370, %v2560
        %v2604 = vmul.f32 %v2372, %v2560
        %v2605 = vmul.f32 %v2374, %v2561
        %v2606 = vmul.f32 %v2376, %v2561
        %v2607 = vmul.f32 %v2378, %v2562
        %v2608 = vmul.f32 %v2380, %v2562
        %v2609 = vmul.f32 %v2382, %v2563
        %v2610 = vmul.f32 %v2384, %v2563
        %v2611 = vmul.f32 %v2386, %v2564
        %v2612 = vmul.f32 %v2388, %v2564
        %v2613 = vmul.f32 %v2390, %v2565
        %v2614 = vmul.f32 %v2392, %v2565
        %v2615 = vmul.f32 %v2394, %v2566
        %v2616 = vmul.f32 %v2396, %v2566
        %v2617 = vmul.f32 %v2398, %v2567
        %v2618 = vmul.f32 %v2400, %v2567
        %v2619 = vmul.f32 %v2402, %v2568
        %v2620 = vmul.f32 %v2404, %v2568
        %v2621 = vmul.f32 %v2406, %v2569
        %v2622 = vmul.f32 %v2408, %v2569
        %v2623 = vmul.f32 %v2410, %v2570
        %v2624 = vmul.f32 %v2412, %v2570
        %v2625 = vmul.f32 %v2414, %v2571
        %v2626 = vmul.f32 %v2416, %v2571
        %v2627 = vmul.f32 %v2418, %v2572
        %v2628 = vmul.f32 %v2420, %v2572
        %v2629 = vmul.f32 %v2422, %v2573
        %v2630 = vmul.f32 %v2424, %v2573
        %v2631 = vmul.f32 %v2426, %v2574
        %v2632 = vmul.f32 %v2428, %v2574
        %v2633 = vmul.f32 %v2430, %v2575
        %v2634 = vmul.f32 %v2432, %v2575
        %v2635 = vmul.f32 %v2434, %v2576
        %v2636 = vmul.f32 %v2436, %v2576
        %v2637 = vmul.f32 %v2438, %v2577
        %v2638 = vmul.f32 %v2440, %v2577
        %v2639 = vmul.f32 %v2442, %v2578
        %v2640 = vmul.f32 %v2444, %v2578
        %v2641 = vmul.f32 %v2446, %v2579
        %v2642 = vmul.f32 %v2448, %v2579
        %v2643 = vmul.f32 %v2450, %v2580
        %v2644 = vmul.f32 %v2452, %v2580
        %v2645 = vpack.c.bf16 %v2583, %v2581
        %v2646 = vpack.c.bf16 %v2584, %v2582
        %v2647 = vpack.c.bf16 %v2587, %v2585
        %v2648 = vpack.c.bf16 %v2588, %v2586
        %v2649 = vpack.c.bf16 %v2591, %v2589
        %v2650 = vpack.c.bf16 %v2592, %v2590
        %v2651 = vpack.c.bf16 %v2595, %v2593
        %v2652 = vpack.c.bf16 %v2596, %v2594
        %v2653 = vpack.c.bf16 %v2599, %v2597
        %v2654 = vpack.c.bf16 %v2600, %v2598
        %v2655 = vpack.c.bf16 %v2603, %v2601
        %v2656 = vpack.c.bf16 %v2604, %v2602
        %v2657 = vpack.c.bf16 %v2607, %v2605
        %v2658 = vpack.c.bf16 %v2608, %v2606
        %v2659 = vpack.c.bf16 %v2611, %v2609
        %v2660 = vpack.c.bf16 %v2612, %v2610
        %v2661 = vpack.c.bf16 %v2615, %v2613
        %v2662 = vpack.c.bf16 %v2616, %v2614
        %v2663 = vpack.c.bf16 %v2619, %v2617
        %v2664 = vpack.c.bf16 %v2620, %v2618
        %v2665 = vpack.c.bf16 %v2623, %v2621
        %v2666 = vpack.c.bf16 %v2624, %v2622
        %v2667 = vpack.c.bf16 %v2627, %v2625
        %v2668 = vpack.c.bf16 %v2628, %v2626
        %v2669 = vpack.c.bf16 %v2631, %v2629
        %v2670 = vpack.c.bf16 %v2632, %v2630
        %v2671 = vpack.c.bf16 %v2635, %v2633
        %v2672 = vpack.c.bf16 %v2636, %v2634
        %v2673 = vpack.c.bf16 %v2639, %v2637
        %v2674 = vpack.c.bf16 %v2640, %v2638
        %v2675 = vpack.c.bf16 %v2643, %v2641
        %v2676 = vpack.c.bf16 %v2644, %v2642
        %v2677 = vld [vmem:[#allocation4] sm:$0xff]
        %v2678 = vld [vmem:[#allocation4 + $0x8] sm:$0xff]
        %v2679 = vld [vmem:[#allocation4 + $0x10] sm:$0xff]
        %v2680 = vld [vmem:[#allocation4 + $0x18] sm:$0xff]
        %v2681 = vld [vmem:[#allocation4 + $0x20] sm:$0xff]
        %v2682 = vld [vmem:[#allocation4 + $0x28] sm:$0xff]
        %v2683 = vld [vmem:[#allocation4 + $0x30] sm:$0xff]
        %v2684 = vld [vmem:[#allocation4 + $0x38] sm:$0xff]
        %v2685 = vld [vmem:[#allocation4 + $0x40] sm:$0xff]
        %v2686 = vld [vmem:[#allocation4 + $0x48] sm:$0xff]
        %v2687 = vld [vmem:[#allocation4 + $0x50] sm:$0xff]
        %v2688 = vld [vmem:[#allocation4 + $0x58] sm:$0xff]
        %v2689 = vld [vmem:[#allocation4 + $0x60] sm:$0xff]
        %v2690 = vld [vmem:[#allocation4 + $0x68] sm:$0xff]
        %v2691 = vld [vmem:[#allocation4 + $0x70] sm:$0xff]
        %v2692 = vld [vmem:[#allocation4 + $0x78] sm:$0xff]
        %2693 = vmatprep.subr.bf16.mxu0 0
        %2694 = vmatpush1.bf16.msra.mxu0 %v2677
        %2695 = vmatprep.subr.bf16.mxu0 0
        %2696 = vmatpush1.bf16.msra.mxu0 %v2678
        %2697 = vmatprep.subr.bf16.mxu0 0
        %2698 = vmatpush1.bf16.msra.mxu0 %v2679
        %2699 = vmatprep.subr.bf16.mxu0 0
        %2700 = vmatpush1.bf16.msra.mxu0 %v2680
        %2701 = vmatprep.subr.bf16.mxu0 0
        %2702 = vmatpush1.bf16.msra.mxu0 %v2681
        %2703 = vmatprep.subr.bf16.mxu0 0
        %2704 = vmatpush1.bf16.msra.mxu0 %v2682
        %2705 = vmatprep.subr.bf16.mxu0 0
        %2706 = vmatpush1.bf16.msra.mxu0 %v2683
        %2707 = vmatprep.subr.bf16.mxu0 0
        %2708 = vmatpush1.bf16.msra.mxu0 %v2684
        %2709 = vmatprep.subr.bf16.mxu0 0
        %2710 = vmatpush1.bf16.msra.mxu0 %v2685
        %2711 = vmatprep.subr.bf16.mxu0 0
        %2712 = vmatpush1.bf16.msra.mxu0 %v2686
        %2713 = vmatprep.subr.bf16.mxu0 0
        %2714 = vmatpush1.bf16.msra.mxu0 %v2687
        %2715 = vmatprep.subr.bf16.mxu0 0
        %2716 = vmatpush1.bf16.msra.mxu0 %v2688
        %2717 = vmatprep.subr.bf16.mxu0 0
        %2718 = vmatpush1.bf16.msra.mxu0 %v2689
        %2719 = vmatprep.subr.bf16.mxu0 0
        %2720 = vmatpush1.bf16.msra.mxu0 %v2690
        %2721 = vmatprep.subr.bf16.mxu0 0
        %2722 = vmatpush1.bf16.msra.mxu0 %v2691
        %2723 = vmatprep.subr.bf16.mxu0 0
        %2724 = vmatpush1.bf16.msra.mxu0 %v2692
        %2725 = vmatprep.mubr.bf16.mxu0 %v2646
        %2726 = vmatmul.mubr.bf16.gmra.mrb[0].mxu0 %v2645
        %v2727 = vpop.f32.mrb[0].mxu0
        %v2728 = vadd.f32 0.0, %v2727
        %v2729 = vpop.f32.mrb[0].mxu0
        %v2730 = vpop.f32.mrb[0].mxu0
        %v2731 = vadd.f32 0.0, %v2730
        %v2732 = vpop.f32.mrb[0].mxu0
        %2733 = vmatprep.mubr.bf16.mxu0 %v2648
        %2734 = vmatmul.mubr.bf16.gmra.mrb[0].mxu0 %v2647
        %v2735 = vpop.f32.mrb[0].mxu0
        %v2736 = vadd.f32 0.0, %v2735
        %v2737 = vpop.f32.mrb[0].mxu0
        %v2738 = vpop.f32.mrb[0].mxu0
        %v2739 = vadd.f32 0.0, %v2738
        %v2740 = vpop.f32.mrb[0].mxu0
        %2741 = vmatprep.mubr.bf16.mxu0 %v2650
        %2742 = vmatmul.mubr.bf16.gmra.mrb[0].mxu0 %v2649
        %v2743 = vpop.f32.mrb[0].mxu0
        %v2744 = vadd.f32 0.0, %v2743
        %v2745 = vpop.f32.mrb[0].mxu0
        %v2746 = vpop.f32.mrb[0].mxu0
        %v2747 = vadd.f32 0.0, %v2746
        %v2748 = vpop.f32.mrb[0].mxu0
        %2749 = vmatprep.mubr.bf16.mxu0 %v2652
        %2750 = vmatmul.mubr.bf16.gmra.mrb[0].mxu0 %v2651
        %v2751 = vpop.f32.mrb[0].mxu0
        %v2752 = vadd.f32 0.0, %v2751
        %v2753 = vpop.f32.mrb[0].mxu0
        %v2754 = vpop.f32.mrb[0].mxu0
        %v2755 = vadd.f32 0.0, %v2754
        %v2756 = vpop.f32.mrb[0].mxu0
        %2757 = vmatprep.mubr.bf16.mxu0 %v2654
        %2758 = vmatmul.mubr.bf16.gmra.mrb[0].mxu0 %v2653
        %v2759 = vpop.f32.mrb[0].mxu0
        %v2760 = vadd.f32 0.0, %v2759
        %v2761 = vpop.f32.mrb[0].mxu0
        %v2762 = vpop.f32.mrb[0].mxu0
        %v2763 = vadd.f32 0.0, %v2762
        %v2764 = vpop.f32.mrb[0].mxu0
        %2765 = vmatprep.mubr.bf16.mxu0 %v2656
        %2766 = vmatmul.mubr.bf16.gmra.mrb[0].mxu0 %v2655
        %v2767 = vpop.f32.mrb[0].mxu0
        %v2768 = vadd.f32 0.0, %v2767
        %v2769 = vpop.f32.mrb[0].mxu0
        %v2770 = vpop.f32.mrb[0].mxu0
        %v2771 = vadd.f32 0.0, %v2770
        %v2772 = vpop.f32.mrb[0].mxu0
        %2773 = vmatprep.mubr.bf16.mxu0 %v2658
        %2774 = vmatmul.mubr.bf16.gmra.mrb[0].mxu0 %v2657
        %v2775 = vpop.f32.mrb[0].mxu0
        %v2776 = vadd.f32 0.0, %v2775
        %v2777 = vpop.f32.mrb[0].mxu0
        %v2778 = vpop.f32.mrb[0].mxu0
        %v2779 = vadd.f32 0.0, %v2778
        %v2780 = vpop.f32.mrb[0].mxu0
        %2781 = vmatprep.mubr.bf16.mxu0 %v2660
        %2782 = vmatmul.mubr.bf16.gmra.mrb[0].mxu0 %v2659
        %v2783 = vpop.f32.mrb[0].mxu0
        %v2784 = vadd.f32 0.0, %v2783
        %v2785 = vpop.f32.mrb[0].mxu0
        %v2786 = vpop.f32.mrb[0].mxu0
        %v2787 = vadd.f32 0.0, %v2786
        %v2788 = vpop.f32.mrb[0].mxu0
        %2789 = vmatprep.mubr.bf16.mxu0 %v2662
        %2790 = vmatmul.mubr.bf16.gmra.mrb[0].mxu0 %v2661
        %v2791 = vpop.f32.mrb[0].mxu0
        %v2792 = vadd.f32 0.0, %v2791
        %v2793 = vpop.f32.mrb[0].mxu0
        %v2794 = vpop.f32.mrb[0].mxu0
        %v2795 = vadd.f32 0.0, %v2794
        %v2796 = vpop.f32.mrb[0].mxu0
        %2797 = vmatprep.mubr.bf16.mxu0 %v2664
        %2798 = vmatmul.mubr.bf16.gmra.mrb[0].mxu0 %v2663
        %v2799 = vpop.f32.mrb[0].mxu0
        %v2800 = vadd.f32 0.0, %v2799
        %v2801 = vpop.f32.mrb[0].mxu0
        %v2802 = vpop.f32.mrb[0].mxu0
        %v2803 = vadd.f32 0.0, %v2802
        %v2804 = vpop.f32.mrb[0].mxu0
        %2805 = vmatprep.mubr.bf16.mxu0 %v2666
        %2806 = vmatmul.mubr.bf16.gmra.mrb[0].mxu0 %v2665
        %v2807 = vpop.f32.mrb[0].mxu0
        %v2808 = vadd.f32 0.0, %v2807
        %v2809 = vpop.f32.mrb[0].mxu0
        %v2810 = vpop.f32.mrb[0].mxu0
        %v2811 = vadd.f32 0.0, %v2810
        %v2812 = vpop.f32.mrb[0].mxu0
        %2813 = vmatprep.mubr.bf16.mxu0 %v2668
        %2814 = vmatmul.mubr.bf16.gmra.mrb[0].mxu0 %v2667
        %v2815 = vpop.f32.mrb[0].mxu0
        %v2816 = vadd.f32 0.0, %v2815
        %v2817 = vpop.f32.mrb[0].mxu0
        %v2818 = vpop.f32.mrb[0].mxu0
        %v2819 = vadd.f32 0.0, %v2818
        %v2820 = vpop.f32.mrb[0].mxu0
        %2821 = vmatprep.mubr.bf16.mxu0 %v2670
        %2822 = vmatmul.mubr.bf16.gmra.mrb[0].mxu0 %v2669
        %v2823 = vpop.f32.mrb[0].mxu0
        %v2824 = vadd.f32 0.0, %v2823
        %v2825 = vpop.f32.mrb[0].mxu0
        %v2826 = vpop.f32.mrb[0].mxu0
        %v2827 = vadd.f32 0.0, %v2826
        %v2828 = vpop.f32.mrb[0].mxu0
        %2829 = vmatprep.mubr.bf16.mxu0 %v2672
        %2830 = vmatmul.mubr.bf16.gmra.mrb[0].mxu0 %v2671
        %v2831 = vpop.f32.mrb[0].mxu0
        %v2832 = vadd.f32 0.0, %v2831
        %v2833 = vpop.f32.mrb[0].mxu0
        %v2834 = vpop.f32.mrb[0].mxu0
        %v2835 = vadd.f32 0.0, %v2834
        %v2836 = vpop.f32.mrb[0].mxu0
        %2837 = vmatprep.mubr.bf16.mxu0 %v2674
        %2838 = vmatmul.mubr.bf16.gmra.mrb[0].mxu0 %v2673
        %v2839 = vpop.f32.mrb[0].mxu0
        %v2840 = vadd.f32 0.0, %v2839
        %v2841 = vpop.f32.mrb[0].mxu0
        %v2842 = vpop.f32.mrb[0].mxu0
        %v2843 = vadd.f32 0.0, %v2842
        %v2844 = vpop.f32.mrb[0].mxu0
        %2845 = vmatprep.mubr.bf16.mxu0 %v2676
        %2846 = vmatmul.mubr.bf16.gmra.mrb[0].mxu0 %v2675
        %v2847 = vpop.f32.mrb[0].mxu0
        %v2848 = vadd.f32 0.0, %v2847
        %v2849 = vpop.f32.mrb[0].mxu0
        %v2850 = vpop.f32.mrb[0].mxu0
        %v2851 = vadd.f32 0.0, %v2850
        %v2852 = vpop.f32.mrb[0].mxu0
        %2853 = vdwg.mxu0
        %v2854 = vpack.c.bf16 %v2731, %v2728
        %v2855 = vpack.c.bf16 %v2739, %v2736
        %v2856 = vpack.c.bf16 %v2747, %v2744
        %v2857 = vpack.c.bf16 %v2755, %v2752
        %v2858 = vpack.c.bf16 %v2763, %v2760
        %v2859 = vpack.c.bf16 %v2771, %v2768
        %v2860 = vpack.c.bf16 %v2779, %v2776
        %v2861 = vpack.c.bf16 %v2787, %v2784
        %v2862 = vpack.c.bf16 %v2795, %v2792
        %v2863 = vpack.c.bf16 %v2803, %v2800
        %v2864 = vpack.c.bf16 %v2811, %v2808
        %v2865 = vpack.c.bf16 %v2819, %v2816
        %v2866 = vpack.c.bf16 %v2827, %v2824
        %v2867 = vpack.c.bf16 %v2835, %v2832
        %v2868 = vpack.c.bf16 %v2843, %v2840
        %v2869 = vpack.c.bf16 %v2851, %v2848
        %v2870 = vld [vmem:[#allocation13] sm:$0xf]
        %v2871 = vld [vmem:[#allocation13 + $0x4] sm:$0xf]
        %v2872 = vld [vmem:[#allocation13 + $0x8] sm:$0xf]
        %v2873 = vld [vmem:[#allocation13 + $0xc] sm:$0xf]
        %v2874 = vld [vmem:[#allocation13 + $0x10] sm:$0xf]
        %v2875 = vld [vmem:[#allocation13 + $0x14] sm:$0xf]
        %v2876 = vld [vmem:[#allocation13 + $0x18] sm:$0xf]
        %v2877 = vld [vmem:[#allocation13 + $0x1c] sm:$0xf]
        %v2878 = vld [vmem:[#allocation13 + $0x20] sm:$0xf]
        %v2879 = vld [vmem:[#allocation13 + $0x24] sm:$0xf]
        %v2880 = vld [vmem:[#allocation13 + $0x28] sm:$0xf]
        %v2881 = vld [vmem:[#allocation13 + $0x2c] sm:$0xf]
        %v2882 = vld [vmem:[#allocation13 + $0x30] sm:$0xf]
        %v2883 = vld [vmem:[#allocation13 + $0x34] sm:$0xf]
        %v2884 = vld [vmem:[#allocation13 + $0x38] sm:$0xf]
        %v2885 = vld [vmem:[#allocation13 + $0x3c] sm:$0xf]
        %v2886 = vld [vmem:[%s12] sm:$0x1]
        %v2888 = vlaneseq
        %v2889 = vshrl.u32 %v2888, 7
        %v2890 = vsub.s32 0, %v2889
        %v2891 = vrot.slane %v2886, %v2890
        %v2909 = vunpack.c.l.b16 %v2870
        %v2910 = vunpack.c.l.b16 %v2871
        %v2911 = vunpack.c.l.b16 %v2872
        %v2912 = vunpack.c.l.b16 %v2873
        %v2913 = vunpack.c.l.b16 %v2874
        %v2914 = vunpack.c.l.b16 %v2875
        %v2915 = vunpack.c.l.b16 %v2876
        %v2916 = vunpack.c.l.b16 %v2877
        %v2917 = vunpack.c.l.b16 %v2878
        %v2918 = vunpack.c.l.b16 %v2879
        %v2919 = vunpack.c.l.b16 %v2880
        %v2920 = vunpack.c.l.b16 %v2881
        %v2921 = vunpack.c.l.b16 %v2882
        %v2922 = vunpack.c.l.b16 %v2883
        %v2923 = vunpack.c.l.b16 %v2884
        %v2924 = vunpack.c.l.b16 %v2885
        %v2925 = vpack.c.b16 %v2910, %v2909
        %v2926 = vpack.c.b16 %v2912, %v2911
        %v2927 = vpack.c.b16 %v2914, %v2913
        %v2928 = vpack.c.b16 %v2916, %v2915
        %v2929 = vpack.c.b16 %v2918, %v2917
        %v2930 = vpack.c.b16 %v2920, %v2919
        %v2931 = vpack.c.b16 %v2922, %v2921
        %v2932 = vpack.c.b16 %v2924, %v2923
        %2941 = vmatprep.subr.bf16.mxu0 0
        %2942 = vmatpush1.bf16.msra.mxu0 %v2925
        %2943 = vmatprep.subr.bf16.mxu0 0
        %2944 = vmatpush1.bf16.msra.mxu0 %v2926
        %2945 = vmatprep.subr.bf16.mxu0 0
        %2946 = vmatpush1.bf16.msra.mxu0 %v2927
        %2947 = vmatprep.subr.bf16.mxu0 0
        %2948 = vmatpush1.bf16.msra.mxu0 %v2928
        %2949 = vmatprep.subr.bf16.mxu0 0
        %2950 = vmatpush1.bf16.msra.mxu0 %v2929
        %2951 = vmatprep.subr.bf16.mxu0 0
        %2952 = vmatpush1.bf16.msra.mxu0 %v2930
        %2953 = vmatprep.subr.bf16.mxu0 0
        %2954 = vmatpush1.bf16.msra.mxu0 %v2931
        %2955 = vmatprep.subr.bf16.mxu0 0
        %2956 = vmatpush1.bf16.msra.mxu0 %v2932
        %2957 = vmatprep.subr.bf16.mxu0 0
        %2958 = vmatpush1.bf16.msra.mxu0 0
        %2959 = vmatprep.subr.bf16.mxu0 0
        %2960 = vmatpush1.bf16.msra.mxu0 0
        %2961 = vmatprep.subr.bf16.mxu0 0
        %2962 = vmatpush1.bf16.msra.mxu0 0
        %2963 = vmatprep.subr.bf16.mxu0 0
        %2964 = vmatpush1.bf16.msra.mxu0 0
        %2965 = vmatprep.subr.bf16.mxu0 0
        %2966 = vmatpush1.bf16.msra.mxu0 0
        %2967 = vmatprep.subr.bf16.mxu0 0
        %2968 = vmatpush1.bf16.msra.mxu0 0
        %2969 = vmatprep.subr.bf16.mxu0 0
        %2970 = vmatpush1.bf16.msra.mxu0 0
        %2971 = vmatprep.subr.bf16.mxu0 0
        %2972 = vmatpush1.bf16.msra.mxu0 0
        %2973 = vmatprep.mubr.bf16.mxu0 0
        %2974 = vmatmul.mubr.bf16.gmra.mrb[0].mxu0 %v2854
        %v2975 = vpop.f32.mrb[0].mxu0
        %v2976 = vadd.f32 %v2891, %v2975
        %v2977 = vpop.f32.mrb[0].mxu0
        %v2978 = vpop.f32.mrb[0].mxu0
        %v2979 = vadd.f32 %v2891, %v2978
        %v2980 = vpop.f32.mrb[0].mxu0
        %2981 = vmatprep.mubr.bf16.mxu0 0
        %2982 = vmatmul.mubr.bf16.gmra.mrb[0].mxu0 %v2855
        %v2983 = vpop.f32.mrb[0].mxu0
        %v2984 = vadd.f32 %v2891, %v2983
        %v2985 = vpop.f32.mrb[0].mxu0
        %v2986 = vpop.f32.mrb[0].mxu0
        %v2987 = vadd.f32 %v2891, %v2986
        %v2988 = vpop.f32.mrb[0].mxu0
        %2989 = vmatprep.mubr.bf16.mxu0 0
        %2990 = vmatmul.mubr.bf16.gmra.mrb[0].mxu0 %v2856
        %v2991 = vpop.f32.mrb[0].mxu0
        %v2992 = vadd.f32 %v2891, %v2991
        %v2993 = vpop.f32.mrb[0].mxu0
        %v2994 = vpop.f32.mrb[0].mxu0
        %v2995 = vadd.f32 %v2891, %v2994
        %v2996 = vpop.f32.mrb[0].mxu0
        %2997 = vmatprep.mubr.bf16.mxu0 0
        %2998 = vmatmul.mubr.bf16.gmra.mrb[0].mxu0 %v2857
        %v2999 = vpop.f32.mrb[0].mxu0
        %v3000 = vadd.f32 %v2891, %v2999
        %v3001 = vpop.f32.mrb[0].mxu0
        %v3002 = vpop.f32.mrb[0].mxu0
        %v3003 = vadd.f32 %v2891, %v3002
        %v3004 = vpop.f32.mrb[0].mxu0
        %3005 = vmatprep.mubr.bf16.mxu0 0
        %3006 = vmatmul.mubr.bf16.gmra.mrb[0].mxu0 %v2858
        %v3007 = vpop.f32.mrb[0].mxu0
        %v3008 = vadd.f32 %v2891, %v3007
        %v3009 = vpop.f32.mrb[0].mxu0
        %v3010 = vpop.f32.mrb[0].mxu0
        %v3011 = vadd.f32 %v2891, %v3010
        %v3012 = vpop.f32.mrb[0].mxu0
        %3013 = vmatprep.mubr.bf16.mxu0 0
        %3014 = vmatmul.mubr.bf16.gmra.mrb[0].mxu0 %v2859
        %v3015 = vpop.f32.mrb[0].mxu0
        %v3016 = vadd.f32 %v2891, %v3015
        %v3017 = vpop.f32.mrb[0].mxu0
        %v3018 = vpop.f32.mrb[0].mxu0
        %v3019 = vadd.f32 %v2891, %v3018
        %v3020 = vpop.f32.mrb[0].mxu0
        %3021 = vmatprep.mubr.bf16.mxu0 0
        %3022 = vmatmul.mubr.bf16.gmra.mrb[0].mxu0 %v2860
        %v3023 = vpop.f32.mrb[0].mxu0
        %v3024 = vadd.f32 %v2891, %v3023
        %v3025 = vpop.f32.mrb[0].mxu0
        %v3026 = vpop.f32.mrb[0].mxu0
        %v3027 = vadd.f32 %v2891, %v3026
        %v3028 = vpop.f32.mrb[0].mxu0
        %3029 = vmatprep.mubr.bf16.mxu0 0
        %3030 = vmatmul.mubr.bf16.gmra.mrb[0].mxu0 %v2861
        %v3031 = vpop.f32.mrb[0].mxu0
        %v3032 = vadd.f32 %v2891, %v3031
        %v3033 = vpop.f32.mrb[0].mxu0
        %v3034 = vpop.f32.mrb[0].mxu0
        %v3035 = vadd.f32 %v2891, %v3034
        %v3036 = vpop.f32.mrb[0].mxu0
        %3037 = vmatprep.mubr.bf16.mxu0 0
        %3038 = vmatmul.mubr.bf16.gmra.mrb[0].mxu0 %v2862
        %v3039 = vpop.f32.mrb[0].mxu0
        %v3040 = vadd.f32 %v2891, %v3039
        %v3041 = vpop.f32.mrb[0].mxu0
        %v3042 = vpop.f32.mrb[0].mxu0
        %v3043 = vadd.f32 %v2891, %v3042
        %v3044 = vpop.f32.mrb[0].mxu0
        %3045 = vmatprep.mubr.bf16.mxu0 0
        %3046 = vmatmul.mubr.bf16.gmra.mrb[0].mxu0 %v2863
        %v3047 = vpop.f32.mrb[0].mxu0
        %v3048 = vadd.f32 %v2891, %v3047
        %v3049 = vpop.f32.mrb[0].mxu0
        %v3050 = vpop.f32.mrb[0].mxu0
        %v3051 = vadd.f32 %v2891, %v3050
        %v3052 = vpop.f32.mrb[0].mxu0
        %3053 = vmatprep.mubr.bf16.mxu0 0
        %3054 = vmatmul.mubr.bf16.gmra.mrb[0].mxu0 %v2864
        %v3055 = vpop.f32.mrb[0].mxu0
        %v3056 = vadd.f32 %v2891, %v3055
        %v3057 = vpop.f32.mrb[0].mxu0
        %v3058 = vpop.f32.mrb[0].mxu0
        %v3059 = vadd.f32 %v2891, %v3058
        %v3060 = vpop.f32.mrb[0].mxu0
        %3061 = vmatprep.mubr.bf16.mxu0 0
        %3062 = vmatmul.mubr.bf16.gmra.mrb[0].mxu0 %v2865
        %v3063 = vpop.f32.mrb[0].mxu0
        %v3064 = vadd.f32 %v2891, %v3063
        %v3065 = vpop.f32.mrb[0].mxu0
        %v3066 = vpop.f32.mrb[0].mxu0
        %v3067 = vadd.f32 %v2891, %v3066
        %v3068 = vpop.f32.mrb[0].mxu0
        %3069 = vmatprep.mubr.bf16.mxu0 0
        %3070 = vmatmul.mubr.bf16.gmra.mrb[0].mxu0 %v2866
        %v3071 = vpop.f32.mrb[0].mxu0
        %v3072 = vadd.f32 %v2891, %v3071
        %v3073 = vpop.f32.mrb[0].mxu0
        %v3074 = vpop.f32.mrb[0].mxu0
        %v3075 = vadd.f32 %v2891, %v3074
        %v3076 = vpop.f32.mrb[0].mxu0
        %3077 = vmatprep.mubr.bf16.mxu0 0
        %3078 = vmatmul.mubr.bf16.gmra.mrb[0].mxu0 %v2867
        %v3079 = vpop.f32.mrb[0].mxu0
        %v3080 = vadd.f32 %v2891, %v3079
        %v3081 = vpop.f32.mrb[0].mxu0
        %v3082 = vpop.f32.mrb[0].mxu0
        %v3083 = vadd.f32 %v2891, %v3082
        %v3084 = vpop.f32.mrb[0].mxu0
        %3085 = vmatprep.mubr.bf16.mxu0 0
        %3086 = vmatmul.mubr.bf16.gmra.mrb[0].mxu0 %v2868
        %v3087 = vpop.f32.mrb[0].mxu0
        %v3088 = vadd.f32 %v2891, %v3087
        %v3089 = vpop.f32.mrb[0].mxu0
        %v3090 = vpop.f32.mrb[0].mxu0
        %v3091 = vadd.f32 %v2891, %v3090
        %v3092 = vpop.f32.mrb[0].mxu0
        %3093 = vmatprep.mubr.bf16.mxu0 0
        %3094 = vmatmul.mubr.bf16.gmra.mrb[0].mxu0 %v2869
        %v3095 = vpop.f32.mrb[0].mxu0
        %v3096 = vadd.f32 %v2891, %v3095
        %v3097 = vpop.f32.mrb[0].mxu0
        %v3098 = vpop.f32.mrb[0].mxu0
        %v3099 = vadd.f32 %v2891, %v3098
        %v3100 = vpop.f32.mrb[0].mxu0
        %3101 = vdwg.mxu0
        %s3102 = scalar_lea.vmem %s468, %s1935 [#allocation5]
        %v3103 = vld [vmem:[%s3102] sm:$0xff]
        %v3104 = vld [vmem:[%s3102 + $0x8] sm:$0xff]
        %v3105 = vld [vmem:[%s3102 + $0x10] sm:$0xff]
        %v3106 = vld [vmem:[%s3102 + $0x18] sm:$0xff]
        %v3107 = vld [vmem:[%s3102 + $0x20] sm:$0xff]
        %v3108 = vld [vmem:[%s3102 + $0x28] sm:$0xff]
        %v3109 = vld [vmem:[%s3102 + $0x30] sm:$0xff]
        %v3110 = vld [vmem:[%s3102 + $0x38] sm:$0xff]
        %v3111 = vld [vmem:[%s3102 + $0x40] sm:$0xff]
        %v3112 = vld [vmem:[%s3102 + $0x48] sm:$0xff]
        %v3113 = vld [vmem:[%s3102 + $0x50] sm:$0xff]
        %v3114 = vld [vmem:[%s3102 + $0x58] sm:$0xff]
        %v3115 = vld [vmem:[%s3102 + $0x60] sm:$0xff]
        %v3116 = vld [vmem:[%s3102 + $0x68] sm:$0xff]
        %v3117 = vld [vmem:[%s3102 + $0x70] sm:$0xff]
        %v3118 = vld [vmem:[%s3102 + $0x78] sm:$0xff]
        %v3119 = vld [vmem:[%s3102 + $0x80] sm:$0xff]
        %v3120 = vld [vmem:[%s3102 + $0x88] sm:$0xff]
        %v3121 = vld [vmem:[%s3102 + $0x90] sm:$0xff]
        %v3122 = vld [vmem:[%s3102 + $0x98] sm:$0xff]
        %v3123 = vld [vmem:[%s3102 + $0xa0] sm:$0xff]
        %v3124 = vld [vmem:[%s3102 + $0xa8] sm:$0xff]
        %v3125 = vld [vmem:[%s3102 + $0xb0] sm:$0xff]
        %v3126 = vld [vmem:[%s3102 + $0xb8] sm:$0xff]
        %v3127 = vld [vmem:[%s3102 + $0xc0] sm:$0xff]
        %v3128 = vld [vmem:[%s3102 + $0xc8] sm:$0xff]
        %v3129 = vld [vmem:[%s3102 + $0xd0] sm:$0xff]
        %v3130 = vld [vmem:[%s3102 + $0xd8] sm:$0xff]
        %v3131 = vld [vmem:[%s3102 + $0xe0] sm:$0xff]
        %v3132 = vld [vmem:[%s3102 + $0xe8] sm:$0xff]
        %v3133 = vld [vmem:[%s3102 + $0xf0] sm:$0xff]
        %v3134 = vld [vmem:[%s3102 + $0xf8] sm:$0xff]
        %v3135 = vadd.f32 %v3103, %v2976
        %v3136 = vadd.f32 %v3104, %v2979
        %v3137 = vadd.f32 %v3105, %v2984
        %v3138 = vadd.f32 %v3106, %v2987
        %v3139 = vadd.f32 %v3107, %v2992
        %v3140 = vadd.f32 %v3108, %v2995
        %v3141 = vadd.f32 %v3109, %v3000
        %v3142 = vadd.f32 %v3110, %v3003
        %v3143 = vadd.f32 %v3111, %v3008
        %v3144 = vadd.f32 %v3112, %v3011
        %v3145 = vadd.f32 %v3113, %v3016
        %v3146 = vadd.f32 %v3114, %v3019
        %v3147 = vadd.f32 %v3115, %v3024
        %v3148 = vadd.f32 %v3116, %v3027
        %v3149 = vadd.f32 %v3117, %v3032
        %v3150 = vadd.f32 %v3118, %v3035
        %v3151 = vadd.f32 %v3119, %v3040
        %v3152 = vadd.f32 %v3120, %v3043
        %v3153 = vadd.f32 %v3121, %v3048
        %v3154 = vadd.f32 %v3122, %v3051
        %v3155 = vadd.f32 %v3123, %v3056
        %v3156 = vadd.f32 %v3124, %v3059
        %v3157 = vadd.f32 %v3125, %v3064
        %v3158 = vadd.f32 %v3126, %v3067
        %v3159 = vadd.f32 %v3127, %v3072
        %v3160 = vadd.f32 %v3128, %v3075
        %v3161 = vadd.f32 %v3129, %v3080
        %v3162 = vadd.f32 %v3130, %v3083
        %v3163 = vadd.f32 %v3131, %v3088
        %v3164 = vadd.f32 %v3132, %v3091
        %v3165 = vadd.f32 %v3133, %v3096
        %v3166 = vadd.f32 %v3134, %v3099
        %3167 = vst [vmem:[%s526] sm:$0xff] %v3135
        %3168 = vst [vmem:[%s526 + $0x8] sm:$0xff] %v3136
        %3169 = vst [vmem:[%s526 + $0x10] sm:$0xff] %v3137
        %3170 = vst [vmem:[%s526 + $0x18] sm:$0xff] %v3138
        %3171 = vst [vmem:[%s526 + $0x20] sm:$0xff] %v3139
        %3172 = vst [vmem:[%s526 + $0x28] sm:$0xff] %v3140
        %3173 = vst [vmem:[%s526 + $0x30] sm:$0xff] %v3141
        %3174 = vst [vmem:[%s526 + $0x38] sm:$0xff] %v3142
        %3175 = vst [vmem:[%s526 + $0x40] sm:$0xff] %v3143
        %3176 = vst [vmem:[%s526 + $0x48] sm:$0xff] %v3144
        %3177 = vst [vmem:[%s526 + $0x50] sm:$0xff] %v3145
        %3178 = vst [vmem:[%s526 + $0x58] sm:$0xff] %v3146
        %3179 = vst [vmem:[%s526 + $0x60] sm:$0xff] %v3147
        %3180 = vst [vmem:[%s526 + $0x68] sm:$0xff] %v3148
        %3181 = vst [vmem:[%s526 + $0x70] sm:$0xff] %v3149
        %3182 = vst [vmem:[%s526 + $0x78] sm:$0xff] %v3150
        %3183 = vst [vmem:[%s526 + $0x80] sm:$0xff] %v3151
        %3184 = vst [vmem:[%s526 + $0x88] sm:$0xff] %v3152
        %3185 = vst [vmem:[%s526 + $0x90] sm:$0xff] %v3153
        %3186 = vst [vmem:[%s526 + $0x98] sm:$0xff] %v3154
        %3187 = vst [vmem:[%s526 + $0xa0] sm:$0xff] %v3155
        %3188 = vst [vmem:[%s526 + $0xa8] sm:$0xff] %v3156
        %3189 = vst [vmem:[%s526 + $0xb0] sm:$0xff] %v3157
        %3190 = vst [vmem:[%s526 + $0xb8] sm:$0xff] %v3158
        %3191 = vst [vmem:[%s526 + $0xc0] sm:$0xff] %v3159
        %3192 = vst [vmem:[%s526 + $0xc8] sm:$0xff] %v3160
        %3193 = vst [vmem:[%s526 + $0xd0] sm:$0xff] %v3161
        %3194 = vst [vmem:[%s526 + $0xd8] sm:$0xff] %v3162
        %3195 = vst [vmem:[%s526 + $0xe0] sm:$0xff] %v3163
        %3196 = vst [vmem:[%s526 + $0xe8] sm:$0xff] %v3164
        %3197 = vst [vmem:[%s526 + $0xf0] sm:$0xff] %v3165
        %3198 = vst [vmem:[%s526 + $0xf8] sm:$0xff] %v3166
        %s3199 = sand.u32 %s332, 1
        %s3200 = scalar_lea.sflag [#allocation7], %s3199
        %s3201 = sand.u32 %s332, 1
        %s3202 = smul.addr %s3201, 256
        %s3203 = scalar_lea.vmem [#allocation14], %s3202
        // Predicated region
        $region97: #{tpu_custom_call.1} parent=71 // pred_check
          %p3204 = pneg %p342
        $region98: #{tpu_custom_call.1} parent=71 // pred_check_branch
          %3206 = sbr.rel (%p3204) target = $region100
        $region99: #{tpu_custom_call.1} parent=71 // pred_region
          %s3207 = smul.u32 32, %s37
          %s3209 = ssub.s32 4096, 4096
          %3210 = vsyncadd %s3200, %s3209
          %s3211 = smul.addr %s36, 32
          %s3212 = sadd.s32 %s3207, %s3211
          %s3213 = smul.addr %s3212, 128
          %s3214 = scalar_lea.hbm %s13, %s3213
          %s3215 = sshll.u32 %s3203, 4
          %s3216 = int_to_ptr.vmem [resolvable:$true] %s3215
          %3221 = dma.vmem_to_hbm [thread:$0]  %s3216, 4096, %s3214, %s3200, 128, 128, 8
        $region100: #{tpu_custom_call.1} parent=71 // pred_fallthru
          _
      $region72: #{tpu_custom_call.1} parent=5 // pred_fallthru
        _
      %p3222 = scmp.le.s32.totalorder 2, %s27
      // Predicated region
      $region101: #{tpu_custom_call.1} parent=5 // pred_check
        %p3223 = pneg %p3222
      $region102: #{tpu_custom_call.1} parent=5 // pred_check_branch
        %3225 = sbr.rel (%p3223) target = $region104
      $region103: #{tpu_custom_call.1} parent=5 // pred_region
        %s3226 = ssub.s32 %s27, 2
        // Predicated region
        $region105: #{tpu_custom_call.1} parent=103 // pred_check
          %p3227 = pneg %p348
        $region106: #{tpu_custom_call.1} parent=103 // pred_check_branch
          %3229 = sbr.rel (%p3227) target = $region108
        $region107: #{tpu_custom_call.1} parent=103 // pred_region
          %s3230 = sand.u32 %s333, 1
          %s3231 = scalar_lea.sflag [#allocation7], %s3230
          %s3232 = sand.u32 %s333, 1
          %s3233 = smul.addr %s3232, 256
          %s3234 = scalar_lea.vmem [#allocation14], %s3233
          %3235 = dma.done %s3231, 4096
        $region108: #{tpu_custom_call.1} parent=103 // pred_fallthru
          _
      $region104: #{tpu_custom_call.1} parent=5 // pred_fallthru
        _
    $region6: #{tpu_custom_call.1} parent=1 // loop_footer
      %s31 = sadd.s32 1, %s27
    $region7: #{tpu_custom_call.1} parent=1 // loop_footer_branch
      %26 = sbr.rel target = $region3
    $region8: #{tpu_custom_call.1} parent=1 // loop_exit
      _
    %3236 = vsyncpa [#allocation6], 1
    %s3237 = scalar_lea.sflag [#allocation6], 1
    %3238 = vsyncpa %s3237, 1
    %3239 = vsyncpa [#allocation9], 1
    %3240 = vsyncpa [#allocation12], 1
    %3241 = vsyncpa [#allocation7], 1
    %s3242 = scalar_lea.sflag [#allocation7], 1
    %3243 = vsyncpa %s3242, 1

</llo_original>
